<compile_context>
chip_gen: v7x
topology: tpu7x:2x2x1
jax: 0.10.0
libtpu: 0.0.40
codegen_flags: <defaults>
</compile_context>

<pallas_src>
import functools

import jax
import jax.numpy as jnp
from jax.experimental import pallas as pl
from jax.experimental.pallas import tpu as pltpu


def _seg_kernel(x_ref, mfirst_ref, mlast_ref, w_ref, b_ref, raw_ref, sm_ref, *,
                tb, cin, cout, h, w):
    """One block of `tb` frames per grid step.

    x_ref     : (tb, cin*h*w)   VMEM  flattened input frames
    mfirst_ref: (tb, h*w)       VMEM  1.0 except image column 0    (dx=+1 taps)
    mlast_ref : (tb, h*w)       VMEM  1.0 except image column w-1  (dx=-1 taps)
    w_ref     : (cout, 9*cin)   SMEM  conv weights [co, (ky*3+kx)*cin + ci]
    b_ref     : (cout,)         SMEM  conv bias
    raw_ref   : (tb, cout*h*w)  VMEM  logits out
    sm_ref    : (tb, cout*h*w)  VMEM  softmax(logits) out
    """
    hw = h * w
    f32 = jnp.float32

    def shift_lanes(src, s):
        # y[:, i] = src[:, i + s], zero-filled at the ends (no wrap-around),
        # so the row (dy) image boundary is handled for free.
        if s == 0:
            return src
        pad = jnp.zeros((tb, abs(s)), f32)
        if s > 0:
            return jnp.concatenate([src[:, s:], pad], axis=1)
        return jnp.concatenate([pad, src[:, :s]], axis=1)

    # Per-class accumulators: (tb, hw) each, frames on sublanes, pixels
    # lane-dense (2 full vregs/class at tb=8, hw=256 -> 16 vregs total).
    acc = [jnp.zeros((tb, hw), f32) + b_ref[co] for co in range(cout)]

    m_not_first = mfirst_ref[...]
    m_not_last = mlast_ref[...]

    # 3x3xCin conv as 27 scalar-broadcast FMAs per class on the VPU.
    for ci in range(cin):
        xc = x_ref[:, ci * hw:(ci + 1) * hw].astype(f32)   # 128-aligned slice
        # Pre-zero the columns that would leak across a row boundary after a
        # +/-1 lane shift; the zero-fill shift handles the dy boundary.
        xc_dx_pos = xc * m_not_first    # used for dx = +1 taps
        xc_dx_neg = xc * m_not_last     # used for dx = -1 taps
        for ky in range(3):
            dy = ky - 1
            for kx in range(3):
                dx = kx - 1
                src = xc if dx == 0 else (xc_dx_pos if dx == 1 else xc_dx_neg)
                patch = shift_lanes(src, dy * w + dx)       # (tb, hw)
                k = (ky * 3 + kx) * cin + ci
                # One shifted patch shared by all cout FMAs; each SMEM weight
                # scalar is read exactly once per grid step.
                for co in range(cout):
                    acc[co] = acc[co] + w_ref[co, k] * patch

    # Store raw logits: lane offsets co*hw are multiples of 128 -> dense,
    # unmasked, full-width stores (no per-frame unpack, no sublane scatter).
    for co in range(cout):
        raw_ref[:, co * hw:(co + 1) * hw] = acc[co].astype(raw_ref.dtype)

    # Softmax over the class dim (== dim=2 of (B, T, C, H, W)).  Classes live
    # in separate accumulators, so the reduction is pure elementwise VPU work.
    m = acc[0]
    for co in range(1, cout):
        m = jnp.maximum(m, acc[co])
    # Exponentiate in place: caps peak liveness at ~cout accumulators instead
    # of keeping an acc + exps pair live simultaneously.
    for co in range(cout):
        acc[co] = jnp.exp(acc[co] - m)
    s = acc[0]
    for co in range(1, cout):
        s = s + acc[co]
    # EUP reciprocal + one Newton-Raphson step: divide stays off the VALU and
    # the class probabilities sum to 1 at f32 precision.
    inv = pl.reciprocal(s, approx=True)
    inv = inv * (2.0 - s * inv)

    for co in range(cout):
        sm_ref[:, co * hw:(co + 1) * hw] = (acc[co] * inv).astype(sm_ref.dtype)


def img_segmentor_forward(images, conv_w, conv_b, *, frames_per_block=None,
                          out_dtype=jnp.float32):
    """images: (B, T, Cin, H, W) float32 (PyTorch NCHW per frame).

    Returns dict with:
      pred_segm_raw: (B, T, C, H, W)
      pred_segm:     (B, T, C, H, W)  (softmax over C)
    """
    B, T, Cin, H, W = images.shape
    Cout = conv_w.shape[-1]
    BT = B * T
    HW = H * W

    # Frames per grid step: pixels are always lane-dense, so TB only sets
    # sublane fill / per-step overhead.  No ">=2 grid steps" constraint
    # (v5e/v6e are single-TC); 8 keeps cout accumulators + working set well
    # inside the 64-vreg file.  Ragged BT is handled by padding whole frames.
    TB = min(BT, 8) if frames_per_block is None else frames_per_block
    n_blocks = -(-BT // TB)
    BT_pad = n_blocks * TB

    # Only free, contiguous reshapes of the big tensors (no transpose, no
    # per-pixel padding).
    x = images.reshape(BT, Cin * HW)
    if BT_pad != BT:
        x = jnp.pad(x, ((0, BT_pad - BT), (0, 0)))

    # Tiny constant operands.
    w_mat = conv_w.reshape(9 * Cin, Cout).T          # (Cout, 9*Cin) -> SMEM
    b_vec = conv_b.reshape(Cout)                     # (Cout,)       -> SMEM
    col = jnp.arange(HW, dtype=jnp.int32) % W
    m_not_first = jnp.broadcast_to((col != 0).astype(jnp.float32), (TB, HW))
    m_not_last = jnp.broadcast_to((col != W - 1).astype(jnp.float32), (TB, HW))

    kernel = functools.partial(_seg_kernel, tb=TB, cin=Cin, cout=Cout, h=H, w=W)

    # VMEM budget derived from the actual (double-buffered) block sizes.
    out_isize = jnp.dtype(out_dtype).itemsize
    in_bytes = TB * Cin * HW * x.dtype.itemsize
    out_bytes = 2 * TB * Cout * HW * out_isize
    mask_bytes = 2 * TB * HW * 4
    vmem_limit = 2 * (in_bytes + out_bytes) + mask_bytes + (2 << 20)
    vmem_limit = int(min(max(vmem_limit, 4 << 20), 100 << 20))

    raw, sm = pl.pallas_call(
        kernel,
        out_shape=(
            jax.ShapeDtypeStruct((BT_pad, Cout * HW), out_dtype),
            jax.ShapeDtypeStruct((BT_pad, Cout * HW), out_dtype),
        ),
        grid_spec=pltpu.PrefetchScalarGridSpec(
            num_scalar_prefetch=0,
            grid=(n_blocks,),
            in_specs=[
                pl.BlockSpec((TB, Cin * HW), lambda i: (i, 0)),
                pl.BlockSpec((TB, HW), lambda i: (0, 0)),
                pl.BlockSpec((TB, HW), lambda i: (0, 0)),
                pl.BlockSpec(memory_space=pltpu.MemorySpace.SMEM),
                pl.BlockSpec(memory_space=pltpu.MemorySpace.SMEM),
            ],
            out_specs=[
                pl.BlockSpec((TB, Cout * HW), lambda i: (i, 0)),
                pl.BlockSpec((TB, Cout * HW), lambda i: (i, 0)),
            ],
        ),
        compiler_params=pltpu.CompilerParams(
            dimension_semantics=("parallel",),
            vmem_limit_bytes=vmem_limit,
        ),
    )(x, m_not_first, m_not_last, w_mat, b_vec)

    # Free contiguous reshapes back to the PyTorch (B, T, C, H, W) convention.
    pred_raw = raw[:BT].reshape(B, T, Cout, H, W)
    pred_sm = sm[:BT].reshape(B, T, Cout, H, W)
    return {"pred_segm_raw": pred_raw, "pred_segm": pred_sm}


def _reference_forward(images, conv_w, conv_b):
    """Pure-JAX reference (conv + softmax) for a correctness check."""
    B, T, Cin, H, W = images.shape
    Cout = conv_w.shape[-1]
    x = images.reshape(B * T, Cin, H, W)
    w_oihw = jnp.transpose(conv_w, (3, 2, 0, 1))
    y = jax.lax.conv_general_dilated(
        x, w_oihw, window_strides=(1, 1), padding="SAME",
        dimension_numbers=("NCHW", "OIHW", "NCHW"))
    y = y + conv_b[None, :, None, None]
    raw = y.reshape(B, T, Cout, H, W)
    return raw, jax.nn.softmax(raw, axis=2)


if __name__ == "__main__":
    key = jax.random.PRNGKey(0)
    k_img, k_w, k_b = jax.random.split(key, 3)

    B, T, Cin, H, W = 2, 2, 3, 16, 16
    NUM_CLASSES = 8

    images = jax.random.normal(k_img, (B, T, Cin, H, W), dtype=jnp.float32)
    conv_w = (jax.random.normal(k_w, (3, 3, Cin, NUM_CLASSES), dtype=jnp.float32)
              * 0.1)
    conv_b = jax.random.normal(k_b, (NUM_CLASSES,), dtype=jnp.float32) * 0.01

    out = jax.jit(img_segmentor_forward)(images, conv_w, conv_b)
    jax.block_until_ready(out)

    ref_raw, ref_sm = _reference_forward(images, conv_w, conv_b)
    assert out["pred_segm_raw"].shape == (B, T, NUM_CLASSES, H, W)
    assert out["pred_segm"].shape == (B, T, NUM_CLASSES, H, W)
    assert jnp.allclose(out["pred_segm_raw"], ref_raw, atol=1e-4, rtol=1e-4)
    assert jnp.allclose(out["pred_segm"], ref_sm, atol=1e-4, rtol=1e-4)

    print("KERNEL_OK")
</pallas_src>

<mosaic_0001>
module attributes {stable_mosaic.version = 11 : i64} {
  func.func @_seg_kernel(%arg0: i32, %arg1: memref<4x768xf32, #tpu.memory_space<vmem>>, %arg2: memref<4x256xf32, #tpu.memory_space<vmem>>, %arg3: memref<4x256xf32, #tpu.memory_space<vmem>>, %arg4: memref<8x27xf32, #tpu.memory_space<smem>>, %arg5: memref<8xf32, #tpu.memory_space<smem>>, %arg6: memref<4x2048xf32, #tpu.memory_space<vmem>>, %arg7: memref<4x2048xf32, #tpu.memory_space<vmem>>) attributes {dimension_semantics = [#tpu.dimension_semantics<parallel>], iteration_bounds = array<i64: 1>, scalar_prefetch = 0 : i64, scratch_operands = 0 : i64, tpu.core_type = #tpu.core_type<tc>, window_params = [{transform_indices = @transform_0, window_bounds = array<i64: 4, 768>}, {pipeline_mode = #tpu.pipeline_mode<synchronous>, transform_indices = @transform_1, window_bounds = array<i64: 4, 256>}, {pipeline_mode = #tpu.pipeline_mode<synchronous>, transform_indices = @transform_2, window_bounds = array<i64: 4, 256>}, {transform_indices = @transform_3, window_bounds = array<i64: 8, 27>}, {transform_indices = @transform_4, window_bounds = array<i64: 8>}, {transform_indices = @transform_5, window_bounds = array<i64: 4, 2048>}, {transform_indices = @transform_6, window_bounds = array<i64: 4, 2048>}]} {
    %cst = arith.constant 0.000000e+00 : f32
    %0 = vector.broadcast %cst : f32 to vector<4x256xf32>
    %c0 = arith.constant 0 : index
    %1 = memref.load %arg5[%c0] : memref<8xf32, #tpu.memory_space<smem>>
    %2 = vector.broadcast %1 : f32 to vector<4x256xf32>
    %3 = arith.addf %0, %2 : vector<4x256xf32>
    %cst_0 = arith.constant 0.000000e+00 : f32
    %4 = vector.broadcast %cst_0 : f32 to vector<4x256xf32>
    %c1 = arith.constant 1 : index
    %5 = memref.load %arg5[%c1] : memref<8xf32, #tpu.memory_space<smem>>
    %6 = vector.broadcast %5 : f32 to vector<4x256xf32>
    %7 = arith.addf %4, %6 : vector<4x256xf32>
    %cst_1 = arith.constant 0.000000e+00 : f32
    %8 = vector.broadcast %cst_1 : f32 to vector<4x256xf32>
    %c2 = arith.constant 2 : index
    %9 = memref.load %arg5[%c2] : memref<8xf32, #tpu.memory_space<smem>>
    %10 = vector.broadcast %9 : f32 to vector<4x256xf32>
    %11 = arith.addf %8, %10 : vector<4x256xf32>
    %cst_2 = arith.constant 0.000000e+00 : f32
    %12 = vector.broadcast %cst_2 : f32 to vector<4x256xf32>
    %c3 = arith.constant 3 : index
    %13 = memref.load %arg5[%c3] : memref<8xf32, #tpu.memory_space<smem>>
    %14 = vector.broadcast %13 : f32 to vector<4x256xf32>
    %15 = arith.addf %12, %14 : vector<4x256xf32>
    %cst_3 = arith.constant 0.000000e+00 : f32
    %16 = vector.broadcast %cst_3 : f32 to vector<4x256xf32>
    %c4 = arith.constant 4 : index
    %17 = memref.load %arg5[%c4] : memref<8xf32, #tpu.memory_space<smem>>
    %18 = vector.broadcast %17 : f32 to vector<4x256xf32>
    %19 = arith.addf %16, %18 : vector<4x256xf32>
    %cst_4 = arith.constant 0.000000e+00 : f32
    %20 = vector.broadcast %cst_4 : f32 to vector<4x256xf32>
    %c5 = arith.constant 5 : index
    %21 = memref.load %arg5[%c5] : memref<8xf32, #tpu.memory_space<smem>>
    %22 = vector.broadcast %21 : f32 to vector<4x256xf32>
    %23 = arith.addf %20, %22 : vector<4x256xf32>
    %cst_5 = arith.constant 0.000000e+00 : f32
    %24 = vector.broadcast %cst_5 : f32 to vector<4x256xf32>
    %c6 = arith.constant 6 : index
    %25 = memref.load %arg5[%c6] : memref<8xf32, #tpu.memory_space<smem>>
    %26 = vector.broadcast %25 : f32 to vector<4x256xf32>
    %27 = arith.addf %24, %26 : vector<4x256xf32>
    %cst_6 = arith.constant 0.000000e+00 : f32
    %28 = vector.broadcast %cst_6 : f32 to vector<4x256xf32>
    %c7 = arith.constant 7 : index
    %29 = memref.load %arg5[%c7] : memref<8xf32, #tpu.memory_space<smem>>
    %30 = vector.broadcast %29 : f32 to vector<4x256xf32>
    %31 = arith.addf %28, %30 : vector<4x256xf32>
    %c0_7 = arith.constant 0 : index
    %c0_8 = arith.constant 0 : index
    %32 = vector.load %arg2[%c0_7, %c0_8] : memref<4x256xf32, #tpu.memory_space<vmem>>, vector<4x256xf32>
    %c0_9 = arith.constant 0 : index
    %c0_10 = arith.constant 0 : index
    %33 = vector.load %arg3[%c0_9, %c0_10] : memref<4x256xf32, #tpu.memory_space<vmem>>, vector<4x256xf32>
    %c0_11 = arith.constant 0 : index
    %c0_12 = arith.constant 0 : index
    %34 = vector.load %arg1[%c0_11, %c0_12] : memref<4x768xf32, #tpu.memory_space<vmem>>, vector<4x256xf32>
    %35 = arith.mulf %34, %32 : vector<4x256xf32>
    %36 = arith.mulf %34, %33 : vector<4x256xf32>
    %cst_13 = arith.constant 0.000000e+00 : f32
    %37 = vector.broadcast %cst_13 : f32 to vector<4x17xf32>
    %38 = vector.extract_strided_slice %36 {offsets = [0, 0], sizes = [4, 239], strides = [1, 1]} : vector<4x256xf32> to vector<4x239xf32>
    %39 = tpu.concatenate %37, %38 in 1 : vector<4x17xf32>, vector<4x239xf32> -> vector<4x256xf32>
    %c0_14 = arith.constant 0 : index
    %c0_15 = arith.constant 0 : index
    %40 = memref.load %arg4[%c0_14, %c0_15] : memref<8x27xf32, #tpu.memory_space<smem>>
    %41 = vector.broadcast %40 : f32 to vector<4x256xf32>
    %42 = arith.mulf %41, %39 : vector<4x256xf32>
    %43 = arith.addf %3, %42 : vector<4x256xf32>
    %c1_16 = arith.constant 1 : index
    %c0_17 = arith.constant 0 : index
    %44 = memref.load %arg4[%c1_16, %c0_17] : memref<8x27xf32, #tpu.memory_space<smem>>
    %45 = vector.broadcast %44 : f32 to vector<4x256xf32>
    %46 = arith.mulf %45, %39 : vector<4x256xf32>
    %47 = arith.addf %7, %46 : vector<4x256xf32>
    %c2_18 = arith.constant 2 : index
    %c0_19 = arith.constant 0 : index
    %48 = memref.load %arg4[%c2_18, %c0_19] : memref<8x27xf32, #tpu.memory_space<smem>>
    %49 = vector.broadcast %48 : f32 to vector<4x256xf32>
    %50 = arith.mulf %49, %39 : vector<4x256xf32>
    %51 = arith.addf %11, %50 : vector<4x256xf32>
    %c3_20 = arith.constant 3 : index
    %c0_21 = arith.constant 0 : index
    %52 = memref.load %arg4[%c3_20, %c0_21] : memref<8x27xf32, #tpu.memory_space<smem>>
    %53 = vector.broadcast %52 : f32 to vector<4x256xf32>
    %54 = arith.mulf %53, %39 : vector<4x256xf32>
    %55 = arith.addf %15, %54 : vector<4x256xf32>
    %c4_22 = arith.constant 4 : index
    %c0_23 = arith.constant 0 : index
    %56 = memref.load %arg4[%c4_22, %c0_23] : memref<8x27xf32, #tpu.memory_space<smem>>
    %57 = vector.broadcast %56 : f32 to vector<4x256xf32>
    %58 = arith.mulf %57, %39 : vector<4x256xf32>
    %59 = arith.addf %19, %58 : vector<4x256xf32>
    %c5_24 = arith.constant 5 : index
    %c0_25 = arith.constant 0 : index
    %60 = memref.load %arg4[%c5_24, %c0_25] : memref<8x27xf32, #tpu.memory_space<smem>>
    %61 = vector.broadcast %60 : f32 to vector<4x256xf32>
    %62 = arith.mulf %61, %39 : vector<4x256xf32>
    %63 = arith.addf %23, %62 : vector<4x256xf32>
    %c6_26 = arith.constant 6 : index
    %c0_27 = arith.constant 0 : index
    %64 = memref.load %arg4[%c6_26, %c0_27] : memref<8x27xf32, #tpu.memory_space<smem>>
    %65 = vector.broadcast %64 : f32 to vector<4x256xf32>
    %66 = arith.mulf %65, %39 : vector<4x256xf32>
    %67 = arith.addf %27, %66 : vector<4x256xf32>
    %c7_28 = arith.constant 7 : index
    %c0_29 = arith.constant 0 : index
    %68 = memref.load %arg4[%c7_28, %c0_29] : memref<8x27xf32, #tpu.memory_space<smem>>
    %69 = vector.broadcast %68 : f32 to vector<4x256xf32>
    %70 = arith.mulf %69, %39 : vector<4x256xf32>
    %71 = arith.addf %31, %70 : vector<4x256xf32>
    %cst_30 = arith.constant 0.000000e+00 : f32
    %72 = vector.broadcast %cst_30 : f32 to vector<4x16xf32>
    %73 = vector.extract_strided_slice %34 {offsets = [0, 0], sizes = [4, 240], strides = [1, 1]} : vector<4x256xf32> to vector<4x240xf32>
    %74 = tpu.concatenate %72, %73 in 1 : vector<4x16xf32>, vector<4x240xf32> -> vector<4x256xf32>
    %c0_31 = arith.constant 0 : index
    %c3_32 = arith.constant 3 : index
    %75 = memref.load %arg4[%c0_31, %c3_32] : memref<8x27xf32, #tpu.memory_space<smem>>
    %76 = vector.broadcast %75 : f32 to vector<4x256xf32>
    %77 = arith.mulf %76, %74 : vector<4x256xf32>
    %78 = arith.addf %43, %77 : vector<4x256xf32>
    %c1_33 = arith.constant 1 : index
    %c3_34 = arith.constant 3 : index
    %79 = memref.load %arg4[%c1_33, %c3_34] : memref<8x27xf32, #tpu.memory_space<smem>>
    %80 = vector.broadcast %79 : f32 to vector<4x256xf32>
    %81 = arith.mulf %80, %74 : vector<4x256xf32>
    %82 = arith.addf %47, %81 : vector<4x256xf32>
    %c2_35 = arith.constant 2 : index
    %c3_36 = arith.constant 3 : index
    %83 = memref.load %arg4[%c2_35, %c3_36] : memref<8x27xf32, #tpu.memory_space<smem>>
    %84 = vector.broadcast %83 : f32 to vector<4x256xf32>
    %85 = arith.mulf %84, %74 : vector<4x256xf32>
    %86 = arith.addf %51, %85 : vector<4x256xf32>
    %c3_37 = arith.constant 3 : index
    %c3_38 = arith.constant 3 : index
    %87 = memref.load %arg4[%c3_37, %c3_38] : memref<8x27xf32, #tpu.memory_space<smem>>
    %88 = vector.broadcast %87 : f32 to vector<4x256xf32>
    %89 = arith.mulf %88, %74 : vector<4x256xf32>
    %90 = arith.addf %55, %89 : vector<4x256xf32>
    %c4_39 = arith.constant 4 : index
    %c3_40 = arith.constant 3 : index
    %91 = memref.load %arg4[%c4_39, %c3_40] : memref<8x27xf32, #tpu.memory_space<smem>>
    %92 = vector.broadcast %91 : f32 to vector<4x256xf32>
    %93 = arith.mulf %92, %74 : vector<4x256xf32>
    %94 = arith.addf %59, %93 : vector<4x256xf32>
    %c5_41 = arith.constant 5 : index
    %c3_42 = arith.constant 3 : index
    %95 = memref.load %arg4[%c5_41, %c3_42] : memref<8x27xf32, #tpu.memory_space<smem>>
    %96 = vector.broadcast %95 : f32 to vector<4x256xf32>
    %97 = arith.mulf %96, %74 : vector<4x256xf32>
    %98 = arith.addf %63, %97 : vector<4x256xf32>
    %c6_43 = arith.constant 6 : index
    %c3_44 = arith.constant 3 : index
    %99 = memref.load %arg4[%c6_43, %c3_44] : memref<8x27xf32, #tpu.memory_space<smem>>
    %100 = vector.broadcast %99 : f32 to vector<4x256xf32>
    %101 = arith.mulf %100, %74 : vector<4x256xf32>
    %102 = arith.addf %67, %101 : vector<4x256xf32>
    %c7_45 = arith.constant 7 : index
    %c3_46 = arith.constant 3 : index
    %103 = memref.load %arg4[%c7_45, %c3_46] : memref<8x27xf32, #tpu.memory_space<smem>>
    %104 = vector.broadcast %103 : f32 to vector<4x256xf32>
    %105 = arith.mulf %104, %74 : vector<4x256xf32>
    %106 = arith.addf %71, %105 : vector<4x256xf32>
    %cst_47 = arith.constant 0.000000e+00 : f32
    %107 = vector.broadcast %cst_47 : f32 to vector<4x15xf32>
    %108 = vector.extract_strided_slice %35 {offsets = [0, 0], sizes = [4, 241], strides = [1, 1]} : vector<4x256xf32> to vector<4x241xf32>
    %109 = tpu.concatenate %107, %108 in 1 : vector<4x15xf32>, vector<4x241xf32> -> vector<4x256xf32>
    %c0_48 = arith.constant 0 : index
    %c6_49 = arith.constant 6 : index
    %110 = memref.load %arg4[%c0_48, %c6_49] : memref<8x27xf32, #tpu.memory_space<smem>>
    %111 = vector.broadcast %110 : f32 to vector<4x256xf32>
    %112 = arith.mulf %111, %109 : vector<4x256xf32>
    %113 = arith.addf %78, %112 : vector<4x256xf32>
    %c1_50 = arith.constant 1 : index
    %c6_51 = arith.constant 6 : index
    %114 = memref.load %arg4[%c1_50, %c6_51] : memref<8x27xf32, #tpu.memory_space<smem>>
    %115 = vector.broadcast %114 : f32 to vector<4x256xf32>
    %116 = arith.mulf %115, %109 : vector<4x256xf32>
    %117 = arith.addf %82, %116 : vector<4x256xf32>
    %c2_52 = arith.constant 2 : index
    %c6_53 = arith.constant 6 : index
    %118 = memref.load %arg4[%c2_52, %c6_53] : memref<8x27xf32, #tpu.memory_space<smem>>
    %119 = vector.broadcast %118 : f32 to vector<4x256xf32>
    %120 = arith.mulf %119, %109 : vector<4x256xf32>
    %121 = arith.addf %86, %120 : vector<4x256xf32>
    %c3_54 = arith.constant 3 : index
    %c6_55 = arith.constant 6 : index
    %122 = memref.load %arg4[%c3_54, %c6_55] : memref<8x27xf32, #tpu.memory_space<smem>>
    %123 = vector.broadcast %122 : f32 to vector<4x256xf32>
    %124 = arith.mulf %123, %109 : vector<4x256xf32>
    %125 = arith.addf %90, %124 : vector<4x256xf32>
    %c4_56 = arith.constant 4 : index
    %c6_57 = arith.constant 6 : index
    %126 = memref.load %arg4[%c4_56, %c6_57] : memref<8x27xf32, #tpu.memory_space<smem>>
    %127 = vector.broadcast %126 : f32 to vector<4x256xf32>
    %128 = arith.mulf %127, %109 : vector<4x256xf32>
    %129 = arith.addf %94, %128 : vector<4x256xf32>
    %c5_58 = arith.constant 5 : index
    %c6_59 = arith.constant 6 : index
    %130 = memref.load %arg4[%c5_58, %c6_59] : memref<8x27xf32, #tpu.memory_space<smem>>
    %131 = vector.broadcast %130 : f32 to vector<4x256xf32>
    %132 = arith.mulf %131, %109 : vector<4x256xf32>
    %133 = arith.addf %98, %132 : vector<4x256xf32>
    %c6_60 = arith.constant 6 : index
    %c6_61 = arith.constant 6 : index
    %134 = memref.load %arg4[%c6_60, %c6_61] : memref<8x27xf32, #tpu.memory_space<smem>>
    %135 = vector.broadcast %134 : f32 to vector<4x256xf32>
    %136 = arith.mulf %135, %109 : vector<4x256xf32>
    %137 = arith.addf %102, %136 : vector<4x256xf32>
    %c7_62 = arith.constant 7 : index
    %c6_63 = arith.constant 6 : index
    %138 = memref.load %arg4[%c7_62, %c6_63] : memref<8x27xf32, #tpu.memory_space<smem>>
    %139 = vector.broadcast %138 : f32 to vector<4x256xf32>
    %140 = arith.mulf %139, %109 : vector<4x256xf32>
    %141 = arith.addf %106, %140 : vector<4x256xf32>
    %cst_64 = arith.constant 0.000000e+00 : f32
    %142 = vector.broadcast %cst_64 : f32 to vector<4x1xf32>
    %143 = vector.extract_strided_slice %36 {offsets = [0, 0], sizes = [4, 255], strides = [1, 1]} : vector<4x256xf32> to vector<4x255xf32>
    %144 = tpu.concatenate %142, %143 in 1 : vector<4x1xf32>, vector<4x255xf32> -> vector<4x256xf32>
    %c0_65 = arith.constant 0 : index
    %c9 = arith.constant 9 : index
    %145 = memref.load %arg4[%c0_65, %c9] : memref<8x27xf32, #tpu.memory_space<smem>>
    %146 = vector.broadcast %145 : f32 to vector<4x256xf32>
    %147 = arith.mulf %146, %144 : vector<4x256xf32>
    %148 = arith.addf %113, %147 : vector<4x256xf32>
    %c1_66 = arith.constant 1 : index
    %c9_67 = arith.constant 9 : index
    %149 = memref.load %arg4[%c1_66, %c9_67] : memref<8x27xf32, #tpu.memory_space<smem>>
    %150 = vector.broadcast %149 : f32 to vector<4x256xf32>
    %151 = arith.mulf %150, %144 : vector<4x256xf32>
    %152 = arith.addf %117, %151 : vector<4x256xf32>
    %c2_68 = arith.constant 2 : index
    %c9_69 = arith.constant 9 : index
    %153 = memref.load %arg4[%c2_68, %c9_69] : memref<8x27xf32, #tpu.memory_space<smem>>
    %154 = vector.broadcast %153 : f32 to vector<4x256xf32>
    %155 = arith.mulf %154, %144 : vector<4x256xf32>
    %156 = arith.addf %121, %155 : vector<4x256xf32>
    %c3_70 = arith.constant 3 : index
    %c9_71 = arith.constant 9 : index
    %157 = memref.load %arg4[%c3_70, %c9_71] : memref<8x27xf32, #tpu.memory_space<smem>>
    %158 = vector.broadcast %157 : f32 to vector<4x256xf32>
    %159 = arith.mulf %158, %144 : vector<4x256xf32>
    %160 = arith.addf %125, %159 : vector<4x256xf32>
    %c4_72 = arith.constant 4 : index
    %c9_73 = arith.constant 9 : index
    %161 = memref.load %arg4[%c4_72, %c9_73] : memref<8x27xf32, #tpu.memory_space<smem>>
    %162 = vector.broadcast %161 : f32 to vector<4x256xf32>
    %163 = arith.mulf %162, %144 : vector<4x256xf32>
    %164 = arith.addf %129, %163 : vector<4x256xf32>
    %c5_74 = arith.constant 5 : index
    %c9_75 = arith.constant 9 : index
    %165 = memref.load %arg4[%c5_74, %c9_75] : memref<8x27xf32, #tpu.memory_space<smem>>
    %166 = vector.broadcast %165 : f32 to vector<4x256xf32>
    %167 = arith.mulf %166, %144 : vector<4x256xf32>
    %168 = arith.addf %133, %167 : vector<4x256xf32>
    %c6_76 = arith.constant 6 : index
    %c9_77 = arith.constant 9 : index
    %169 = memref.load %arg4[%c6_76, %c9_77] : memref<8x27xf32, #tpu.memory_space<smem>>
    %170 = vector.broadcast %169 : f32 to vector<4x256xf32>
    %171 = arith.mulf %170, %144 : vector<4x256xf32>
    %172 = arith.addf %137, %171 : vector<4x256xf32>
    %c7_78 = arith.constant 7 : index
    %c9_79 = arith.constant 9 : index
    %173 = memref.load %arg4[%c7_78, %c9_79] : memref<8x27xf32, #tpu.memory_space<smem>>
    %174 = vector.broadcast %173 : f32 to vector<4x256xf32>
    %175 = arith.mulf %174, %144 : vector<4x256xf32>
    %176 = arith.addf %141, %175 : vector<4x256xf32>
    %c0_80 = arith.constant 0 : index
    %c12 = arith.constant 12 : index
    %177 = memref.load %arg4[%c0_80, %c12] : memref<8x27xf32, #tpu.memory_space<smem>>
    %178 = vector.broadcast %177 : f32 to vector<4x256xf32>
    %179 = arith.mulf %178, %34 : vector<4x256xf32>
    %180 = arith.addf %148, %179 : vector<4x256xf32>
    %c1_81 = arith.constant 1 : index
    %c12_82 = arith.constant 12 : index
    %181 = memref.load %arg4[%c1_81, %c12_82] : memref<8x27xf32, #tpu.memory_space<smem>>
    %182 = vector.broadcast %181 : f32 to vector<4x256xf32>
    %183 = arith.mulf %182, %34 : vector<4x256xf32>
    %184 = arith.addf %152, %183 : vector<4x256xf32>
    %c2_83 = arith.constant 2 : index
    %c12_84 = arith.constant 12 : index
    %185 = memref.load %arg4[%c2_83, %c12_84] : memref<8x27xf32, #tpu.memory_space<smem>>
    %186 = vector.broadcast %185 : f32 to vector<4x256xf32>
    %187 = arith.mulf %186, %34 : vector<4x256xf32>
    %188 = arith.addf %156, %187 : vector<4x256xf32>
    %c3_85 = arith.constant 3 : index
    %c12_86 = arith.constant 12 : index
    %189 = memref.load %arg4[%c3_85, %c12_86] : memref<8x27xf32, #tpu.memory_space<smem>>
    %190 = vector.broadcast %189 : f32 to vector<4x256xf32>
    %191 = arith.mulf %190, %34 : vector<4x256xf32>
    %192 = arith.addf %160, %191 : vector<4x256xf32>
    %c4_87 = arith.constant 4 : index
    %c12_88 = arith.constant 12 : index
    %193 = memref.load %arg4[%c4_87, %c12_88] : memref<8x27xf32, #tpu.memory_space<smem>>
    %194 = vector.broadcast %193 : f32 to vector<4x256xf32>
    %195 = arith.mulf %194, %34 : vector<4x256xf32>
    %196 = arith.addf %164, %195 : vector<4x256xf32>
    %c5_89 = arith.constant 5 : index
    %c12_90 = arith.constant 12 : index
    %197 = memref.load %arg4[%c5_89, %c12_90] : memref<8x27xf32, #tpu.memory_space<smem>>
    %198 = vector.broadcast %197 : f32 to vector<4x256xf32>
    %199 = arith.mulf %198, %34 : vector<4x256xf32>
    %200 = arith.addf %168, %199 : vector<4x256xf32>
    %c6_91 = arith.constant 6 : index
    %c12_92 = arith.constant 12 : index
    %201 = memref.load %arg4[%c6_91, %c12_92] : memref<8x27xf32, #tpu.memory_space<smem>>
    %202 = vector.broadcast %201 : f32 to vector<4x256xf32>
    %203 = arith.mulf %202, %34 : vector<4x256xf32>
    %204 = arith.addf %172, %203 : vector<4x256xf32>
    %c7_93 = arith.constant 7 : index
    %c12_94 = arith.constant 12 : index
    %205 = memref.load %arg4[%c7_93, %c12_94] : memref<8x27xf32, #tpu.memory_space<smem>>
    %206 = vector.broadcast %205 : f32 to vector<4x256xf32>
    %207 = arith.mulf %206, %34 : vector<4x256xf32>
    %208 = arith.addf %176, %207 : vector<4x256xf32>
    %cst_95 = arith.constant 0.000000e+00 : f32
    %209 = vector.broadcast %cst_95 : f32 to vector<4x1xf32>
    %210 = vector.extract_strided_slice %35 {offsets = [0, 1], sizes = [4, 255], strides = [1, 1]} : vector<4x256xf32> to vector<4x255xf32>
    %211 = tpu.concatenate %210, %209 in 1 : vector<4x255xf32>, vector<4x1xf32> -> vector<4x256xf32>
    %c0_96 = arith.constant 0 : index
    %c15 = arith.constant 15 : index
    %212 = memref.load %arg4[%c0_96, %c15] : memref<8x27xf32, #tpu.memory_space<smem>>
    %213 = vector.broadcast %212 : f32 to vector<4x256xf32>
    %214 = arith.mulf %213, %211 : vector<4x256xf32>
    %215 = arith.addf %180, %214 : vector<4x256xf32>
    %c1_97 = arith.constant 1 : index
    %c15_98 = arith.constant 15 : index
    %216 = memref.load %arg4[%c1_97, %c15_98] : memref<8x27xf32, #tpu.memory_space<smem>>
    %217 = vector.broadcast %216 : f32 to vector<4x256xf32>
    %218 = arith.mulf %217, %211 : vector<4x256xf32>
    %219 = arith.addf %184, %218 : vector<4x256xf32>
    %c2_99 = arith.constant 2 : index
    %c15_100 = arith.constant 15 : index
    %220 = memref.load %arg4[%c2_99, %c15_100] : memref<8x27xf32, #tpu.memory_space<smem>>
    %221 = vector.broadcast %220 : f32 to vector<4x256xf32>
    %222 = arith.mulf %221, %211 : vector<4x256xf32>
    %223 = arith.addf %188, %222 : vector<4x256xf32>
    %c3_101 = arith.constant 3 : index
    %c15_102 = arith.constant 15 : index
    %224 = memref.load %arg4[%c3_101, %c15_102] : memref<8x27xf32, #tpu.memory_space<smem>>
    %225 = vector.broadcast %224 : f32 to vector<4x256xf32>
    %226 = arith.mulf %225, %211 : vector<4x256xf32>
    %227 = arith.addf %192, %226 : vector<4x256xf32>
    %c4_103 = arith.constant 4 : index
    %c15_104 = arith.constant 15 : index
    %228 = memref.load %arg4[%c4_103, %c15_104] : memref<8x27xf32, #tpu.memory_space<smem>>
    %229 = vector.broadcast %228 : f32 to vector<4x256xf32>
    %230 = arith.mulf %229, %211 : vector<4x256xf32>
    %231 = arith.addf %196, %230 : vector<4x256xf32>
    %c5_105 = arith.constant 5 : index
    %c15_106 = arith.constant 15 : index
    %232 = memref.load %arg4[%c5_105, %c15_106] : memref<8x27xf32, #tpu.memory_space<smem>>
    %233 = vector.broadcast %232 : f32 to vector<4x256xf32>
    %234 = arith.mulf %233, %211 : vector<4x256xf32>
    %235 = arith.addf %200, %234 : vector<4x256xf32>
    %c6_107 = arith.constant 6 : index
    %c15_108 = arith.constant 15 : index
    %236 = memref.load %arg4[%c6_107, %c15_108] : memref<8x27xf32, #tpu.memory_space<smem>>
    %237 = vector.broadcast %236 : f32 to vector<4x256xf32>
    %238 = arith.mulf %237, %211 : vector<4x256xf32>
    %239 = arith.addf %204, %238 : vector<4x256xf32>
    %c7_109 = arith.constant 7 : index
    %c15_110 = arith.constant 15 : index
    %240 = memref.load %arg4[%c7_109, %c15_110] : memref<8x27xf32, #tpu.memory_space<smem>>
    %241 = vector.broadcast %240 : f32 to vector<4x256xf32>
    %242 = arith.mulf %241, %211 : vector<4x256xf32>
    %243 = arith.addf %208, %242 : vector<4x256xf32>
    %cst_111 = arith.constant 0.000000e+00 : f32
    %244 = vector.broadcast %cst_111 : f32 to vector<4x15xf32>
    %245 = vector.extract_strided_slice %36 {offsets = [0, 15], sizes = [4, 241], strides = [1, 1]} : vector<4x256xf32> to vector<4x241xf32>
    %246 = tpu.concatenate %245, %244 in 1 : vector<4x241xf32>, vector<4x15xf32> -> vector<4x256xf32>
    %c0_112 = arith.constant 0 : index
    %c18 = arith.constant 18 : index
    %247 = memref.load %arg4[%c0_112, %c18] : memref<8x27xf32, #tpu.memory_space<smem>>
    %248 = vector.broadcast %247 : f32 to vector<4x256xf32>
    %249 = arith.mulf %248, %246 : vector<4x256xf32>
    %250 = arith.addf %215, %249 : vector<4x256xf32>
    %c1_113 = arith.constant 1 : index
    %c18_114 = arith.constant 18 : index
    %251 = memref.load %arg4[%c1_113, %c18_114] : memref<8x27xf32, #tpu.memory_space<smem>>
    %252 = vector.broadcast %251 : f32 to vector<4x256xf32>
    %253 = arith.mulf %252, %246 : vector<4x256xf32>
    %254 = arith.addf %219, %253 : vector<4x256xf32>
    %c2_115 = arith.constant 2 : index
    %c18_116 = arith.constant 18 : index
    %255 = memref.load %arg4[%c2_115, %c18_116] : memref<8x27xf32, #tpu.memory_space<smem>>
    %256 = vector.broadcast %255 : f32 to vector<4x256xf32>
    %257 = arith.mulf %256, %246 : vector<4x256xf32>
    %258 = arith.addf %223, %257 : vector<4x256xf32>
    %c3_117 = arith.constant 3 : index
    %c18_118 = arith.constant 18 : index
    %259 = memref.load %arg4[%c3_117, %c18_118] : memref<8x27xf32, #tpu.memory_space<smem>>
    %260 = vector.broadcast %259 : f32 to vector<4x256xf32>
    %261 = arith.mulf %260, %246 : vector<4x256xf32>
    %262 = arith.addf %227, %261 : vector<4x256xf32>
    %c4_119 = arith.constant 4 : index
    %c18_120 = arith.constant 18 : index
    %263 = memref.load %arg4[%c4_119, %c18_120] : memref<8x27xf32, #tpu.memory_space<smem>>
    %264 = vector.broadcast %263 : f32 to vector<4x256xf32>
    %265 = arith.mulf %264, %246 : vector<4x256xf32>
    %266 = arith.addf %231, %265 : vector<4x256xf32>
    %c5_121 = arith.constant 5 : index
    %c18_122 = arith.constant 18 : index
    %267 = memref.load %arg4[%c5_121, %c18_122] : memref<8x27xf32, #tpu.memory_space<smem>>
    %268 = vector.broadcast %267 : f32 to vector<4x256xf32>
    %269 = arith.mulf %268, %246 : vector<4x256xf32>
    %270 = arith.addf %235, %269 : vector<4x256xf32>
    %c6_123 = arith.constant 6 : index
    %c18_124 = arith.constant 18 : index
    %271 = memref.load %arg4[%c6_123, %c18_124] : memref<8x27xf32, #tpu.memory_space<smem>>
    %272 = vector.broadcast %271 : f32 to vector<4x256xf32>
    %273 = arith.mulf %272, %246 : vector<4x256xf32>
    %274 = arith.addf %239, %273 : vector<4x256xf32>
    %c7_125 = arith.constant 7 : index
    %c18_126 = arith.constant 18 : index
    %275 = memref.load %arg4[%c7_125, %c18_126] : memref<8x27xf32, #tpu.memory_space<smem>>
    %276 = vector.broadcast %275 : f32 to vector<4x256xf32>
    %277 = arith.mulf %276, %246 : vector<4x256xf32>
    %278 = arith.addf %243, %277 : vector<4x256xf32>
    %cst_127 = arith.constant 0.000000e+00 : f32
    %279 = vector.broadcast %cst_127 : f32 to vector<4x16xf32>
    %280 = vector.extract_strided_slice %34 {offsets = [0, 16], sizes = [4, 240], strides = [1, 1]} : vector<4x256xf32> to vector<4x240xf32>
    %281 = tpu.concatenate %280, %279 in 1 : vector<4x240xf32>, vector<4x16xf32> -> vector<4x256xf32>
    %c0_128 = arith.constant 0 : index
    %c21 = arith.constant 21 : index
    %282 = memref.load %arg4[%c0_128, %c21] : memref<8x27xf32, #tpu.memory_space<smem>>
    %283 = vector.broadcast %282 : f32 to vector<4x256xf32>
    %284 = arith.mulf %283, %281 : vector<4x256xf32>
    %285 = arith.addf %250, %284 : vector<4x256xf32>
    %c1_129 = arith.constant 1 : index
    %c21_130 = arith.constant 21 : index
    %286 = memref.load %arg4[%c1_129, %c21_130] : memref<8x27xf32, #tpu.memory_space<smem>>
    %287 = vector.broadcast %286 : f32 to vector<4x256xf32>
    %288 = arith.mulf %287, %281 : vector<4x256xf32>
    %289 = arith.addf %254, %288 : vector<4x256xf32>
    %c2_131 = arith.constant 2 : index
    %c21_132 = arith.constant 21 : index
    %290 = memref.load %arg4[%c2_131, %c21_132] : memref<8x27xf32, #tpu.memory_space<smem>>
    %291 = vector.broadcast %290 : f32 to vector<4x256xf32>
    %292 = arith.mulf %291, %281 : vector<4x256xf32>
    %293 = arith.addf %258, %292 : vector<4x256xf32>
    %c3_133 = arith.constant 3 : index
    %c21_134 = arith.constant 21 : index
    %294 = memref.load %arg4[%c3_133, %c21_134] : memref<8x27xf32, #tpu.memory_space<smem>>
    %295 = vector.broadcast %294 : f32 to vector<4x256xf32>
    %296 = arith.mulf %295, %281 : vector<4x256xf32>
    %297 = arith.addf %262, %296 : vector<4x256xf32>
    %c4_135 = arith.constant 4 : index
    %c21_136 = arith.constant 21 : index
    %298 = memref.load %arg4[%c4_135, %c21_136] : memref<8x27xf32, #tpu.memory_space<smem>>
    %299 = vector.broadcast %298 : f32 to vector<4x256xf32>
    %300 = arith.mulf %299, %281 : vector<4x256xf32>
    %301 = arith.addf %266, %300 : vector<4x256xf32>
    %c5_137 = arith.constant 5 : index
    %c21_138 = arith.constant 21 : index
    %302 = memref.load %arg4[%c5_137, %c21_138] : memref<8x27xf32, #tpu.memory_space<smem>>
    %303 = vector.broadcast %302 : f32 to vector<4x256xf32>
    %304 = arith.mulf %303, %281 : vector<4x256xf32>
    %305 = arith.addf %270, %304 : vector<4x256xf32>
    %c6_139 = arith.constant 6 : index
    %c21_140 = arith.constant 21 : index
    %306 = memref.load %arg4[%c6_139, %c21_140] : memref<8x27xf32, #tpu.memory_space<smem>>
    %307 = vector.broadcast %306 : f32 to vector<4x256xf32>
    %308 = arith.mulf %307, %281 : vector<4x256xf32>
    %309 = arith.addf %274, %308 : vector<4x256xf32>
    %c7_141 = arith.constant 7 : index
    %c21_142 = arith.constant 21 : index
    %310 = memref.load %arg4[%c7_141, %c21_142] : memref<8x27xf32, #tpu.memory_space<smem>>
    %311 = vector.broadcast %310 : f32 to vector<4x256xf32>
    %312 = arith.mulf %311, %281 : vector<4x256xf32>
    %313 = arith.addf %278, %312 : vector<4x256xf32>
    %cst_143 = arith.constant 0.000000e+00 : f32
    %314 = vector.broadcast %cst_143 : f32 to vector<4x17xf32>
    %315 = vector.extract_strided_slice %35 {offsets = [0, 17], sizes = [4, 239], strides = [1, 1]} : vector<4x256xf32> to vector<4x239xf32>
    %316 = tpu.concatenate %315, %314 in 1 : vector<4x239xf32>, vector<4x17xf32> -> vector<4x256xf32>
    %c0_144 = arith.constant 0 : index
    %c24 = arith.constant 24 : index
    %317 = memref.load %arg4[%c0_144, %c24] : memref<8x27xf32, #tpu.memory_space<smem>>
    %318 = vector.broadcast %317 : f32 to vector<4x256xf32>
    %319 = arith.mulf %318, %316 : vector<4x256xf32>
    %320 = arith.addf %285, %319 : vector<4x256xf32>
    %c1_145 = arith.constant 1 : index
    %c24_146 = arith.constant 24 : index
    %321 = memref.load %arg4[%c1_145, %c24_146] : memref<8x27xf32, #tpu.memory_space<smem>>
    %322 = vector.broadcast %321 : f32 to vector<4x256xf32>
    %323 = arith.mulf %322, %316 : vector<4x256xf32>
    %324 = arith.addf %289, %323 : vector<4x256xf32>
    %c2_147 = arith.constant 2 : index
    %c24_148 = arith.constant 24 : index
    %325 = memref.load %arg4[%c2_147, %c24_148] : memref<8x27xf32, #tpu.memory_space<smem>>
    %326 = vector.broadcast %325 : f32 to vector<4x256xf32>
    %327 = arith.mulf %326, %316 : vector<4x256xf32>
    %328 = arith.addf %293, %327 : vector<4x256xf32>
    %c3_149 = arith.constant 3 : index
    %c24_150 = arith.constant 24 : index
    %329 = memref.load %arg4[%c3_149, %c24_150] : memref<8x27xf32, #tpu.memory_space<smem>>
    %330 = vector.broadcast %329 : f32 to vector<4x256xf32>
    %331 = arith.mulf %330, %316 : vector<4x256xf32>
    %332 = arith.addf %297, %331 : vector<4x256xf32>
    %c4_151 = arith.constant 4 : index
    %c24_152 = arith.constant 24 : index
    %333 = memref.load %arg4[%c4_151, %c24_152] : memref<8x27xf32, #tpu.memory_space<smem>>
    %334 = vector.broadcast %333 : f32 to vector<4x256xf32>
    %335 = arith.mulf %334, %316 : vector<4x256xf32>
    %336 = arith.addf %301, %335 : vector<4x256xf32>
    %c5_153 = arith.constant 5 : index
    %c24_154 = arith.constant 24 : index
    %337 = memref.load %arg4[%c5_153, %c24_154] : memref<8x27xf32, #tpu.memory_space<smem>>
    %338 = vector.broadcast %337 : f32 to vector<4x256xf32>
    %339 = arith.mulf %338, %316 : vector<4x256xf32>
    %340 = arith.addf %305, %339 : vector<4x256xf32>
    %c6_155 = arith.constant 6 : index
    %c24_156 = arith.constant 24 : index
    %341 = memref.load %arg4[%c6_155, %c24_156] : memref<8x27xf32, #tpu.memory_space<smem>>
    %342 = vector.broadcast %341 : f32 to vector<4x256xf32>
    %343 = arith.mulf %342, %316 : vector<4x256xf32>
    %344 = arith.addf %309, %343 : vector<4x256xf32>
    %c7_157 = arith.constant 7 : index
    %c24_158 = arith.constant 24 : index
    %345 = memref.load %arg4[%c7_157, %c24_158] : memref<8x27xf32, #tpu.memory_space<smem>>
    %346 = vector.broadcast %345 : f32 to vector<4x256xf32>
    %347 = arith.mulf %346, %316 : vector<4x256xf32>
    %348 = arith.addf %313, %347 : vector<4x256xf32>
    %c0_159 = arith.constant 0 : index
    %c256 = arith.constant 256 : index
    %349 = vector.load %arg1[%c0_159, %c256] : memref<4x768xf32, #tpu.memory_space<vmem>>, vector<4x256xf32>
    %350 = arith.mulf %349, %32 : vector<4x256xf32>
    %351 = arith.mulf %349, %33 : vector<4x256xf32>
    %cst_160 = arith.constant 0.000000e+00 : f32
    %352 = vector.broadcast %cst_160 : f32 to vector<4x17xf32>
    %353 = vector.extract_strided_slice %351 {offsets = [0, 0], sizes = [4, 239], strides = [1, 1]} : vector<4x256xf32> to vector<4x239xf32>
    %354 = tpu.concatenate %352, %353 in 1 : vector<4x17xf32>, vector<4x239xf32> -> vector<4x256xf32>
    %c0_161 = arith.constant 0 : index
    %c1_162 = arith.constant 1 : index
    %355 = memref.load %arg4[%c0_161, %c1_162] : memref<8x27xf32, #tpu.memory_space<smem>>
    %356 = vector.broadcast %355 : f32 to vector<4x256xf32>
    %357 = arith.mulf %356, %354 : vector<4x256xf32>
    %358 = arith.addf %320, %357 : vector<4x256xf32>
    %c1_163 = arith.constant 1 : index
    %c1_164 = arith.constant 1 : index
    %359 = memref.load %arg4[%c1_163, %c1_164] : memref<8x27xf32, #tpu.memory_space<smem>>
    %360 = vector.broadcast %359 : f32 to vector<4x256xf32>
    %361 = arith.mulf %360, %354 : vector<4x256xf32>
    %362 = arith.addf %324, %361 : vector<4x256xf32>
    %c2_165 = arith.constant 2 : index
    %c1_166 = arith.constant 1 : index
    %363 = memref.load %arg4[%c2_165, %c1_166] : memref<8x27xf32, #tpu.memory_space<smem>>
    %364 = vector.broadcast %363 : f32 to vector<4x256xf32>
    %365 = arith.mulf %364, %354 : vector<4x256xf32>
    %366 = arith.addf %328, %365 : vector<4x256xf32>
    %c3_167 = arith.constant 3 : index
    %c1_168 = arith.constant 1 : index
    %367 = memref.load %arg4[%c3_167, %c1_168] : memref<8x27xf32, #tpu.memory_space<smem>>
    %368 = vector.broadcast %367 : f32 to vector<4x256xf32>
    %369 = arith.mulf %368, %354 : vector<4x256xf32>
    %370 = arith.addf %332, %369 : vector<4x256xf32>
    %c4_169 = arith.constant 4 : index
    %c1_170 = arith.constant 1 : index
    %371 = memref.load %arg4[%c4_169, %c1_170] : memref<8x27xf32, #tpu.memory_space<smem>>
    %372 = vector.broadcast %371 : f32 to vector<4x256xf32>
    %373 = arith.mulf %372, %354 : vector<4x256xf32>
    %374 = arith.addf %336, %373 : vector<4x256xf32>
    %c5_171 = arith.constant 5 : index
    %c1_172 = arith.constant 1 : index
    %375 = memref.load %arg4[%c5_171, %c1_172] : memref<8x27xf32, #tpu.memory_space<smem>>
    %376 = vector.broadcast %375 : f32 to vector<4x256xf32>
    %377 = arith.mulf %376, %354 : vector<4x256xf32>
    %378 = arith.addf %340, %377 : vector<4x256xf32>
    %c6_173 = arith.constant 6 : index
    %c1_174 = arith.constant 1 : index
    %379 = memref.load %arg4[%c6_173, %c1_174] : memref<8x27xf32, #tpu.memory_space<smem>>
    %380 = vector.broadcast %379 : f32 to vector<4x256xf32>
    %381 = arith.mulf %380, %354 : vector<4x256xf32>
    %382 = arith.addf %344, %381 : vector<4x256xf32>
    %c7_175 = arith.constant 7 : index
    %c1_176 = arith.constant 1 : index
    %383 = memref.load %arg4[%c7_175, %c1_176] : memref<8x27xf32, #tpu.memory_space<smem>>
    %384 = vector.broadcast %383 : f32 to vector<4x256xf32>
    %385 = arith.mulf %384, %354 : vector<4x256xf32>
    %386 = arith.addf %348, %385 : vector<4x256xf32>
    %cst_177 = arith.constant 0.000000e+00 : f32
    %387 = vector.broadcast %cst_177 : f32 to vector<4x16xf32>
    %388 = vector.extract_strided_slice %349 {offsets = [0, 0], sizes = [4, 240], strides = [1, 1]} : vector<4x256xf32> to vector<4x240xf32>
    %389 = tpu.concatenate %387, %388 in 1 : vector<4x16xf32>, vector<4x240xf32> -> vector<4x256xf32>
    %c0_178 = arith.constant 0 : index
    %c4_179 = arith.constant 4 : index
    %390 = memref.load %arg4[%c0_178, %c4_179] : memref<8x27xf32, #tpu.memory_space<smem>>
    %391 = vector.broadcast %390 : f32 to vector<4x256xf32>
    %392 = arith.mulf %391, %389 : vector<4x256xf32>
    %393 = arith.addf %358, %392 : vector<4x256xf32>
    %c1_180 = arith.constant 1 : index
    %c4_181 = arith.constant 4 : index
    %394 = memref.load %arg4[%c1_180, %c4_181] : memref<8x27xf32, #tpu.memory_space<smem>>
    %395 = vector.broadcast %394 : f32 to vector<4x256xf32>
    %396 = arith.mulf %395, %389 : vector<4x256xf32>
    %397 = arith.addf %362, %396 : vector<4x256xf32>
    %c2_182 = arith.constant 2 : index
    %c4_183 = arith.constant 4 : index
    %398 = memref.load %arg4[%c2_182, %c4_183] : memref<8x27xf32, #tpu.memory_space<smem>>
    %399 = vector.broadcast %398 : f32 to vector<4x256xf32>
    %400 = arith.mulf %399, %389 : vector<4x256xf32>
    %401 = arith.addf %366, %400 : vector<4x256xf32>
    %c3_184 = arith.constant 3 : index
    %c4_185 = arith.constant 4 : index
    %402 = memref.load %arg4[%c3_184, %c4_185] : memref<8x27xf32, #tpu.memory_space<smem>>
    %403 = vector.broadcast %402 : f32 to vector<4x256xf32>
    %404 = arith.mulf %403, %389 : vector<4x256xf32>
    %405 = arith.addf %370, %404 : vector<4x256xf32>
    %c4_186 = arith.constant 4 : index
    %c4_187 = arith.constant 4 : index
    %406 = memref.load %arg4[%c4_186, %c4_187] : memref<8x27xf32, #tpu.memory_space<smem>>
    %407 = vector.broadcast %406 : f32 to vector<4x256xf32>
    %408 = arith.mulf %407, %389 : vector<4x256xf32>
    %409 = arith.addf %374, %408 : vector<4x256xf32>
    %c5_188 = arith.constant 5 : index
    %c4_189 = arith.constant 4 : index
    %410 = memref.load %arg4[%c5_188, %c4_189] : memref<8x27xf32, #tpu.memory_space<smem>>
    %411 = vector.broadcast %410 : f32 to vector<4x256xf32>
    %412 = arith.mulf %411, %389 : vector<4x256xf32>
    %413 = arith.addf %378, %412 : vector<4x256xf32>
    %c6_190 = arith.constant 6 : index
    %c4_191 = arith.constant 4 : index
    %414 = memref.load %arg4[%c6_190, %c4_191] : memref<8x27xf32, #tpu.memory_space<smem>>
    %415 = vector.broadcast %414 : f32 to vector<4x256xf32>
    %416 = arith.mulf %415, %389 : vector<4x256xf32>
    %417 = arith.addf %382, %416 : vector<4x256xf32>
    %c7_192 = arith.constant 7 : index
    %c4_193 = arith.constant 4 : index
    %418 = memref.load %arg4[%c7_192, %c4_193] : memref<8x27xf32, #tpu.memory_space<smem>>
    %419 = vector.broadcast %418 : f32 to vector<4x256xf32>
    %420 = arith.mulf %419, %389 : vector<4x256xf32>
    %421 = arith.addf %386, %420 : vector<4x256xf32>
    %cst_194 = arith.constant 0.000000e+00 : f32
    %422 = vector.broadcast %cst_194 : f32 to vector<4x15xf32>
    %423 = vector.extract_strided_slice %350 {offsets = [0, 0], sizes = [4, 241], strides = [1, 1]} : vector<4x256xf32> to vector<4x241xf32>
    %424 = tpu.concatenate %422, %423 in 1 : vector<4x15xf32>, vector<4x241xf32> -> vector<4x256xf32>
    %c0_195 = arith.constant 0 : index
    %c7_196 = arith.constant 7 : index
    %425 = memref.load %arg4[%c0_195, %c7_196] : memref<8x27xf32, #tpu.memory_space<smem>>
    %426 = vector.broadcast %425 : f32 to vector<4x256xf32>
    %427 = arith.mulf %426, %424 : vector<4x256xf32>
    %428 = arith.addf %393, %427 : vector<4x256xf32>
    %c1_197 = arith.constant 1 : index
    %c7_198 = arith.constant 7 : index
    %429 = memref.load %arg4[%c1_197, %c7_198] : memref<8x27xf32, #tpu.memory_space<smem>>
    %430 = vector.broadcast %429 : f32 to vector<4x256xf32>
    %431 = arith.mulf %430, %424 : vector<4x256xf32>
    %432 = arith.addf %397, %431 : vector<4x256xf32>
    %c2_199 = arith.constant 2 : index
    %c7_200 = arith.constant 7 : index
    %433 = memref.load %arg4[%c2_199, %c7_200] : memref<8x27xf32, #tpu.memory_space<smem>>
    %434 = vector.broadcast %433 : f32 to vector<4x256xf32>
    %435 = arith.mulf %434, %424 : vector<4x256xf32>
    %436 = arith.addf %401, %435 : vector<4x256xf32>
    %c3_201 = arith.constant 3 : index
    %c7_202 = arith.constant 7 : index
    %437 = memref.load %arg4[%c3_201, %c7_202] : memref<8x27xf32, #tpu.memory_space<smem>>
    %438 = vector.broadcast %437 : f32 to vector<4x256xf32>
    %439 = arith.mulf %438, %424 : vector<4x256xf32>
    %440 = arith.addf %405, %439 : vector<4x256xf32>
    %c4_203 = arith.constant 4 : index
    %c7_204 = arith.constant 7 : index
    %441 = memref.load %arg4[%c4_203, %c7_204] : memref<8x27xf32, #tpu.memory_space<smem>>
    %442 = vector.broadcast %441 : f32 to vector<4x256xf32>
    %443 = arith.mulf %442, %424 : vector<4x256xf32>
    %444 = arith.addf %409, %443 : vector<4x256xf32>
    %c5_205 = arith.constant 5 : index
    %c7_206 = arith.constant 7 : index
    %445 = memref.load %arg4[%c5_205, %c7_206] : memref<8x27xf32, #tpu.memory_space<smem>>
    %446 = vector.broadcast %445 : f32 to vector<4x256xf32>
    %447 = arith.mulf %446, %424 : vector<4x256xf32>
    %448 = arith.addf %413, %447 : vector<4x256xf32>
    %c6_207 = arith.constant 6 : index
    %c7_208 = arith.constant 7 : index
    %449 = memref.load %arg4[%c6_207, %c7_208] : memref<8x27xf32, #tpu.memory_space<smem>>
    %450 = vector.broadcast %449 : f32 to vector<4x256xf32>
    %451 = arith.mulf %450, %424 : vector<4x256xf32>
    %452 = arith.addf %417, %451 : vector<4x256xf32>
    %c7_209 = arith.constant 7 : index
    %c7_210 = arith.constant 7 : index
    %453 = memref.load %arg4[%c7_209, %c7_210] : memref<8x27xf32, #tpu.memory_space<smem>>
    %454 = vector.broadcast %453 : f32 to vector<4x256xf32>
    %455 = arith.mulf %454, %424 : vector<4x256xf32>
    %456 = arith.addf %421, %455 : vector<4x256xf32>
    %cst_211 = arith.constant 0.000000e+00 : f32
    %457 = vector.broadcast %cst_211 : f32 to vector<4x1xf32>
    %458 = vector.extract_strided_slice %351 {offsets = [0, 0], sizes = [4, 255], strides = [1, 1]} : vector<4x256xf32> to vector<4x255xf32>
    %459 = tpu.concatenate %457, %458 in 1 : vector<4x1xf32>, vector<4x255xf32> -> vector<4x256xf32>
    %c0_212 = arith.constant 0 : index
    %c10 = arith.constant 10 : index
    %460 = memref.load %arg4[%c0_212, %c10] : memref<8x27xf32, #tpu.memory_space<smem>>
    %461 = vector.broadcast %460 : f32 to vector<4x256xf32>
    %462 = arith.mulf %461, %459 : vector<4x256xf32>
    %463 = arith.addf %428, %462 : vector<4x256xf32>
    %c1_213 = arith.constant 1 : index
    %c10_214 = arith.constant 10 : index
    %464 = memref.load %arg4[%c1_213, %c10_214] : memref<8x27xf32, #tpu.memory_space<smem>>
    %465 = vector.broadcast %464 : f32 to vector<4x256xf32>
    %466 = arith.mulf %465, %459 : vector<4x256xf32>
    %467 = arith.addf %432, %466 : vector<4x256xf32>
    %c2_215 = arith.constant 2 : index
    %c10_216 = arith.constant 10 : index
    %468 = memref.load %arg4[%c2_215, %c10_216] : memref<8x27xf32, #tpu.memory_space<smem>>
    %469 = vector.broadcast %468 : f32 to vector<4x256xf32>
    %470 = arith.mulf %469, %459 : vector<4x256xf32>
    %471 = arith.addf %436, %470 : vector<4x256xf32>
    %c3_217 = arith.constant 3 : index
    %c10_218 = arith.constant 10 : index
    %472 = memref.load %arg4[%c3_217, %c10_218] : memref<8x27xf32, #tpu.memory_space<smem>>
    %473 = vector.broadcast %472 : f32 to vector<4x256xf32>
    %474 = arith.mulf %473, %459 : vector<4x256xf32>
    %475 = arith.addf %440, %474 : vector<4x256xf32>
    %c4_219 = arith.constant 4 : index
    %c10_220 = arith.constant 10 : index
    %476 = memref.load %arg4[%c4_219, %c10_220] : memref<8x27xf32, #tpu.memory_space<smem>>
    %477 = vector.broadcast %476 : f32 to vector<4x256xf32>
    %478 = arith.mulf %477, %459 : vector<4x256xf32>
    %479 = arith.addf %444, %478 : vector<4x256xf32>
    %c5_221 = arith.constant 5 : index
    %c10_222 = arith.constant 10 : index
    %480 = memref.load %arg4[%c5_221, %c10_222] : memref<8x27xf32, #tpu.memory_space<smem>>
    %481 = vector.broadcast %480 : f32 to vector<4x256xf32>
    %482 = arith.mulf %481, %459 : vector<4x256xf32>
    %483 = arith.addf %448, %482 : vector<4x256xf32>
    %c6_223 = arith.constant 6 : index
    %c10_224 = arith.constant 10 : index
    %484 = memref.load %arg4[%c6_223, %c10_224] : memref<8x27xf32, #tpu.memory_space<smem>>
    %485 = vector.broadcast %484 : f32 to vector<4x256xf32>
    %486 = arith.mulf %485, %459 : vector<4x256xf32>
    %487 = arith.addf %452, %486 : vector<4x256xf32>
    %c7_225 = arith.constant 7 : index
    %c10_226 = arith.constant 10 : index
    %488 = memref.load %arg4[%c7_225, %c10_226] : memref<8x27xf32, #tpu.memory_space<smem>>
    %489 = vector.broadcast %488 : f32 to vector<4x256xf32>
    %490 = arith.mulf %489, %459 : vector<4x256xf32>
    %491 = arith.addf %456, %490 : vector<4x256xf32>
    %c0_227 = arith.constant 0 : index
    %c13 = arith.constant 13 : index
    %492 = memref.load %arg4[%c0_227, %c13] : memref<8x27xf32, #tpu.memory_space<smem>>
    %493 = vector.broadcast %492 : f32 to vector<4x256xf32>
    %494 = arith.mulf %493, %349 : vector<4x256xf32>
    %495 = arith.addf %463, %494 : vector<4x256xf32>
    %c1_228 = arith.constant 1 : index
    %c13_229 = arith.constant 13 : index
    %496 = memref.load %arg4[%c1_228, %c13_229] : memref<8x27xf32, #tpu.memory_space<smem>>
    %497 = vector.broadcast %496 : f32 to vector<4x256xf32>
    %498 = arith.mulf %497, %349 : vector<4x256xf32>
    %499 = arith.addf %467, %498 : vector<4x256xf32>
    %c2_230 = arith.constant 2 : index
    %c13_231 = arith.constant 13 : index
    %500 = memref.load %arg4[%c2_230, %c13_231] : memref<8x27xf32, #tpu.memory_space<smem>>
    %501 = vector.broadcast %500 : f32 to vector<4x256xf32>
    %502 = arith.mulf %501, %349 : vector<4x256xf32>
    %503 = arith.addf %471, %502 : vector<4x256xf32>
    %c3_232 = arith.constant 3 : index
    %c13_233 = arith.constant 13 : index
    %504 = memref.load %arg4[%c3_232, %c13_233] : memref<8x27xf32, #tpu.memory_space<smem>>
    %505 = vector.broadcast %504 : f32 to vector<4x256xf32>
    %506 = arith.mulf %505, %349 : vector<4x256xf32>
    %507 = arith.addf %475, %506 : vector<4x256xf32>
    %c4_234 = arith.constant 4 : index
    %c13_235 = arith.constant 13 : index
    %508 = memref.load %arg4[%c4_234, %c13_235] : memref<8x27xf32, #tpu.memory_space<smem>>
    %509 = vector.broadcast %508 : f32 to vector<4x256xf32>
    %510 = arith.mulf %509, %349 : vector<4x256xf32>
    %511 = arith.addf %479, %510 : vector<4x256xf32>
    %c5_236 = arith.constant 5 : index
    %c13_237 = arith.constant 13 : index
    %512 = memref.load %arg4[%c5_236, %c13_237] : memref<8x27xf32, #tpu.memory_space<smem>>
    %513 = vector.broadcast %512 : f32 to vector<4x256xf32>
    %514 = arith.mulf %513, %349 : vector<4x256xf32>
    %515 = arith.addf %483, %514 : vector<4x256xf32>
    %c6_238 = arith.constant 6 : index
    %c13_239 = arith.constant 13 : index
    %516 = memref.load %arg4[%c6_238, %c13_239] : memref<8x27xf32, #tpu.memory_space<smem>>
    %517 = vector.broadcast %516 : f32 to vector<4x256xf32>
    %518 = arith.mulf %517, %349 : vector<4x256xf32>
    %519 = arith.addf %487, %518 : vector<4x256xf32>
    %c7_240 = arith.constant 7 : index
    %c13_241 = arith.constant 13 : index
    %520 = memref.load %arg4[%c7_240, %c13_241] : memref<8x27xf32, #tpu.memory_space<smem>>
    %521 = vector.broadcast %520 : f32 to vector<4x256xf32>
    %522 = arith.mulf %521, %349 : vector<4x256xf32>
    %523 = arith.addf %491, %522 : vector<4x256xf32>
    %cst_242 = arith.constant 0.000000e+00 : f32
    %524 = vector.broadcast %cst_242 : f32 to vector<4x1xf32>
    %525 = vector.extract_strided_slice %350 {offsets = [0, 1], sizes = [4, 255], strides = [1, 1]} : vector<4x256xf32> to vector<4x255xf32>
    %526 = tpu.concatenate %525, %524 in 1 : vector<4x255xf32>, vector<4x1xf32> -> vector<4x256xf32>
    %c0_243 = arith.constant 0 : index
    %c16 = arith.constant 16 : index
    %527 = memref.load %arg4[%c0_243, %c16] : memref<8x27xf32, #tpu.memory_space<smem>>
    %528 = vector.broadcast %527 : f32 to vector<4x256xf32>
    %529 = arith.mulf %528, %526 : vector<4x256xf32>
    %530 = arith.addf %495, %529 : vector<4x256xf32>
    %c1_244 = arith.constant 1 : index
    %c16_245 = arith.constant 16 : index
    %531 = memref.load %arg4[%c1_244, %c16_245] : memref<8x27xf32, #tpu.memory_space<smem>>
    %532 = vector.broadcast %531 : f32 to vector<4x256xf32>
    %533 = arith.mulf %532, %526 : vector<4x256xf32>
    %534 = arith.addf %499, %533 : vector<4x256xf32>
    %c2_246 = arith.constant 2 : index
    %c16_247 = arith.constant 16 : index
    %535 = memref.load %arg4[%c2_246, %c16_247] : memref<8x27xf32, #tpu.memory_space<smem>>
    %536 = vector.broadcast %535 : f32 to vector<4x256xf32>
    %537 = arith.mulf %536, %526 : vector<4x256xf32>
    %538 = arith.addf %503, %537 : vector<4x256xf32>
    %c3_248 = arith.constant 3 : index
    %c16_249 = arith.constant 16 : index
    %539 = memref.load %arg4[%c3_248, %c16_249] : memref<8x27xf32, #tpu.memory_space<smem>>
    %540 = vector.broadcast %539 : f32 to vector<4x256xf32>
    %541 = arith.mulf %540, %526 : vector<4x256xf32>
    %542 = arith.addf %507, %541 : vector<4x256xf32>
    %c4_250 = arith.constant 4 : index
    %c16_251 = arith.constant 16 : index
    %543 = memref.load %arg4[%c4_250, %c16_251] : memref<8x27xf32, #tpu.memory_space<smem>>
    %544 = vector.broadcast %543 : f32 to vector<4x256xf32>
    %545 = arith.mulf %544, %526 : vector<4x256xf32>
    %546 = arith.addf %511, %545 : vector<4x256xf32>
    %c5_252 = arith.constant 5 : index
    %c16_253 = arith.constant 16 : index
    %547 = memref.load %arg4[%c5_252, %c16_253] : memref<8x27xf32, #tpu.memory_space<smem>>
    %548 = vector.broadcast %547 : f32 to vector<4x256xf32>
    %549 = arith.mulf %548, %526 : vector<4x256xf32>
    %550 = arith.addf %515, %549 : vector<4x256xf32>
    %c6_254 = arith.constant 6 : index
    %c16_255 = arith.constant 16 : index
    %551 = memref.load %arg4[%c6_254, %c16_255] : memref<8x27xf32, #tpu.memory_space<smem>>
    %552 = vector.broadcast %551 : f32 to vector<4x256xf32>
    %553 = arith.mulf %552, %526 : vector<4x256xf32>
    %554 = arith.addf %519, %553 : vector<4x256xf32>
    %c7_256 = arith.constant 7 : index
    %c16_257 = arith.constant 16 : index
    %555 = memref.load %arg4[%c7_256, %c16_257] : memref<8x27xf32, #tpu.memory_space<smem>>
    %556 = vector.broadcast %555 : f32 to vector<4x256xf32>
    %557 = arith.mulf %556, %526 : vector<4x256xf32>
    %558 = arith.addf %523, %557 : vector<4x256xf32>
    %cst_258 = arith.constant 0.000000e+00 : f32
    %559 = vector.broadcast %cst_258 : f32 to vector<4x15xf32>
    %560 = vector.extract_strided_slice %351 {offsets = [0, 15], sizes = [4, 241], strides = [1, 1]} : vector<4x256xf32> to vector<4x241xf32>
    %561 = tpu.concatenate %560, %559 in 1 : vector<4x241xf32>, vector<4x15xf32> -> vector<4x256xf32>
    %c0_259 = arith.constant 0 : index
    %c19 = arith.constant 19 : index
    %562 = memref.load %arg4[%c0_259, %c19] : memref<8x27xf32, #tpu.memory_space<smem>>
    %563 = vector.broadcast %562 : f32 to vector<4x256xf32>
    %564 = arith.mulf %563, %561 : vector<4x256xf32>
    %565 = arith.addf %530, %564 : vector<4x256xf32>
    %c1_260 = arith.constant 1 : index
    %c19_261 = arith.constant 19 : index
    %566 = memref.load %arg4[%c1_260, %c19_261] : memref<8x27xf32, #tpu.memory_space<smem>>
    %567 = vector.broadcast %566 : f32 to vector<4x256xf32>
    %568 = arith.mulf %567, %561 : vector<4x256xf32>
    %569 = arith.addf %534, %568 : vector<4x256xf32>
    %c2_262 = arith.constant 2 : index
    %c19_263 = arith.constant 19 : index
    %570 = memref.load %arg4[%c2_262, %c19_263] : memref<8x27xf32, #tpu.memory_space<smem>>
    %571 = vector.broadcast %570 : f32 to vector<4x256xf32>
    %572 = arith.mulf %571, %561 : vector<4x256xf32>
    %573 = arith.addf %538, %572 : vector<4x256xf32>
    %c3_264 = arith.constant 3 : index
    %c19_265 = arith.constant 19 : index
    %574 = memref.load %arg4[%c3_264, %c19_265] : memref<8x27xf32, #tpu.memory_space<smem>>
    %575 = vector.broadcast %574 : f32 to vector<4x256xf32>
    %576 = arith.mulf %575, %561 : vector<4x256xf32>
    %577 = arith.addf %542, %576 : vector<4x256xf32>
    %c4_266 = arith.constant 4 : index
    %c19_267 = arith.constant 19 : index
    %578 = memref.load %arg4[%c4_266, %c19_267] : memref<8x27xf32, #tpu.memory_space<smem>>
    %579 = vector.broadcast %578 : f32 to vector<4x256xf32>
    %580 = arith.mulf %579, %561 : vector<4x256xf32>
    %581 = arith.addf %546, %580 : vector<4x256xf32>
    %c5_268 = arith.constant 5 : index
    %c19_269 = arith.constant 19 : index
    %582 = memref.load %arg4[%c5_268, %c19_269] : memref<8x27xf32, #tpu.memory_space<smem>>
    %583 = vector.broadcast %582 : f32 to vector<4x256xf32>
    %584 = arith.mulf %583, %561 : vector<4x256xf32>
    %585 = arith.addf %550, %584 : vector<4x256xf32>
    %c6_270 = arith.constant 6 : index
    %c19_271 = arith.constant 19 : index
    %586 = memref.load %arg4[%c6_270, %c19_271] : memref<8x27xf32, #tpu.memory_space<smem>>
    %587 = vector.broadcast %586 : f32 to vector<4x256xf32>
    %588 = arith.mulf %587, %561 : vector<4x256xf32>
    %589 = arith.addf %554, %588 : vector<4x256xf32>
    %c7_272 = arith.constant 7 : index
    %c19_273 = arith.constant 19 : index
    %590 = memref.load %arg4[%c7_272, %c19_273] : memref<8x27xf32, #tpu.memory_space<smem>>
    %591 = vector.broadcast %590 : f32 to vector<4x256xf32>
    %592 = arith.mulf %591, %561 : vector<4x256xf32>
    %593 = arith.addf %558, %592 : vector<4x256xf32>
    %cst_274 = arith.constant 0.000000e+00 : f32
    %594 = vector.broadcast %cst_274 : f32 to vector<4x16xf32>
    %595 = vector.extract_strided_slice %349 {offsets = [0, 16], sizes = [4, 240], strides = [1, 1]} : vector<4x256xf32> to vector<4x240xf32>
    %596 = tpu.concatenate %595, %594 in 1 : vector<4x240xf32>, vector<4x16xf32> -> vector<4x256xf32>
    %c0_275 = arith.constant 0 : index
    %c22 = arith.constant 22 : index
    %597 = memref.load %arg4[%c0_275, %c22] : memref<8x27xf32, #tpu.memory_space<smem>>
    %598 = vector.broadcast %597 : f32 to vector<4x256xf32>
    %599 = arith.mulf %598, %596 : vector<4x256xf32>
    %600 = arith.addf %565, %599 : vector<4x256xf32>
    %c1_276 = arith.constant 1 : index
    %c22_277 = arith.constant 22 : index
    %601 = memref.load %arg4[%c1_276, %c22_277] : memref<8x27xf32, #tpu.memory_space<smem>>
    %602 = vector.broadcast %601 : f32 to vector<4x256xf32>
    %603 = arith.mulf %602, %596 : vector<4x256xf32>
    %604 = arith.addf %569, %603 : vector<4x256xf32>
    %c2_278 = arith.constant 2 : index
    %c22_279 = arith.constant 22 : index
    %605 = memref.load %arg4[%c2_278, %c22_279] : memref<8x27xf32, #tpu.memory_space<smem>>
    %606 = vector.broadcast %605 : f32 to vector<4x256xf32>
    %607 = arith.mulf %606, %596 : vector<4x256xf32>
    %608 = arith.addf %573, %607 : vector<4x256xf32>
    %c3_280 = arith.constant 3 : index
    %c22_281 = arith.constant 22 : index
    %609 = memref.load %arg4[%c3_280, %c22_281] : memref<8x27xf32, #tpu.memory_space<smem>>
    %610 = vector.broadcast %609 : f32 to vector<4x256xf32>
    %611 = arith.mulf %610, %596 : vector<4x256xf32>
    %612 = arith.addf %577, %611 : vector<4x256xf32>
    %c4_282 = arith.constant 4 : index
    %c22_283 = arith.constant 22 : index
    %613 = memref.load %arg4[%c4_282, %c22_283] : memref<8x27xf32, #tpu.memory_space<smem>>
    %614 = vector.broadcast %613 : f32 to vector<4x256xf32>
    %615 = arith.mulf %614, %596 : vector<4x256xf32>
    %616 = arith.addf %581, %615 : vector<4x256xf32>
    %c5_284 = arith.constant 5 : index
    %c22_285 = arith.constant 22 : index
    %617 = memref.load %arg4[%c5_284, %c22_285] : memref<8x27xf32, #tpu.memory_space<smem>>
    %618 = vector.broadcast %617 : f32 to vector<4x256xf32>
    %619 = arith.mulf %618, %596 : vector<4x256xf32>
    %620 = arith.addf %585, %619 : vector<4x256xf32>
    %c6_286 = arith.constant 6 : index
    %c22_287 = arith.constant 22 : index
    %621 = memref.load %arg4[%c6_286, %c22_287] : memref<8x27xf32, #tpu.memory_space<smem>>
    %622 = vector.broadcast %621 : f32 to vector<4x256xf32>
    %623 = arith.mulf %622, %596 : vector<4x256xf32>
    %624 = arith.addf %589, %623 : vector<4x256xf32>
    %c7_288 = arith.constant 7 : index
    %c22_289 = arith.constant 22 : index
    %625 = memref.load %arg4[%c7_288, %c22_289] : memref<8x27xf32, #tpu.memory_space<smem>>
    %626 = vector.broadcast %625 : f32 to vector<4x256xf32>
    %627 = arith.mulf %626, %596 : vector<4x256xf32>
    %628 = arith.addf %593, %627 : vector<4x256xf32>
    %cst_290 = arith.constant 0.000000e+00 : f32
    %629 = vector.broadcast %cst_290 : f32 to vector<4x17xf32>
    %630 = vector.extract_strided_slice %350 {offsets = [0, 17], sizes = [4, 239], strides = [1, 1]} : vector<4x256xf32> to vector<4x239xf32>
    %631 = tpu.concatenate %630, %629 in 1 : vector<4x239xf32>, vector<4x17xf32> -> vector<4x256xf32>
    %c0_291 = arith.constant 0 : index
    %c25 = arith.constant 25 : index
    %632 = memref.load %arg4[%c0_291, %c25] : memref<8x27xf32, #tpu.memory_space<smem>>
    %633 = vector.broadcast %632 : f32 to vector<4x256xf32>
    %634 = arith.mulf %633, %631 : vector<4x256xf32>
    %635 = arith.addf %600, %634 : vector<4x256xf32>
    %c1_292 = arith.constant 1 : index
    %c25_293 = arith.constant 25 : index
    %636 = memref.load %arg4[%c1_292, %c25_293] : memref<8x27xf32, #tpu.memory_space<smem>>
    %637 = vector.broadcast %636 : f32 to vector<4x256xf32>
    %638 = arith.mulf %637, %631 : vector<4x256xf32>
    %639 = arith.addf %604, %638 : vector<4x256xf32>
    %c2_294 = arith.constant 2 : index
    %c25_295 = arith.constant 25 : index
    %640 = memref.load %arg4[%c2_294, %c25_295] : memref<8x27xf32, #tpu.memory_space<smem>>
    %641 = vector.broadcast %640 : f32 to vector<4x256xf32>
    %642 = arith.mulf %641, %631 : vector<4x256xf32>
    %643 = arith.addf %608, %642 : vector<4x256xf32>
    %c3_296 = arith.constant 3 : index
    %c25_297 = arith.constant 25 : index
    %644 = memref.load %arg4[%c3_296, %c25_297] : memref<8x27xf32, #tpu.memory_space<smem>>
    %645 = vector.broadcast %644 : f32 to vector<4x256xf32>
    %646 = arith.mulf %645, %631 : vector<4x256xf32>
    %647 = arith.addf %612, %646 : vector<4x256xf32>
    %c4_298 = arith.constant 4 : index
    %c25_299 = arith.constant 25 : index
    %648 = memref.load %arg4[%c4_298, %c25_299] : memref<8x27xf32, #tpu.memory_space<smem>>
    %649 = vector.broadcast %648 : f32 to vector<4x256xf32>
    %650 = arith.mulf %649, %631 : vector<4x256xf32>
    %651 = arith.addf %616, %650 : vector<4x256xf32>
    %c5_300 = arith.constant 5 : index
    %c25_301 = arith.constant 25 : index
    %652 = memref.load %arg4[%c5_300, %c25_301] : memref<8x27xf32, #tpu.memory_space<smem>>
    %653 = vector.broadcast %652 : f32 to vector<4x256xf32>
    %654 = arith.mulf %653, %631 : vector<4x256xf32>
    %655 = arith.addf %620, %654 : vector<4x256xf32>
    %c6_302 = arith.constant 6 : index
    %c25_303 = arith.constant 25 : index
    %656 = memref.load %arg4[%c6_302, %c25_303] : memref<8x27xf32, #tpu.memory_space<smem>>
    %657 = vector.broadcast %656 : f32 to vector<4x256xf32>
    %658 = arith.mulf %657, %631 : vector<4x256xf32>
    %659 = arith.addf %624, %658 : vector<4x256xf32>
    %c7_304 = arith.constant 7 : index
    %c25_305 = arith.constant 25 : index
    %660 = memref.load %arg4[%c7_304, %c25_305] : memref<8x27xf32, #tpu.memory_space<smem>>
    %661 = vector.broadcast %660 : f32 to vector<4x256xf32>
    %662 = arith.mulf %661, %631 : vector<4x256xf32>
    %663 = arith.addf %628, %662 : vector<4x256xf32>
    %c0_306 = arith.constant 0 : index
    %c512 = arith.constant 512 : index
    %664 = vector.load %arg1[%c0_306, %c512] : memref<4x768xf32, #tpu.memory_space<vmem>>, vector<4x256xf32>
    %665 = arith.mulf %664, %32 : vector<4x256xf32>
    %666 = arith.mulf %664, %33 : vector<4x256xf32>
    %cst_307 = arith.constant 0.000000e+00 : f32
    %667 = vector.broadcast %cst_307 : f32 to vector<4x17xf32>
    %668 = vector.extract_strided_slice %666 {offsets = [0, 0], sizes = [4, 239], strides = [1, 1]} : vector<4x256xf32> to vector<4x239xf32>
    %669 = tpu.concatenate %667, %668 in 1 : vector<4x17xf32>, vector<4x239xf32> -> vector<4x256xf32>
    %c0_308 = arith.constant 0 : index
    %c2_309 = arith.constant 2 : index
    %670 = memref.load %arg4[%c0_308, %c2_309] : memref<8x27xf32, #tpu.memory_space<smem>>
    %671 = vector.broadcast %670 : f32 to vector<4x256xf32>
    %672 = arith.mulf %671, %669 : vector<4x256xf32>
    %673 = arith.addf %635, %672 : vector<4x256xf32>
    %c1_310 = arith.constant 1 : index
    %c2_311 = arith.constant 2 : index
    %674 = memref.load %arg4[%c1_310, %c2_311] : memref<8x27xf32, #tpu.memory_space<smem>>
    %675 = vector.broadcast %674 : f32 to vector<4x256xf32>
    %676 = arith.mulf %675, %669 : vector<4x256xf32>
    %677 = arith.addf %639, %676 : vector<4x256xf32>
    %c2_312 = arith.constant 2 : index
    %c2_313 = arith.constant 2 : index
    %678 = memref.load %arg4[%c2_312, %c2_313] : memref<8x27xf32, #tpu.memory_space<smem>>
    %679 = vector.broadcast %678 : f32 to vector<4x256xf32>
    %680 = arith.mulf %679, %669 : vector<4x256xf32>
    %681 = arith.addf %643, %680 : vector<4x256xf32>
    %c3_314 = arith.constant 3 : index
    %c2_315 = arith.constant 2 : index
    %682 = memref.load %arg4[%c3_314, %c2_315] : memref<8x27xf32, #tpu.memory_space<smem>>
    %683 = vector.broadcast %682 : f32 to vector<4x256xf32>
    %684 = arith.mulf %683, %669 : vector<4x256xf32>
    %685 = arith.addf %647, %684 : vector<4x256xf32>
    %c4_316 = arith.constant 4 : index
    %c2_317 = arith.constant 2 : index
    %686 = memref.load %arg4[%c4_316, %c2_317] : memref<8x27xf32, #tpu.memory_space<smem>>
    %687 = vector.broadcast %686 : f32 to vector<4x256xf32>
    %688 = arith.mulf %687, %669 : vector<4x256xf32>
    %689 = arith.addf %651, %688 : vector<4x256xf32>
    %c5_318 = arith.constant 5 : index
    %c2_319 = arith.constant 2 : index
    %690 = memref.load %arg4[%c5_318, %c2_319] : memref<8x27xf32, #tpu.memory_space<smem>>
    %691 = vector.broadcast %690 : f32 to vector<4x256xf32>
    %692 = arith.mulf %691, %669 : vector<4x256xf32>
    %693 = arith.addf %655, %692 : vector<4x256xf32>
    %c6_320 = arith.constant 6 : index
    %c2_321 = arith.constant 2 : index
    %694 = memref.load %arg4[%c6_320, %c2_321] : memref<8x27xf32, #tpu.memory_space<smem>>
    %695 = vector.broadcast %694 : f32 to vector<4x256xf32>
    %696 = arith.mulf %695, %669 : vector<4x256xf32>
    %697 = arith.addf %659, %696 : vector<4x256xf32>
    %c7_322 = arith.constant 7 : index
    %c2_323 = arith.constant 2 : index
    %698 = memref.load %arg4[%c7_322, %c2_323] : memref<8x27xf32, #tpu.memory_space<smem>>
    %699 = vector.broadcast %698 : f32 to vector<4x256xf32>
    %700 = arith.mulf %699, %669 : vector<4x256xf32>
    %701 = arith.addf %663, %700 : vector<4x256xf32>
    %cst_324 = arith.constant 0.000000e+00 : f32
    %702 = vector.broadcast %cst_324 : f32 to vector<4x16xf32>
    %703 = vector.extract_strided_slice %664 {offsets = [0, 0], sizes = [4, 240], strides = [1, 1]} : vector<4x256xf32> to vector<4x240xf32>
    %704 = tpu.concatenate %702, %703 in 1 : vector<4x16xf32>, vector<4x240xf32> -> vector<4x256xf32>
    %c0_325 = arith.constant 0 : index
    %c5_326 = arith.constant 5 : index
    %705 = memref.load %arg4[%c0_325, %c5_326] : memref<8x27xf32, #tpu.memory_space<smem>>
    %706 = vector.broadcast %705 : f32 to vector<4x256xf32>
    %707 = arith.mulf %706, %704 : vector<4x256xf32>
    %708 = arith.addf %673, %707 : vector<4x256xf32>
    %c1_327 = arith.constant 1 : index
    %c5_328 = arith.constant 5 : index
    %709 = memref.load %arg4[%c1_327, %c5_328] : memref<8x27xf32, #tpu.memory_space<smem>>
    %710 = vector.broadcast %709 : f32 to vector<4x256xf32>
    %711 = arith.mulf %710, %704 : vector<4x256xf32>
    %712 = arith.addf %677, %711 : vector<4x256xf32>
    %c2_329 = arith.constant 2 : index
    %c5_330 = arith.constant 5 : index
    %713 = memref.load %arg4[%c2_329, %c5_330] : memref<8x27xf32, #tpu.memory_space<smem>>
    %714 = vector.broadcast %713 : f32 to vector<4x256xf32>
    %715 = arith.mulf %714, %704 : vector<4x256xf32>
    %716 = arith.addf %681, %715 : vector<4x256xf32>
    %c3_331 = arith.constant 3 : index
    %c5_332 = arith.constant 5 : index
    %717 = memref.load %arg4[%c3_331, %c5_332] : memref<8x27xf32, #tpu.memory_space<smem>>
    %718 = vector.broadcast %717 : f32 to vector<4x256xf32>
    %719 = arith.mulf %718, %704 : vector<4x256xf32>
    %720 = arith.addf %685, %719 : vector<4x256xf32>
    %c4_333 = arith.constant 4 : index
    %c5_334 = arith.constant 5 : index
    %721 = memref.load %arg4[%c4_333, %c5_334] : memref<8x27xf32, #tpu.memory_space<smem>>
    %722 = vector.broadcast %721 : f32 to vector<4x256xf32>
    %723 = arith.mulf %722, %704 : vector<4x256xf32>
    %724 = arith.addf %689, %723 : vector<4x256xf32>
    %c5_335 = arith.constant 5 : index
    %c5_336 = arith.constant 5 : index
    %725 = memref.load %arg4[%c5_335, %c5_336] : memref<8x27xf32, #tpu.memory_space<smem>>
    %726 = vector.broadcast %725 : f32 to vector<4x256xf32>
    %727 = arith.mulf %726, %704 : vector<4x256xf32>
    %728 = arith.addf %693, %727 : vector<4x256xf32>
    %c6_337 = arith.constant 6 : index
    %c5_338 = arith.constant 5 : index
    %729 = memref.load %arg4[%c6_337, %c5_338] : memref<8x27xf32, #tpu.memory_space<smem>>
    %730 = vector.broadcast %729 : f32 to vector<4x256xf32>
    %731 = arith.mulf %730, %704 : vector<4x256xf32>
    %732 = arith.addf %697, %731 : vector<4x256xf32>
    %c7_339 = arith.constant 7 : index
    %c5_340 = arith.constant 5 : index
    %733 = memref.load %arg4[%c7_339, %c5_340] : memref<8x27xf32, #tpu.memory_space<smem>>
    %734 = vector.broadcast %733 : f32 to vector<4x256xf32>
    %735 = arith.mulf %734, %704 : vector<4x256xf32>
    %736 = arith.addf %701, %735 : vector<4x256xf32>
    %cst_341 = arith.constant 0.000000e+00 : f32
    %737 = vector.broadcast %cst_341 : f32 to vector<4x15xf32>
    %738 = vector.extract_strided_slice %665 {offsets = [0, 0], sizes = [4, 241], strides = [1, 1]} : vector<4x256xf32> to vector<4x241xf32>
    %739 = tpu.concatenate %737, %738 in 1 : vector<4x15xf32>, vector<4x241xf32> -> vector<4x256xf32>
    %c0_342 = arith.constant 0 : index
    %c8 = arith.constant 8 : index
    %740 = memref.load %arg4[%c0_342, %c8] : memref<8x27xf32, #tpu.memory_space<smem>>
    %741 = vector.broadcast %740 : f32 to vector<4x256xf32>
    %742 = arith.mulf %741, %739 : vector<4x256xf32>
    %743 = arith.addf %708, %742 : vector<4x256xf32>
    %c1_343 = arith.constant 1 : index
    %c8_344 = arith.constant 8 : index
    %744 = memref.load %arg4[%c1_343, %c8_344] : memref<8x27xf32, #tpu.memory_space<smem>>
    %745 = vector.broadcast %744 : f32 to vector<4x256xf32>
    %746 = arith.mulf %745, %739 : vector<4x256xf32>
    %747 = arith.addf %712, %746 : vector<4x256xf32>
    %c2_345 = arith.constant 2 : index
    %c8_346 = arith.constant 8 : index
    %748 = memref.load %arg4[%c2_345, %c8_346] : memref<8x27xf32, #tpu.memory_space<smem>>
    %749 = vector.broadcast %748 : f32 to vector<4x256xf32>
    %750 = arith.mulf %749, %739 : vector<4x256xf32>
    %751 = arith.addf %716, %750 : vector<4x256xf32>
    %c3_347 = arith.constant 3 : index
    %c8_348 = arith.constant 8 : index
    %752 = memref.load %arg4[%c3_347, %c8_348] : memref<8x27xf32, #tpu.memory_space<smem>>
    %753 = vector.broadcast %752 : f32 to vector<4x256xf32>
    %754 = arith.mulf %753, %739 : vector<4x256xf32>
    %755 = arith.addf %720, %754 : vector<4x256xf32>
    %c4_349 = arith.constant 4 : index
    %c8_350 = arith.constant 8 : index
    %756 = memref.load %arg4[%c4_349, %c8_350] : memref<8x27xf32, #tpu.memory_space<smem>>
    %757 = vector.broadcast %756 : f32 to vector<4x256xf32>
    %758 = arith.mulf %757, %739 : vector<4x256xf32>
    %759 = arith.addf %724, %758 : vector<4x256xf32>
    %c5_351 = arith.constant 5 : index
    %c8_352 = arith.constant 8 : index
    %760 = memref.load %arg4[%c5_351, %c8_352] : memref<8x27xf32, #tpu.memory_space<smem>>
    %761 = vector.broadcast %760 : f32 to vector<4x256xf32>
    %762 = arith.mulf %761, %739 : vector<4x256xf32>
    %763 = arith.addf %728, %762 : vector<4x256xf32>
    %c6_353 = arith.constant 6 : index
    %c8_354 = arith.constant 8 : index
    %764 = memref.load %arg4[%c6_353, %c8_354] : memref<8x27xf32, #tpu.memory_space<smem>>
    %765 = vector.broadcast %764 : f32 to vector<4x256xf32>
    %766 = arith.mulf %765, %739 : vector<4x256xf32>
    %767 = arith.addf %732, %766 : vector<4x256xf32>
    %c7_355 = arith.constant 7 : index
    %c8_356 = arith.constant 8 : index
    %768 = memref.load %arg4[%c7_355, %c8_356] : memref<8x27xf32, #tpu.memory_space<smem>>
    %769 = vector.broadcast %768 : f32 to vector<4x256xf32>
    %770 = arith.mulf %769, %739 : vector<4x256xf32>
    %771 = arith.addf %736, %770 : vector<4x256xf32>
    %cst_357 = arith.constant 0.000000e+00 : f32
    %772 = vector.broadcast %cst_357 : f32 to vector<4x1xf32>
    %773 = vector.extract_strided_slice %666 {offsets = [0, 0], sizes = [4, 255], strides = [1, 1]} : vector<4x256xf32> to vector<4x255xf32>
    %774 = tpu.concatenate %772, %773 in 1 : vector<4x1xf32>, vector<4x255xf32> -> vector<4x256xf32>
    %c0_358 = arith.constant 0 : index
    %c11 = arith.constant 11 : index
    %775 = memref.load %arg4[%c0_358, %c11] : memref<8x27xf32, #tpu.memory_space<smem>>
    %776 = vector.broadcast %775 : f32 to vector<4x256xf32>
    %777 = arith.mulf %776, %774 : vector<4x256xf32>
    %778 = arith.addf %743, %777 : vector<4x256xf32>
    %c1_359 = arith.constant 1 : index
    %c11_360 = arith.constant 11 : index
    %779 = memref.load %arg4[%c1_359, %c11_360] : memref<8x27xf32, #tpu.memory_space<smem>>
    %780 = vector.broadcast %779 : f32 to vector<4x256xf32>
    %781 = arith.mulf %780, %774 : vector<4x256xf32>
    %782 = arith.addf %747, %781 : vector<4x256xf32>
    %c2_361 = arith.constant 2 : index
    %c11_362 = arith.constant 11 : index
    %783 = memref.load %arg4[%c2_361, %c11_362] : memref<8x27xf32, #tpu.memory_space<smem>>
    %784 = vector.broadcast %783 : f32 to vector<4x256xf32>
    %785 = arith.mulf %784, %774 : vector<4x256xf32>
    %786 = arith.addf %751, %785 : vector<4x256xf32>
    %c3_363 = arith.constant 3 : index
    %c11_364 = arith.constant 11 : index
    %787 = memref.load %arg4[%c3_363, %c11_364] : memref<8x27xf32, #tpu.memory_space<smem>>
    %788 = vector.broadcast %787 : f32 to vector<4x256xf32>
    %789 = arith.mulf %788, %774 : vector<4x256xf32>
    %790 = arith.addf %755, %789 : vector<4x256xf32>
    %c4_365 = arith.constant 4 : index
    %c11_366 = arith.constant 11 : index
    %791 = memref.load %arg4[%c4_365, %c11_366] : memref<8x27xf32, #tpu.memory_space<smem>>
    %792 = vector.broadcast %791 : f32 to vector<4x256xf32>
    %793 = arith.mulf %792, %774 : vector<4x256xf32>
    %794 = arith.addf %759, %793 : vector<4x256xf32>
    %c5_367 = arith.constant 5 : index
    %c11_368 = arith.constant 11 : index
    %795 = memref.load %arg4[%c5_367, %c11_368] : memref<8x27xf32, #tpu.memory_space<smem>>
    %796 = vector.broadcast %795 : f32 to vector<4x256xf32>
    %797 = arith.mulf %796, %774 : vector<4x256xf32>
    %798 = arith.addf %763, %797 : vector<4x256xf32>
    %c6_369 = arith.constant 6 : index
    %c11_370 = arith.constant 11 : index
    %799 = memref.load %arg4[%c6_369, %c11_370] : memref<8x27xf32, #tpu.memory_space<smem>>
    %800 = vector.broadcast %799 : f32 to vector<4x256xf32>
    %801 = arith.mulf %800, %774 : vector<4x256xf32>
    %802 = arith.addf %767, %801 : vector<4x256xf32>
    %c7_371 = arith.constant 7 : index
    %c11_372 = arith.constant 11 : index
    %803 = memref.load %arg4[%c7_371, %c11_372] : memref<8x27xf32, #tpu.memory_space<smem>>
    %804 = vector.broadcast %803 : f32 to vector<4x256xf32>
    %805 = arith.mulf %804, %774 : vector<4x256xf32>
    %806 = arith.addf %771, %805 : vector<4x256xf32>
    %c0_373 = arith.constant 0 : index
    %c14 = arith.constant 14 : index
    %807 = memref.load %arg4[%c0_373, %c14] : memref<8x27xf32, #tpu.memory_space<smem>>
    %808 = vector.broadcast %807 : f32 to vector<4x256xf32>
    %809 = arith.mulf %808, %664 : vector<4x256xf32>
    %810 = arith.addf %778, %809 : vector<4x256xf32>
    %c1_374 = arith.constant 1 : index
    %c14_375 = arith.constant 14 : index
    %811 = memref.load %arg4[%c1_374, %c14_375] : memref<8x27xf32, #tpu.memory_space<smem>>
    %812 = vector.broadcast %811 : f32 to vector<4x256xf32>
    %813 = arith.mulf %812, %664 : vector<4x256xf32>
    %814 = arith.addf %782, %813 : vector<4x256xf32>
    %c2_376 = arith.constant 2 : index
    %c14_377 = arith.constant 14 : index
    %815 = memref.load %arg4[%c2_376, %c14_377] : memref<8x27xf32, #tpu.memory_space<smem>>
    %816 = vector.broadcast %815 : f32 to vector<4x256xf32>
    %817 = arith.mulf %816, %664 : vector<4x256xf32>
    %818 = arith.addf %786, %817 : vector<4x256xf32>
    %c3_378 = arith.constant 3 : index
    %c14_379 = arith.constant 14 : index
    %819 = memref.load %arg4[%c3_378, %c14_379] : memref<8x27xf32, #tpu.memory_space<smem>>
    %820 = vector.broadcast %819 : f32 to vector<4x256xf32>
    %821 = arith.mulf %820, %664 : vector<4x256xf32>
    %822 = arith.addf %790, %821 : vector<4x256xf32>
    %c4_380 = arith.constant 4 : index
    %c14_381 = arith.constant 14 : index
    %823 = memref.load %arg4[%c4_380, %c14_381] : memref<8x27xf32, #tpu.memory_space<smem>>
    %824 = vector.broadcast %823 : f32 to vector<4x256xf32>
    %825 = arith.mulf %824, %664 : vector<4x256xf32>
    %826 = arith.addf %794, %825 : vector<4x256xf32>
    %c5_382 = arith.constant 5 : index
    %c14_383 = arith.constant 14 : index
    %827 = memref.load %arg4[%c5_382, %c14_383] : memref<8x27xf32, #tpu.memory_space<smem>>
    %828 = vector.broadcast %827 : f32 to vector<4x256xf32>
    %829 = arith.mulf %828, %664 : vector<4x256xf32>
    %830 = arith.addf %798, %829 : vector<4x256xf32>
    %c6_384 = arith.constant 6 : index
    %c14_385 = arith.constant 14 : index
    %831 = memref.load %arg4[%c6_384, %c14_385] : memref<8x27xf32, #tpu.memory_space<smem>>
    %832 = vector.broadcast %831 : f32 to vector<4x256xf32>
    %833 = arith.mulf %832, %664 : vector<4x256xf32>
    %834 = arith.addf %802, %833 : vector<4x256xf32>
    %c7_386 = arith.constant 7 : index
    %c14_387 = arith.constant 14 : index
    %835 = memref.load %arg4[%c7_386, %c14_387] : memref<8x27xf32, #tpu.memory_space<smem>>
    %836 = vector.broadcast %835 : f32 to vector<4x256xf32>
    %837 = arith.mulf %836, %664 : vector<4x256xf32>
    %838 = arith.addf %806, %837 : vector<4x256xf32>
    %cst_388 = arith.constant 0.000000e+00 : f32
    %839 = vector.broadcast %cst_388 : f32 to vector<4x1xf32>
    %840 = vector.extract_strided_slice %665 {offsets = [0, 1], sizes = [4, 255], strides = [1, 1]} : vector<4x256xf32> to vector<4x255xf32>
    %841 = tpu.concatenate %840, %839 in 1 : vector<4x255xf32>, vector<4x1xf32> -> vector<4x256xf32>
    %c0_389 = arith.constant 0 : index
    %c17 = arith.constant 17 : index
    %842 = memref.load %arg4[%c0_389, %c17] : memref<8x27xf32, #tpu.memory_space<smem>>
    %843 = vector.broadcast %842 : f32 to vector<4x256xf32>
    %844 = arith.mulf %843, %841 : vector<4x256xf32>
    %845 = arith.addf %810, %844 : vector<4x256xf32>
    %c1_390 = arith.constant 1 : index
    %c17_391 = arith.constant 17 : index
    %846 = memref.load %arg4[%c1_390, %c17_391] : memref<8x27xf32, #tpu.memory_space<smem>>
    %847 = vector.broadcast %846 : f32 to vector<4x256xf32>
    %848 = arith.mulf %847, %841 : vector<4x256xf32>
    %849 = arith.addf %814, %848 : vector<4x256xf32>
    %c2_392 = arith.constant 2 : index
    %c17_393 = arith.constant 17 : index
    %850 = memref.load %arg4[%c2_392, %c17_393] : memref<8x27xf32, #tpu.memory_space<smem>>
    %851 = vector.broadcast %850 : f32 to vector<4x256xf32>
    %852 = arith.mulf %851, %841 : vector<4x256xf32>
    %853 = arith.addf %818, %852 : vector<4x256xf32>
    %c3_394 = arith.constant 3 : index
    %c17_395 = arith.constant 17 : index
    %854 = memref.load %arg4[%c3_394, %c17_395] : memref<8x27xf32, #tpu.memory_space<smem>>
    %855 = vector.broadcast %854 : f32 to vector<4x256xf32>
    %856 = arith.mulf %855, %841 : vector<4x256xf32>
    %857 = arith.addf %822, %856 : vector<4x256xf32>
    %c4_396 = arith.constant 4 : index
    %c17_397 = arith.constant 17 : index
    %858 = memref.load %arg4[%c4_396, %c17_397] : memref<8x27xf32, #tpu.memory_space<smem>>
    %859 = vector.broadcast %858 : f32 to vector<4x256xf32>
    %860 = arith.mulf %859, %841 : vector<4x256xf32>
    %861 = arith.addf %826, %860 : vector<4x256xf32>
    %c5_398 = arith.constant 5 : index
    %c17_399 = arith.constant 17 : index
    %862 = memref.load %arg4[%c5_398, %c17_399] : memref<8x27xf32, #tpu.memory_space<smem>>
    %863 = vector.broadcast %862 : f32 to vector<4x256xf32>
    %864 = arith.mulf %863, %841 : vector<4x256xf32>
    %865 = arith.addf %830, %864 : vector<4x256xf32>
    %c6_400 = arith.constant 6 : index
    %c17_401 = arith.constant 17 : index
    %866 = memref.load %arg4[%c6_400, %c17_401] : memref<8x27xf32, #tpu.memory_space<smem>>
    %867 = vector.broadcast %866 : f32 to vector<4x256xf32>
    %868 = arith.mulf %867, %841 : vector<4x256xf32>
    %869 = arith.addf %834, %868 : vector<4x256xf32>
    %c7_402 = arith.constant 7 : index
    %c17_403 = arith.constant 17 : index
    %870 = memref.load %arg4[%c7_402, %c17_403] : memref<8x27xf32, #tpu.memory_space<smem>>
    %871 = vector.broadcast %870 : f32 to vector<4x256xf32>
    %872 = arith.mulf %871, %841 : vector<4x256xf32>
    %873 = arith.addf %838, %872 : vector<4x256xf32>
    %cst_404 = arith.constant 0.000000e+00 : f32
    %874 = vector.broadcast %cst_404 : f32 to vector<4x15xf32>
    %875 = vector.extract_strided_slice %666 {offsets = [0, 15], sizes = [4, 241], strides = [1, 1]} : vector<4x256xf32> to vector<4x241xf32>
    %876 = tpu.concatenate %875, %874 in 1 : vector<4x241xf32>, vector<4x15xf32> -> vector<4x256xf32>
    %c0_405 = arith.constant 0 : index
    %c20 = arith.constant 20 : index
    %877 = memref.load %arg4[%c0_405, %c20] : memref<8x27xf32, #tpu.memory_space<smem>>
    %878 = vector.broadcast %877 : f32 to vector<4x256xf32>
    %879 = arith.mulf %878, %876 : vector<4x256xf32>
    %880 = arith.addf %845, %879 : vector<4x256xf32>
    %c1_406 = arith.constant 1 : index
    %c20_407 = arith.constant 20 : index
    %881 = memref.load %arg4[%c1_406, %c20_407] : memref<8x27xf32, #tpu.memory_space<smem>>
    %882 = vector.broadcast %881 : f32 to vector<4x256xf32>
    %883 = arith.mulf %882, %876 : vector<4x256xf32>
    %884 = arith.addf %849, %883 : vector<4x256xf32>
    %c2_408 = arith.constant 2 : index
    %c20_409 = arith.constant 20 : index
    %885 = memref.load %arg4[%c2_408, %c20_409] : memref<8x27xf32, #tpu.memory_space<smem>>
    %886 = vector.broadcast %885 : f32 to vector<4x256xf32>
    %887 = arith.mulf %886, %876 : vector<4x256xf32>
    %888 = arith.addf %853, %887 : vector<4x256xf32>
    %c3_410 = arith.constant 3 : index
    %c20_411 = arith.constant 20 : index
    %889 = memref.load %arg4[%c3_410, %c20_411] : memref<8x27xf32, #tpu.memory_space<smem>>
    %890 = vector.broadcast %889 : f32 to vector<4x256xf32>
    %891 = arith.mulf %890, %876 : vector<4x256xf32>
    %892 = arith.addf %857, %891 : vector<4x256xf32>
    %c4_412 = arith.constant 4 : index
    %c20_413 = arith.constant 20 : index
    %893 = memref.load %arg4[%c4_412, %c20_413] : memref<8x27xf32, #tpu.memory_space<smem>>
    %894 = vector.broadcast %893 : f32 to vector<4x256xf32>
    %895 = arith.mulf %894, %876 : vector<4x256xf32>
    %896 = arith.addf %861, %895 : vector<4x256xf32>
    %c5_414 = arith.constant 5 : index
    %c20_415 = arith.constant 20 : index
    %897 = memref.load %arg4[%c5_414, %c20_415] : memref<8x27xf32, #tpu.memory_space<smem>>
    %898 = vector.broadcast %897 : f32 to vector<4x256xf32>
    %899 = arith.mulf %898, %876 : vector<4x256xf32>
    %900 = arith.addf %865, %899 : vector<4x256xf32>
    %c6_416 = arith.constant 6 : index
    %c20_417 = arith.constant 20 : index
    %901 = memref.load %arg4[%c6_416, %c20_417] : memref<8x27xf32, #tpu.memory_space<smem>>
    %902 = vector.broadcast %901 : f32 to vector<4x256xf32>
    %903 = arith.mulf %902, %876 : vector<4x256xf32>
    %904 = arith.addf %869, %903 : vector<4x256xf32>
    %c7_418 = arith.constant 7 : index
    %c20_419 = arith.constant 20 : index
    %905 = memref.load %arg4[%c7_418, %c20_419] : memref<8x27xf32, #tpu.memory_space<smem>>
    %906 = vector.broadcast %905 : f32 to vector<4x256xf32>
    %907 = arith.mulf %906, %876 : vector<4x256xf32>
    %908 = arith.addf %873, %907 : vector<4x256xf32>
    %cst_420 = arith.constant 0.000000e+00 : f32
    %909 = vector.broadcast %cst_420 : f32 to vector<4x16xf32>
    %910 = vector.extract_strided_slice %664 {offsets = [0, 16], sizes = [4, 240], strides = [1, 1]} : vector<4x256xf32> to vector<4x240xf32>
    %911 = tpu.concatenate %910, %909 in 1 : vector<4x240xf32>, vector<4x16xf32> -> vector<4x256xf32>
    %c0_421 = arith.constant 0 : index
    %c23 = arith.constant 23 : index
    %912 = memref.load %arg4[%c0_421, %c23] : memref<8x27xf32, #tpu.memory_space<smem>>
    %913 = vector.broadcast %912 : f32 to vector<4x256xf32>
    %914 = arith.mulf %913, %911 : vector<4x256xf32>
    %915 = arith.addf %880, %914 : vector<4x256xf32>
    %c1_422 = arith.constant 1 : index
    %c23_423 = arith.constant 23 : index
    %916 = memref.load %arg4[%c1_422, %c23_423] : memref<8x27xf32, #tpu.memory_space<smem>>
    %917 = vector.broadcast %916 : f32 to vector<4x256xf32>
    %918 = arith.mulf %917, %911 : vector<4x256xf32>
    %919 = arith.addf %884, %918 : vector<4x256xf32>
    %c2_424 = arith.constant 2 : index
    %c23_425 = arith.constant 23 : index
    %920 = memref.load %arg4[%c2_424, %c23_425] : memref<8x27xf32, #tpu.memory_space<smem>>
    %921 = vector.broadcast %920 : f32 to vector<4x256xf32>
    %922 = arith.mulf %921, %911 : vector<4x256xf32>
    %923 = arith.addf %888, %922 : vector<4x256xf32>
    %c3_426 = arith.constant 3 : index
    %c23_427 = arith.constant 23 : index
    %924 = memref.load %arg4[%c3_426, %c23_427] : memref<8x27xf32, #tpu.memory_space<smem>>
    %925 = vector.broadcast %924 : f32 to vector<4x256xf32>
    %926 = arith.mulf %925, %911 : vector<4x256xf32>
    %927 = arith.addf %892, %926 : vector<4x256xf32>
    %c4_428 = arith.constant 4 : index
    %c23_429 = arith.constant 23 : index
    %928 = memref.load %arg4[%c4_428, %c23_429] : memref<8x27xf32, #tpu.memory_space<smem>>
    %929 = vector.broadcast %928 : f32 to vector<4x256xf32>
    %930 = arith.mulf %929, %911 : vector<4x256xf32>
    %931 = arith.addf %896, %930 : vector<4x256xf32>
    %c5_430 = arith.constant 5 : index
    %c23_431 = arith.constant 23 : index
    %932 = memref.load %arg4[%c5_430, %c23_431] : memref<8x27xf32, #tpu.memory_space<smem>>
    %933 = vector.broadcast %932 : f32 to vector<4x256xf32>
    %934 = arith.mulf %933, %911 : vector<4x256xf32>
    %935 = arith.addf %900, %934 : vector<4x256xf32>
    %c6_432 = arith.constant 6 : index
    %c23_433 = arith.constant 23 : index
    %936 = memref.load %arg4[%c6_432, %c23_433] : memref<8x27xf32, #tpu.memory_space<smem>>
    %937 = vector.broadcast %936 : f32 to vector<4x256xf32>
    %938 = arith.mulf %937, %911 : vector<4x256xf32>
    %939 = arith.addf %904, %938 : vector<4x256xf32>
    %c7_434 = arith.constant 7 : index
    %c23_435 = arith.constant 23 : index
    %940 = memref.load %arg4[%c7_434, %c23_435] : memref<8x27xf32, #tpu.memory_space<smem>>
    %941 = vector.broadcast %940 : f32 to vector<4x256xf32>
    %942 = arith.mulf %941, %911 : vector<4x256xf32>
    %943 = arith.addf %908, %942 : vector<4x256xf32>
    %cst_436 = arith.constant 0.000000e+00 : f32
    %944 = vector.broadcast %cst_436 : f32 to vector<4x17xf32>
    %945 = vector.extract_strided_slice %665 {offsets = [0, 17], sizes = [4, 239], strides = [1, 1]} : vector<4x256xf32> to vector<4x239xf32>
    %946 = tpu.concatenate %945, %944 in 1 : vector<4x239xf32>, vector<4x17xf32> -> vector<4x256xf32>
    %c0_437 = arith.constant 0 : index
    %c26 = arith.constant 26 : index
    %947 = memref.load %arg4[%c0_437, %c26] : memref<8x27xf32, #tpu.memory_space<smem>>
    %948 = vector.broadcast %947 : f32 to vector<4x256xf32>
    %949 = arith.mulf %948, %946 : vector<4x256xf32>
    %950 = arith.addf %915, %949 : vector<4x256xf32>
    %c1_438 = arith.constant 1 : index
    %c26_439 = arith.constant 26 : index
    %951 = memref.load %arg4[%c1_438, %c26_439] : memref<8x27xf32, #tpu.memory_space<smem>>
    %952 = vector.broadcast %951 : f32 to vector<4x256xf32>
    %953 = arith.mulf %952, %946 : vector<4x256xf32>
    %954 = arith.addf %919, %953 : vector<4x256xf32>
    %c2_440 = arith.constant 2 : index
    %c26_441 = arith.constant 26 : index
    %955 = memref.load %arg4[%c2_440, %c26_441] : memref<8x27xf32, #tpu.memory_space<smem>>
    %956 = vector.broadcast %955 : f32 to vector<4x256xf32>
    %957 = arith.mulf %956, %946 : vector<4x256xf32>
    %958 = arith.addf %923, %957 : vector<4x256xf32>
    %c3_442 = arith.constant 3 : index
    %c26_443 = arith.constant 26 : index
    %959 = memref.load %arg4[%c3_442, %c26_443] : memref<8x27xf32, #tpu.memory_space<smem>>
    %960 = vector.broadcast %959 : f32 to vector<4x256xf32>
    %961 = arith.mulf %960, %946 : vector<4x256xf32>
    %962 = arith.addf %927, %961 : vector<4x256xf32>
    %c4_444 = arith.constant 4 : index
    %c26_445 = arith.constant 26 : index
    %963 = memref.load %arg4[%c4_444, %c26_445] : memref<8x27xf32, #tpu.memory_space<smem>>
    %964 = vector.broadcast %963 : f32 to vector<4x256xf32>
    %965 = arith.mulf %964, %946 : vector<4x256xf32>
    %966 = arith.addf %931, %965 : vector<4x256xf32>
    %c5_446 = arith.constant 5 : index
    %c26_447 = arith.constant 26 : index
    %967 = memref.load %arg4[%c5_446, %c26_447] : memref<8x27xf32, #tpu.memory_space<smem>>
    %968 = vector.broadcast %967 : f32 to vector<4x256xf32>
    %969 = arith.mulf %968, %946 : vector<4x256xf32>
    %970 = arith.addf %935, %969 : vector<4x256xf32>
    %c6_448 = arith.constant 6 : index
    %c26_449 = arith.constant 26 : index
    %971 = memref.load %arg4[%c6_448, %c26_449] : memref<8x27xf32, #tpu.memory_space<smem>>
    %972 = vector.broadcast %971 : f32 to vector<4x256xf32>
    %973 = arith.mulf %972, %946 : vector<4x256xf32>
    %974 = arith.addf %939, %973 : vector<4x256xf32>
    %c7_450 = arith.constant 7 : index
    %c26_451 = arith.constant 26 : index
    %975 = memref.load %arg4[%c7_450, %c26_451] : memref<8x27xf32, #tpu.memory_space<smem>>
    %976 = vector.broadcast %975 : f32 to vector<4x256xf32>
    %977 = arith.mulf %976, %946 : vector<4x256xf32>
    %978 = arith.addf %943, %977 : vector<4x256xf32>
    %c0_452 = arith.constant 0 : index
    %c0_453 = arith.constant 0 : index
    %979 = vector.load %arg6[%c0_452, %c0_453] : memref<4x2048xf32, #tpu.memory_space<vmem>>, vector<4x256xf32>
    tpu.vector_store %arg6[%c0_452, %c0_453], %950 {strides = array<i32>} : memref<4x2048xf32, #tpu.memory_space<vmem>>, vector<4x256xf32>,
    %c0_454 = arith.constant 0 : index
    %c256_455 = arith.constant 256 : index
    %980 = vector.load %arg6[%c0_454, %c256_455] : memref<4x2048xf32, #tpu.memory_space<vmem>>, vector<4x256xf32>
    tpu.vector_store %arg6[%c0_454, %c256_455], %954 {strides = array<i32>} : memref<4x2048xf32, #tpu.memory_space<vmem>>, vector<4x256xf32>,
    %c0_456 = arith.constant 0 : index
    %c512_457 = arith.constant 512 : index
    %981 = vector.load %arg6[%c0_456, %c512_457] : memref<4x2048xf32, #tpu.memory_space<vmem>>, vector<4x256xf32>
    tpu.vector_store %arg6[%c0_456, %c512_457], %958 {strides = array<i32>} : memref<4x2048xf32, #tpu.memory_space<vmem>>, vector<4x256xf32>,
    %c0_458 = arith.constant 0 : index
    %c768 = arith.constant 768 : index
    %982 = vector.load %arg6[%c0_458, %c768] : memref<4x2048xf32, #tpu.memory_space<vmem>>, vector<4x256xf32>
    tpu.vector_store %arg6[%c0_458, %c768], %962 {strides = array<i32>} : memref<4x2048xf32, #tpu.memory_space<vmem>>, vector<4x256xf32>,
    %c0_459 = arith.constant 0 : index
    %c1024 = arith.constant 1024 : index
    %983 = vector.load %arg6[%c0_459, %c1024] : memref<4x2048xf32, #tpu.memory_space<vmem>>, vector<4x256xf32>
    tpu.vector_store %arg6[%c0_459, %c1024], %966 {strides = array<i32>} : memref<4x2048xf32, #tpu.memory_space<vmem>>, vector<4x256xf32>,
    %c0_460 = arith.constant 0 : index
    %c1280 = arith.constant 1280 : index
    %984 = vector.load %arg6[%c0_460, %c1280] : memref<4x2048xf32, #tpu.memory_space<vmem>>, vector<4x256xf32>
    tpu.vector_store %arg6[%c0_460, %c1280], %970 {strides = array<i32>} : memref<4x2048xf32, #tpu.memory_space<vmem>>, vector<4x256xf32>,
    %c0_461 = arith.constant 0 : index
    %c1536 = arith.constant 1536 : index
    %985 = vector.load %arg6[%c0_461, %c1536] : memref<4x2048xf32, #tpu.memory_space<vmem>>, vector<4x256xf32>
    tpu.vector_store %arg6[%c0_461, %c1536], %974 {strides = array<i32>} : memref<4x2048xf32, #tpu.memory_space<vmem>>, vector<4x256xf32>,
    %c0_462 = arith.constant 0 : index
    %c1792 = arith.constant 1792 : index
    %986 = vector.load %arg6[%c0_462, %c1792] : memref<4x2048xf32, #tpu.memory_space<vmem>>, vector<4x256xf32>
    tpu.vector_store %arg6[%c0_462, %c1792], %978 {strides = array<i32>} : memref<4x2048xf32, #tpu.memory_space<vmem>>, vector<4x256xf32>,
    %987 = arith.maximumf %950, %954 : vector<4x256xf32>
    %988 = arith.maximumf %987, %958 : vector<4x256xf32>
    %989 = arith.maximumf %988, %962 : vector<4x256xf32>
    %990 = arith.maximumf %989, %966 : vector<4x256xf32>
    %991 = arith.maximumf %990, %970 : vector<4x256xf32>
    %992 = arith.maximumf %991, %974 : vector<4x256xf32>
    %993 = arith.maximumf %992, %978 : vector<4x256xf32>
    %994 = arith.subf %950, %993 : vector<4x256xf32>
    %995 = math.exp %994 : vector<4x256xf32>
    %996 = arith.subf %954, %993 : vector<4x256xf32>
    %997 = math.exp %996 : vector<4x256xf32>
    %998 = arith.subf %958, %993 : vector<4x256xf32>
    %999 = math.exp %998 : vector<4x256xf32>
    %1000 = arith.subf %962, %993 : vector<4x256xf32>
    %1001 = math.exp %1000 : vector<4x256xf32>
    %1002 = arith.subf %966, %993 : vector<4x256xf32>
    %1003 = math.exp %1002 : vector<4x256xf32>
    %1004 = arith.subf %970, %993 : vector<4x256xf32>
    %1005 = math.exp %1004 : vector<4x256xf32>
    %1006 = arith.subf %974, %993 : vector<4x256xf32>
    %1007 = math.exp %1006 : vector<4x256xf32>
    %1008 = arith.subf %978, %993 : vector<4x256xf32>
    %1009 = math.exp %1008 : vector<4x256xf32>
    %1010 = arith.addf %995, %997 : vector<4x256xf32>
    %1011 = arith.addf %1010, %999 : vector<4x256xf32>
    %1012 = arith.addf %1011, %1001 : vector<4x256xf32>
    %1013 = arith.addf %1012, %1003 : vector<4x256xf32>
    %1014 = arith.addf %1013, %1005 : vector<4x256xf32>
    %1015 = arith.addf %1014, %1007 : vector<4x256xf32>
    %1016 = arith.addf %1015, %1009 : vector<4x256xf32>
    %1017 = tpu.reciprocal %1016 {approx = true} : vector<4x256xf32> -> vector<4x256xf32>
    %1018 = arith.mulf %1016, %1017 : vector<4x256xf32>
    %cst_463 = arith.constant 2.000000e+00 : f32
    %1019 = vector.broadcast %cst_463 : f32 to vector<4x256xf32>
    %1020 = arith.subf %1019, %1018 : vector<4x256xf32>
    %1021 = arith.mulf %1017, %1020 : vector<4x256xf32>
    %1022 = arith.mulf %995, %1021 : vector<4x256xf32>
    %c0_464 = arith.constant 0 : index
    %c0_465 = arith.constant 0 : index
    %1023 = vector.load %arg7[%c0_464, %c0_465] : memref<4x2048xf32, #tpu.memory_space<vmem>>, vector<4x256xf32>
    tpu.vector_store %arg7[%c0_464, %c0_465], %1022 {strides = array<i32>} : memref<4x2048xf32, #tpu.memory_space<vmem>>, vector<4x256xf32>,
    %1024 = arith.mulf %997, %1021 : vector<4x256xf32>
    %c0_466 = arith.constant 0 : index
    %c256_467 = arith.constant 256 : index
    %1025 = vector.load %arg7[%c0_466, %c256_467] : memref<4x2048xf32, #tpu.memory_space<vmem>>, vector<4x256xf32>
    tpu.vector_store %arg7[%c0_466, %c256_467], %1024 {strides = array<i32>} : memref<4x2048xf32, #tpu.memory_space<vmem>>, vector<4x256xf32>,
    %1026 = arith.mulf %999, %1021 : vector<4x256xf32>
    %c0_468 = arith.constant 0 : index
    %c512_469 = arith.constant 512 : index
    %1027 = vector.load %arg7[%c0_468, %c512_469] : memref<4x2048xf32, #tpu.memory_space<vmem>>, vector<4x256xf32>
    tpu.vector_store %arg7[%c0_468, %c512_469], %1026 {strides = array<i32>} : memref<4x2048xf32, #tpu.memory_space<vmem>>, vector<4x256xf32>,
    %1028 = arith.mulf %1001, %1021 : vector<4x256xf32>
    %c0_470 = arith.constant 0 : index
    %c768_471 = arith.constant 768 : index
    %1029 = vector.load %arg7[%c0_470, %c768_471] : memref<4x2048xf32, #tpu.memory_space<vmem>>, vector<4x256xf32>
    tpu.vector_store %arg7[%c0_470, %c768_471], %1028 {strides = array<i32>} : memref<4x2048xf32, #tpu.memory_space<vmem>>, vector<4x256xf32>,
    %1030 = arith.mulf %1003, %1021 : vector<4x256xf32>
    %c0_472 = arith.constant 0 : index
    %c1024_473 = arith.constant 1024 : index
    %1031 = vector.load %arg7[%c0_472, %c1024_473] : memref<4x2048xf32, #tpu.memory_space<vmem>>, vector<4x256xf32>
    tpu.vector_store %arg7[%c0_472, %c1024_473], %1030 {strides = array<i32>} : memref<4x2048xf32, #tpu.memory_space<vmem>>, vector<4x256xf32>,
    %1032 = arith.mulf %1005, %1021 : vector<4x256xf32>
    %c0_474 = arith.constant 0 : index
    %c1280_475 = arith.constant 1280 : index
    %1033 = vector.load %arg7[%c0_474, %c1280_475] : memref<4x2048xf32, #tpu.memory_space<vmem>>, vector<4x256xf32>
    tpu.vector_store %arg7[%c0_474, %c1280_475], %1032 {strides = array<i32>} : memref<4x2048xf32, #tpu.memory_space<vmem>>, vector<4x256xf32>,
    %1034 = arith.mulf %1007, %1021 : vector<4x256xf32>
    %c0_476 = arith.constant 0 : index
    %c1536_477 = arith.constant 1536 : index
    %1035 = vector.load %arg7[%c0_476, %c1536_477] : memref<4x2048xf32, #tpu.memory_space<vmem>>, vector<4x256xf32>
    tpu.vector_store %arg7[%c0_476, %c1536_477], %1034 {strides = array<i32>} : memref<4x2048xf32, #tpu.memory_space<vmem>>, vector<4x256xf32>,
    %1036 = arith.mulf %1009, %1021 : vector<4x256xf32>
    %c0_478 = arith.constant 0 : index
    %c1792_479 = arith.constant 1792 : index
    %1037 = vector.load %arg7[%c0_478, %c1792_479] : memref<4x2048xf32, #tpu.memory_space<vmem>>, vector<4x256xf32>
    tpu.vector_store %arg7[%c0_478, %c1792_479], %1036 {strides = array<i32>} : memref<4x2048xf32, #tpu.memory_space<vmem>>, vector<4x256xf32>,
    return
  }
  func.func @transform_0(%arg0: i32) -> (i32, i32) {
    %c0_i32 = arith.constant 0 : i32
    %c0_i32_0 = arith.constant 0 : i32
    return %arg0, %c0_i32 : i32, i32
  }
  func.func @transform_1(%arg0: i32) -> (i32, i32) {
    %c0_i32 = arith.constant 0 : i32
    %c0_i32_0 = arith.constant 0 : i32
    %c0_i32_1 = arith.constant 0 : i32
    return %c0_i32, %c0_i32_0 : i32, i32
  }
  func.func @transform_2(%arg0: i32) -> (i32, i32) {
    %c0_i32 = arith.constant 0 : i32
    %c0_i32_0 = arith.constant 0 : i32
    %c0_i32_1 = arith.constant 0 : i32
    return %c0_i32, %c0_i32_0 : i32, i32
  }
  func.func @transform_3(%arg0: i32) -> (i32, i32) {
    %c0_i32 = arith.constant 0 : i32
    %c0_i32_0 = arith.constant 0 : i32
    %c0_i32_1 = arith.constant 0 : i32
    return %c0_i32, %c0_i32_0 : i32, i32
  }
  func.func @transform_4(%arg0: i32) -> i32 {
    %c0_i32 = arith.constant 0 : i32
    %c0_i32_0 = arith.constant 0 : i32
    return %c0_i32 : i32
  }
  func.func @transform_5(%arg0: i32) -> (i32, i32) {
    %c0_i32 = arith.constant 0 : i32
    %c0_i32_0 = arith.constant 0 : i32
    return %arg0, %c0_i32 : i32, i32
  }
  func.func @transform_6(%arg0: i32) -> (i32, i32) {
    %c0_i32 = arith.constant 0 : i32
    %c0_i32_0 = arith.constant 0 : i32
    return %arg0, %c0_i32 : i32, i32
  }
}

</mosaic_0001>

<llo_original>
// kernel: img_segmentor_forward.1
$region0: #{img_segmentor_forward.1}
  #allocation0 [shape = 'u32[]', space=smem, size = 0x4, offset = 0x4, fixed_abs, tag = 'smem constant byte address 0x4 - core index']
  #allocation1 [shape = 'u32[144,128]{1,0:T(1,128)}', space=vmem, size = 0x12000, scoped, tag = 'internal scratch']
  %s0 = inlined_call_operand.vmem [shape: f32[4,768], index: 0, kind: input, shape index: {}]
  %s1 = inlined_call_operand.vmem [shape: f32[4,256], index: 1, kind: input, shape index: {}]
  %s2 = inlined_call_operand.vmem [shape: f32[4,256], index: 2, kind: input, shape index: {}]
  %s3 = inlined_call_operand.vmem [shape: f32[8,27], index: 3, kind: input, shape index: {}]
  %s4 = inlined_call_operand.vmem [shape: f32[8], index: 4, kind: input, shape index: {}]
  %s5 = inlined_call_operand.vmem [shape: f32[4,2048], index: 5, kind: output, shape index: {0}]
  %s6 = inlined_call_operand.vmem [shape: f32[4,2048], index: 6, kind: output, shape index: {1}]
  %7 = xla_tuple %s5, %s6
  %s8 = sld [smem:[#allocation0]]
  $region46: #{img_segmentor_forward.1} parent=0
    _
  %s10 = ssub.s32 1, %s8
  %s11 = scalar_select 0, %s10, %s8
  $region1: #{img_segmentor_forward.1} parent=0
    #allocation2 [shape = 'u8[4096]{0}', space=smem, size = 0x1000, scoped, tag = 'input window, operand 3, single buffered']
    #allocation3 [shape = 's32[1]{0}', space=sflag, size = 0x4, scoped, tag = 'scoped memory for img_segmentor_forward.1']
    #allocation4 [shape = 'u8[512]{0}', space=smem, size = 0x200, scoped, tag = 'input window, operand 4, single buffered']
    #allocation5 [shape = 's32[1]{0}', space=sflag, size = 0x4, scoped, tag = 'scoped memory for img_segmentor_forward.1']
    %12 = vsyncpa [#allocation3], 0
    %13 = vsyncpa [#allocation5], 0
    // Predicated region
    $region2: #{img_segmentor_forward.1} parent=1 // pred_check
      _
    $region3: #{img_segmentor_forward.1} parent=1 // pred_check_branch
      %15 = sbr.rel (0) target = $region5
    $region4: #{img_segmentor_forward.1} parent=1 // pred_region
      _
    $region5: #{img_segmentor_forward.1} parent=1 // pred_fallthru
      _
    // Predicated region
    $region6: #{img_segmentor_forward.1} parent=1 // pred_check
      _
    $region7: #{img_segmentor_forward.1} parent=1 // pred_check_branch
      %17 = sbr.rel (0) target = $region9
    $region8: #{img_segmentor_forward.1} parent=1 // pred_region
      _
    $region9: #{img_segmentor_forward.1} parent=1 // pred_fallthru
      _
    // Predicated region
    $region10: #{img_segmentor_forward.1} parent=1 // pred_check
      _
    $region11: #{img_segmentor_forward.1} parent=1 // pred_check_branch
      %19 = sbr.rel (0) target = $region13
    $region12: #{img_segmentor_forward.1} parent=1 // pred_region
      _
    $region13: #{img_segmentor_forward.1} parent=1 // pred_fallthru
      _
    // Predicated region
    $region14: #{img_segmentor_forward.1} parent=1 // pred_check
      _
    $region15: #{img_segmentor_forward.1} parent=1 // pred_check_branch
      %21 = sbr.rel (0) target = $region17
    $region16: #{img_segmentor_forward.1} parent=1 // pred_region
      %s23 = ssub.s32 128, 128
      %24 = vsyncadd [#allocation3], %s23
      %s26 = sshll.u32 %s3, 4
      %s27 = int_to_ptr.vmem [resolvable:$true] %s26
      %29 = dma.vmem_to_smem %s27, 128, [#allocation2], [#allocation3]
    $region17: #{img_segmentor_forward.1} parent=1 // pred_fallthru
      _
    // Predicated region
    $region18: #{img_segmentor_forward.1} parent=1 // pred_check
      _
    $region19: #{img_segmentor_forward.1} parent=1 // pred_check_branch
      %31 = sbr.rel (0) target = $region21
    $region20: #{img_segmentor_forward.1} parent=1 // pred_region
      %s33 = ssub.s32 16, 16
      %34 = vsyncadd [#allocation5], %s33
      %s36 = sshll.u32 %s4, 4
      %s37 = int_to_ptr.vmem [resolvable:$true] %s36
      %39 = dma.vmem_to_smem %s37, 16, [#allocation4], [#allocation5]
    $region21: #{img_segmentor_forward.1} parent=1 // pred_fallthru
      _
    // Predicated region
    $region22: #{img_segmentor_forward.1} parent=1 // pred_check
      _
    $region23: #{img_segmentor_forward.1} parent=1 // pred_check_branch
      %41 = sbr.rel (0) target = $region25
    $region24: #{img_segmentor_forward.1} parent=1 // pred_region
      %42 = dma.done [#allocation3], 128
    $region25: #{img_segmentor_forward.1} parent=1 // pred_fallthru
      _
    // Predicated region
    $region26: #{img_segmentor_forward.1} parent=1 // pred_check
      _
    $region27: #{img_segmentor_forward.1} parent=1 // pred_check_branch
      %44 = sbr.rel (0) target = $region29
    $region28: #{img_segmentor_forward.1} parent=1 // pred_region
      %45 = dma.done [#allocation5], 16
    $region29: #{img_segmentor_forward.1} parent=1 // pred_fallthru
      _
    %46 = sfence
    %s47 = sld [smem:[#allocation4]]
    %v48 = vstv %s47
    %v49 = vadd.f32 %v48, 0.0
    %s50 = sld [smem:[#allocation4 + $0x1]]
    %v51 = vstv %s50
    %v52 = vadd.f32 %v51, 0.0
    %s53 = sld [smem:[#allocation4 + $0x2]]
    %v54 = vstv %s53
    %v55 = vadd.f32 %v54, 0.0
    %s56 = sld [smem:[#allocation4 + $0x3]]
    %v57 = vstv %s56
    %v58 = vadd.f32 %v57, 0.0
    %s59 = sld [smem:[#allocation4 + $0x4]]
    %v60 = vstv %s59
    %v61 = vadd.f32 %v60, 0.0
    %s62 = sld [smem:[#allocation4 + $0x5]]
    %v63 = vstv %s62
    %v64 = vadd.f32 %v63, 0.0
    %s65 = sld [smem:[#allocation4 + $0x6]]
    %v66 = vstv %s65
    %v67 = vadd.f32 %v66, 0.0
    %s68 = sld [smem:[#allocation4 + $0x7]]
    %v69 = vstv %s68
    %v70 = vadd.f32 %v69, 0.0
    %v71 = vld [vmem:[%s1] sm:$0xff]
    %v72 = vld [vmem:[%s2] sm:$0xff]
    %v73 = vld [vmem:[%s0] sm:$0xff]
    %v74 = vmul.f32 %v73, %v71
    %v75 = vmul.f32 %v73, %v72
    %v77 = vcombine.high %v75, %v75
    %78 = vrot.lane.b32.xlu0 %v75, 17
    %v79 = vpop.permute.xlu0 %78
    %80 = vrot.lane.b32.xlu0 %v77, 17
    %v81 = vpop.permute.xlu0 %80
    %vm82 = vcmask 138240
    %v83 = vsel %vm82, %v79, %v81
    %v86 = vsel %vm82, 0.0, %v79
    %s87 = sld [smem:[#allocation2]]
    %v88 = vstv %s87
    %v89 = vmul.f32 %v88, %v86
    %v90 = vmul.f32 %v88, %v83
    %v91 = vadd.f32 %v49, %v89
    %v92 = vadd.f32 %v49, %v90
    %s93 = sld [smem:[#allocation2 + $0x80]]
    %v94 = vstv %s93
    %v95 = vmul.f32 %v94, %v86
    %v96 = vmul.f32 %v94, %v83
    %v97 = vadd.f32 %v52, %v95
    %v98 = vadd.f32 %v52, %v96
    %s99 = sld [smem:[#allocation2 + $0x100]]
    %v100 = vstv %s99
    %v101 = vmul.f32 %v100, %v86
    %v102 = vmul.f32 %v100, %v83
    %v103 = vadd.f32 %v55, %v101
    %v104 = vadd.f32 %v55, %v102
    %s105 = sld [smem:[#allocation2 + $0x180]]
    %v106 = vstv %s105
    %v107 = vmul.f32 %v106, %v86
    %v108 = vmul.f32 %v106, %v83
    %v109 = vadd.f32 %v58, %v107
    %v110 = vadd.f32 %v58, %v108
    %s111 = sld [smem:[#allocation2 + $0x200]]
    %v112 = vstv %s111
    %v113 = vmul.f32 %v112, %v86
    %v114 = vmul.f32 %v112, %v83
    %v115 = vadd.f32 %v61, %v113
    %v116 = vadd.f32 %v61, %v114
    %s117 = sld [smem:[#allocation2 + $0x280]]
    %v118 = vstv %s117
    %v119 = vmul.f32 %v118, %v86
    %v120 = vmul.f32 %v118, %v83
    %v121 = vadd.f32 %v64, %v119
    %v122 = vadd.f32 %v64, %v120
    %s123 = sld [smem:[#allocation2 + $0x300]]
    %v124 = vstv %s123
    %v125 = vmul.f32 %v124, %v86
    %v126 = vmul.f32 %v124, %v83
    %v127 = vadd.f32 %v67, %v125
    %v128 = vadd.f32 %v67, %v126
    %s129 = sld [smem:[#allocation2 + $0x380]]
    %v130 = vstv %s129
    %v131 = vmul.f32 %v130, %v86
    %v132 = vmul.f32 %v130, %v83
    %v133 = vadd.f32 %v70, %v131
    %v134 = vadd.f32 %v70, %v132
    %v136 = vcombine.high %v73, %v73
    %137 = vrot.lane.b32.xlu0 %v73, 16
    %v138 = vpop.permute.xlu0 %137
    %139 = vrot.lane.b32.xlu0 %v136, 16
    %v140 = vpop.permute.xlu0 %139
    %vm141 = vcmask 130048
    %v142 = vsel %vm141, %v138, %v140
    %v145 = vsel %vm141, 0.0, %v138
    %s146 = sld [smem:[#allocation2 + $0x3]]
    %v147 = vstv %s146
    %v148 = vmul.f32 %v147, %v145
    %v149 = vmul.f32 %v147, %v142
    %v150 = vadd.f32 %v91, %v148
    %v151 = vadd.f32 %v92, %v149
    %s152 = sld [smem:[#allocation2 + $0x83]]
    %v153 = vstv %s152
    %v154 = vmul.f32 %v153, %v145
    %v155 = vmul.f32 %v153, %v142
    %v156 = vadd.f32 %v97, %v154
    %v157 = vadd.f32 %v98, %v155
    %s158 = sld [smem:[#allocation2 + $0x103]]
    %v159 = vstv %s158
    %v160 = vmul.f32 %v159, %v145
    %v161 = vmul.f32 %v159, %v142
    %v162 = vadd.f32 %v103, %v160
    %v163 = vadd.f32 %v104, %v161
    %s164 = sld [smem:[#allocation2 + $0x183]]
    %v165 = vstv %s164
    %v166 = vmul.f32 %v165, %v145
    %v167 = vmul.f32 %v165, %v142
    %v168 = vadd.f32 %v109, %v166
    %v169 = vadd.f32 %v110, %v167
    %s170 = sld [smem:[#allocation2 + $0x203]]
    %v171 = vstv %s170
    %v172 = vmul.f32 %v171, %v145
    %v173 = vmul.f32 %v171, %v142
    %v174 = vadd.f32 %v115, %v172
    %v175 = vadd.f32 %v116, %v173
    %s176 = sld [smem:[#allocation2 + $0x283]]
    %v177 = vstv %s176
    %v178 = vmul.f32 %v177, %v145
    %v179 = vmul.f32 %v177, %v142
    %v180 = vadd.f32 %v121, %v178
    %v181 = vadd.f32 %v122, %v179
    %s182 = sld [smem:[#allocation2 + $0x303]]
    %v183 = vstv %s182
    %v184 = vmul.f32 %v183, %v145
    %v185 = vmul.f32 %v183, %v142
    %v186 = vadd.f32 %v127, %v184
    %v187 = vadd.f32 %v128, %v185
    %s188 = sld [smem:[#allocation2 + $0x383]]
    %v189 = vstv %s188
    %v190 = vmul.f32 %v189, %v145
    %v191 = vmul.f32 %v189, %v142
    %v192 = vadd.f32 %v133, %v190
    %v193 = vadd.f32 %v134, %v191
    %v195 = vcombine.high %v74, %v74
    %196 = vrot.lane.b32.xlu0 %v74, 15
    %v197 = vpop.permute.xlu0 %196
    %198 = vrot.lane.b32.xlu0 %v195, 15
    %v199 = vpop.permute.xlu0 %198
    %vm200 = vcmask 121856
    %v201 = vsel %vm200, %v197, %v199
    %v204 = vsel %vm200, 0.0, %v197
    %s205 = sld [smem:[#allocation2 + $0x6]]
    %v206 = vstv %s205
    %v207 = vmul.f32 %v206, %v204
    %v208 = vmul.f32 %v206, %v201
    %v209 = vadd.f32 %v150, %v207
    %v210 = vadd.f32 %v151, %v208
    %s211 = sld [smem:[#allocation2 + $0x86]]
    %v212 = vstv %s211
    %v213 = vmul.f32 %v212, %v204
    %v214 = vmul.f32 %v212, %v201
    %v215 = vadd.f32 %v156, %v213
    %v216 = vadd.f32 %v157, %v214
    %s217 = sld [smem:[#allocation2 + $0x106]]
    %v218 = vstv %s217
    %v219 = vmul.f32 %v218, %v204
    %v220 = vmul.f32 %v218, %v201
    %v221 = vadd.f32 %v162, %v219
    %v222 = vadd.f32 %v163, %v220
    %s223 = sld [smem:[#allocation2 + $0x186]]
    %v224 = vstv %s223
    %v225 = vmul.f32 %v224, %v204
    %v226 = vmul.f32 %v224, %v201
    %v227 = vadd.f32 %v168, %v225
    %v228 = vadd.f32 %v169, %v226
    %s229 = sld [smem:[#allocation2 + $0x206]]
    %v230 = vstv %s229
    %v231 = vmul.f32 %v230, %v204
    %v232 = vmul.f32 %v230, %v201
    %v233 = vadd.f32 %v174, %v231
    %v234 = vadd.f32 %v175, %v232
    %s235 = sld [smem:[#allocation2 + $0x286]]
    %v236 = vstv %s235
    %v237 = vmul.f32 %v236, %v204
    %v238 = vmul.f32 %v236, %v201
    %v239 = vadd.f32 %v180, %v237
    %v240 = vadd.f32 %v181, %v238
    %s241 = sld [smem:[#allocation2 + $0x306]]
    %v242 = vstv %s241
    %v243 = vmul.f32 %v242, %v204
    %v244 = vmul.f32 %v242, %v201
    %v245 = vadd.f32 %v186, %v243
    %v246 = vadd.f32 %v187, %v244
    %s247 = sld [smem:[#allocation2 + $0x386]]
    %v248 = vstv %s247
    %v249 = vmul.f32 %v248, %v204
    %v250 = vmul.f32 %v248, %v201
    %v251 = vadd.f32 %v192, %v249
    %v252 = vadd.f32 %v193, %v250
    %253 = vrot.lane.b32.xlu0 %v75, 1
    %v254 = vpop.permute.xlu0 %253
    %255 = vrot.lane.b32.xlu0 %v77, 1
    %v256 = vpop.permute.xlu0 %255
    %vm257 = vcmask 7168
    %v258 = vsel %vm257, %v254, %v256
    %v261 = vsel %vm257, 0.0, %v254
    %s262 = sld [smem:[#allocation2 + $0x9]]
    %v263 = vstv %s262
    %v264 = vmul.f32 %v263, %v261
    %v265 = vmul.f32 %v263, %v258
    %v266 = vadd.f32 %v209, %v264
    %v267 = vadd.f32 %v210, %v265
    %s268 = sld [smem:[#allocation2 + $0x89]]
    %v269 = vstv %s268
    %v270 = vmul.f32 %v269, %v261
    %v271 = vmul.f32 %v269, %v258
    %v272 = vadd.f32 %v215, %v270
    %v273 = vadd.f32 %v216, %v271
    %s274 = sld [smem:[#allocation2 + $0x109]]
    %v275 = vstv %s274
    %v276 = vmul.f32 %v275, %v261
    %v277 = vmul.f32 %v275, %v258
    %v278 = vadd.f32 %v221, %v276
    %v279 = vadd.f32 %v222, %v277
    %s280 = sld [smem:[#allocation2 + $0x189]]
    %v281 = vstv %s280
    %v282 = vmul.f32 %v281, %v261
    %v283 = vmul.f32 %v281, %v258
    %v284 = vadd.f32 %v227, %v282
    %v285 = vadd.f32 %v228, %v283
    %s286 = sld [smem:[#allocation2 + $0x209]]
    %v287 = vstv %s286
    %v288 = vmul.f32 %v287, %v261
    %v289 = vmul.f32 %v287, %v258
    %v290 = vadd.f32 %v233, %v288
    %v291 = vadd.f32 %v234, %v289
    %s292 = sld [smem:[#allocation2 + $0x289]]
    %v293 = vstv %s292
    %v294 = vmul.f32 %v293, %v261
    %v295 = vmul.f32 %v293, %v258
    %v296 = vadd.f32 %v239, %v294
    %v297 = vadd.f32 %v240, %v295
    %s298 = sld [smem:[#allocation2 + $0x309]]
    %v299 = vstv %s298
    %v300 = vmul.f32 %v299, %v261
    %v301 = vmul.f32 %v299, %v258
    %v302 = vadd.f32 %v245, %v300
    %v303 = vadd.f32 %v246, %v301
    %s304 = sld [smem:[#allocation2 + $0x389]]
    %v305 = vstv %s304
    %v306 = vmul.f32 %v305, %v261
    %v307 = vmul.f32 %v305, %v258
    %v308 = vadd.f32 %v251, %v306
    %v309 = vadd.f32 %v252, %v307
    %s310 = sld [smem:[#allocation2 + $0xc]]
    %v311 = vstv %s310
    %v312 = vmul.f32 %v311, %v73
    %v314 = vcombine.high %v312, %v312
    %v316 = vadd.f32 %v266, %v312
    %v317 = vadd.f32 %v267, %v314
    %s318 = sld [smem:[#allocation2 + $0x8c]]
    %v319 = vstv %s318
    %v320 = vmul.f32 %v319, %v73
    %v322 = vcombine.high %v320, %v320
    %v324 = vadd.f32 %v272, %v320
    %v325 = vadd.f32 %v273, %v322
    %s326 = sld [smem:[#allocation2 + $0x10c]]
    %v327 = vstv %s326
    %v328 = vmul.f32 %v327, %v73
    %v330 = vcombine.high %v328, %v328
    %v332 = vadd.f32 %v278, %v328
    %v333 = vadd.f32 %v279, %v330
    %s334 = sld [smem:[#allocation2 + $0x18c]]
    %v335 = vstv %s334
    %v336 = vmul.f32 %v335, %v73
    %v338 = vcombine.high %v336, %v336
    %v340 = vadd.f32 %v284, %v336
    %v341 = vadd.f32 %v285, %v338
    %s342 = sld [smem:[#allocation2 + $0x20c]]
    %v343 = vstv %s342
    %v344 = vmul.f32 %v343, %v73
    %v346 = vcombine.high %v344, %v344
    %v348 = vadd.f32 %v290, %v344
    %v349 = vadd.f32 %v291, %v346
    %s350 = sld [smem:[#allocation2 + $0x28c]]
    %v351 = vstv %s350
    %v352 = vmul.f32 %v351, %v73
    %v354 = vcombine.high %v352, %v352
    %v356 = vadd.f32 %v296, %v352
    %v357 = vadd.f32 %v297, %v354
    %s358 = sld [smem:[#allocation2 + $0x30c]]
    %v359 = vstv %s358
    %v360 = vmul.f32 %v359, %v73
    %v362 = vcombine.high %v360, %v360
    %v364 = vadd.f32 %v302, %v360
    %v365 = vadd.f32 %v303, %v362
    %s366 = sld [smem:[#allocation2 + $0x38c]]
    %v367 = vstv %s366
    %v368 = vmul.f32 %v367, %v73
    %v370 = vcombine.high %v368, %v368
    %v372 = vadd.f32 %v308, %v368
    %v373 = vadd.f32 %v309, %v370
    %374 = vrot.lane.b32.xlu0 %v74, 127
    %v375 = vpop.permute.xlu0 %374
    %376 = vrot.lane.b32.xlu0 %v195, 127
    %v377 = vpop.permute.xlu0 %376
    %vm378 = vcmask 1039360
    %v379 = vsel %vm378, %v375, %v377
    %v382 = vsel %vm378, %v377, 0.0
    %s383 = sld [smem:[#allocation2 + $0xf]]
    %v384 = vstv %s383
    %v385 = vmul.f32 %v384, %v379
    %v386 = vmul.f32 %v384, %v382
    %v387 = vadd.f32 %v316, %v385
    %v388 = vadd.f32 %v317, %v386
    %s389 = sld [smem:[#allocation2 + $0x8f]]
    %v390 = vstv %s389
    %v391 = vmul.f32 %v390, %v379
    %v392 = vmul.f32 %v390, %v382
    %v393 = vadd.f32 %v324, %v391
    %v394 = vadd.f32 %v325, %v392
    %s395 = sld [smem:[#allocation2 + $0x10f]]
    %v396 = vstv %s395
    %v397 = vmul.f32 %v396, %v379
    %v398 = vmul.f32 %v396, %v382
    %v399 = vadd.f32 %v332, %v397
    %v400 = vadd.f32 %v333, %v398
    %s401 = sld [smem:[#allocation2 + $0x18f]]
    %v402 = vstv %s401
    %v403 = vmul.f32 %v402, %v379
    %v404 = vmul.f32 %v402, %v382
    %v405 = vadd.f32 %v340, %v403
    %v406 = vadd.f32 %v341, %v404
    %s407 = sld [smem:[#allocation2 + $0x20f]]
    %v408 = vstv %s407
    %v409 = vmul.f32 %v408, %v379
    %v410 = vmul.f32 %v408, %v382
    %v411 = vadd.f32 %v348, %v409
    %v412 = vadd.f32 %v349, %v410
    %s413 = sld [smem:[#allocation2 + $0x28f]]
    %v414 = vstv %s413
    %v415 = vmul.f32 %v414, %v379
    %v416 = vmul.f32 %v414, %v382
    %v417 = vadd.f32 %v356, %v415
    %v418 = vadd.f32 %v357, %v416
    %s419 = sld [smem:[#allocation2 + $0x30f]]
    %v420 = vstv %s419
    %v421 = vmul.f32 %v420, %v379
    %v422 = vmul.f32 %v420, %v382
    %v423 = vadd.f32 %v364, %v421
    %v424 = vadd.f32 %v365, %v422
    %s425 = sld [smem:[#allocation2 + $0x38f]]
    %v426 = vstv %s425
    %v427 = vmul.f32 %v426, %v379
    %v428 = vmul.f32 %v426, %v382
    %v429 = vadd.f32 %v372, %v427
    %v430 = vadd.f32 %v373, %v428
    %431 = vrot.lane.b32.xlu0 %v75, 113
    %v432 = vpop.permute.xlu0 %431
    %433 = vrot.lane.b32.xlu0 %v77, 113
    %v434 = vpop.permute.xlu0 %433
    %vm435 = vcmask 924672
    %v436 = vsel %vm435, %v432, %v434
    %v439 = vsel %vm435, %v434, 0.0
    %s440 = sld [smem:[#allocation2 + $0x12]]
    %v441 = vstv %s440
    %v442 = vmul.f32 %v441, %v436
    %v443 = vmul.f32 %v441, %v439
    %v444 = vadd.f32 %v387, %v442
    %v445 = vadd.f32 %v388, %v443
    %s446 = sld [smem:[#allocation2 + $0x92]]
    %v447 = vstv %s446
    %v448 = vmul.f32 %v447, %v436
    %v449 = vmul.f32 %v447, %v439
    %v450 = vadd.f32 %v393, %v448
    %v451 = vadd.f32 %v394, %v449
    %s452 = sld [smem:[#allocation2 + $0x112]]
    %v453 = vstv %s452
    %v454 = vmul.f32 %v453, %v436
    %v455 = vmul.f32 %v453, %v439
    %v456 = vadd.f32 %v399, %v454
    %v457 = vadd.f32 %v400, %v455
    %s458 = sld [smem:[#allocation2 + $0x192]]
    %v459 = vstv %s458
    %v460 = vmul.f32 %v459, %v436
    %v461 = vmul.f32 %v459, %v439
    %v462 = vadd.f32 %v405, %v460
    %v463 = vadd.f32 %v406, %v461
    %s464 = sld [smem:[#allocation2 + $0x212]]
    %v465 = vstv %s464
    %v466 = vmul.f32 %v465, %v436
    %v467 = vmul.f32 %v465, %v439
    %v468 = vadd.f32 %v411, %v466
    %v469 = vadd.f32 %v412, %v467
    %s470 = sld [smem:[#allocation2 + $0x292]]
    %v471 = vstv %s470
    %v472 = vmul.f32 %v471, %v436
    %v473 = vmul.f32 %v471, %v439
    %v474 = vadd.f32 %v417, %v472
    %v475 = vadd.f32 %v418, %v473
    %s476 = sld [smem:[#allocation2 + $0x312]]
    %v477 = vstv %s476
    %v478 = vmul.f32 %v477, %v436
    %v479 = vmul.f32 %v477, %v439
    %v480 = vadd.f32 %v423, %v478
    %v481 = vadd.f32 %v424, %v479
    %s482 = sld [smem:[#allocation2 + $0x392]]
    %v483 = vstv %s482
    %v484 = vmul.f32 %v483, %v436
    %v485 = vmul.f32 %v483, %v439
    %v486 = vadd.f32 %v429, %v484
    %v487 = vadd.f32 %v430, %v485
    %488 = vrot.lane.b32.xlu0 %v73, 112
    %v489 = vpop.permute.xlu0 %488
    %490 = vrot.lane.b32.xlu0 %v136, 112
    %v491 = vpop.permute.xlu0 %490
    %vm492 = vcmask 916480
    %v493 = vsel %vm492, %v489, %v491
    %v496 = vsel %vm492, %v491, 0.0
    %s497 = sld [smem:[#allocation2 + $0x15]]
    %v498 = vstv %s497
    %v499 = vmul.f32 %v498, %v493
    %v500 = vmul.f32 %v498, %v496
    %v501 = vadd.f32 %v444, %v499
    %v502 = vadd.f32 %v445, %v500
    %s503 = sld [smem:[#allocation2 + $0x95]]
    %v504 = vstv %s503
    %v505 = vmul.f32 %v504, %v493
    %v506 = vmul.f32 %v504, %v496
    %v507 = vadd.f32 %v450, %v505
    %v508 = vadd.f32 %v451, %v506
    %s509 = sld [smem:[#allocation2 + $0x115]]
    %v510 = vstv %s509
    %v511 = vmul.f32 %v510, %v493
    %v512 = vmul.f32 %v510, %v496
    %v513 = vadd.f32 %v456, %v511
    %v514 = vadd.f32 %v457, %v512
    %s515 = sld [smem:[#allocation2 + $0x195]]
    %v516 = vstv %s515
    %v517 = vmul.f32 %v516, %v493
    %v518 = vmul.f32 %v516, %v496
    %v519 = vadd.f32 %v462, %v517
    %v520 = vadd.f32 %v463, %v518
    %s521 = sld [smem:[#allocation2 + $0x215]]
    %v522 = vstv %s521
    %v523 = vmul.f32 %v522, %v493
    %v524 = vmul.f32 %v522, %v496
    %v525 = vadd.f32 %v468, %v523
    %v526 = vadd.f32 %v469, %v524
    %s527 = sld [smem:[#allocation2 + $0x295]]
    %v528 = vstv %s527
    %v529 = vmul.f32 %v528, %v493
    %v530 = vmul.f32 %v528, %v496
    %v531 = vadd.f32 %v474, %v529
    %v532 = vadd.f32 %v475, %v530
    %s533 = sld [smem:[#allocation2 + $0x315]]
    %v534 = vstv %s533
    %v535 = vmul.f32 %v534, %v493
    %v536 = vmul.f32 %v534, %v496
    %v537 = vadd.f32 %v480, %v535
    %v538 = vadd.f32 %v481, %v536
    %s539 = sld [smem:[#allocation2 + $0x395]]
    %v540 = vstv %s539
    %v541 = vmul.f32 %v540, %v493
    %v542 = vmul.f32 %v540, %v496
    %v543 = vadd.f32 %v486, %v541
    %v544 = vadd.f32 %v487, %v542
    %545 = vrot.lane.b32.xlu0 %v74, 111
    %v546 = vpop.permute.xlu0 %545
    %547 = vrot.lane.b32.xlu0 %v195, 111
    %v548 = vpop.permute.xlu0 %547
    %vm549 = vcmask 908288
    %v550 = vsel %vm549, %v546, %v548
    %v553 = vsel %vm549, %v548, 0.0
    %s554 = sld [smem:[#allocation2 + $0x18]]
    %v555 = vstv %s554
    %v556 = vmul.f32 %v555, %v550
    %v557 = vmul.f32 %v555, %v553
    %v558 = vadd.f32 %v501, %v556
    %v559 = vadd.f32 %v502, %v557
    %s560 = sld [smem:[#allocation2 + $0x98]]
    %v561 = vstv %s560
    %v562 = vmul.f32 %v561, %v550
    %v563 = vmul.f32 %v561, %v553
    %v564 = vadd.f32 %v507, %v562
    %v565 = vadd.f32 %v508, %v563
    %s566 = sld [smem:[#allocation2 + $0x118]]
    %v567 = vstv %s566
    %v568 = vmul.f32 %v567, %v550
    %v569 = vmul.f32 %v567, %v553
    %v570 = vadd.f32 %v513, %v568
    %v571 = vadd.f32 %v514, %v569
    %s572 = sld [smem:[#allocation2 + $0x198]]
    %v573 = vstv %s572
    %v574 = vmul.f32 %v573, %v550
    %v575 = vmul.f32 %v573, %v553
    %v576 = vadd.f32 %v519, %v574
    %v577 = vadd.f32 %v520, %v575
    %s578 = sld [smem:[#allocation2 + $0x218]]
    %v579 = vstv %s578
    %v580 = vmul.f32 %v579, %v550
    %v581 = vmul.f32 %v579, %v553
    %v582 = vadd.f32 %v525, %v580
    %v583 = vadd.f32 %v526, %v581
    %s584 = sld [smem:[#allocation2 + $0x298]]
    %v585 = vstv %s584
    %v586 = vmul.f32 %v585, %v550
    %v587 = vmul.f32 %v585, %v553
    %v588 = vadd.f32 %v531, %v586
    %v589 = vadd.f32 %v532, %v587
    %s590 = sld [smem:[#allocation2 + $0x318]]
    %v591 = vstv %s590
    %v592 = vmul.f32 %v591, %v550
    %v593 = vmul.f32 %v591, %v553
    %v594 = vadd.f32 %v537, %v592
    %v595 = vadd.f32 %v538, %v593
    %s596 = sld [smem:[#allocation2 + $0x398]]
    %v597 = vstv %s596
    %v598 = vmul.f32 %v597, %v550
    %v599 = vmul.f32 %v597, %v553
    %v600 = vadd.f32 %v543, %v598
    %v601 = vadd.f32 %v544, %v599
    %v602 = vld [vmem:[%s0 + $0x8] sm:$0xff]
    %v603 = vmul.f32 %v602, %v71
    %v604 = vmul.f32 %v602, %v72
    %v606 = vcombine.high %v604, %v604
    %607 = vrot.lane.b32.xlu0 %v604, 17
    %v608 = vpop.permute.xlu0 %607
    %609 = vrot.lane.b32.xlu0 %v606, 17
    %v610 = vpop.permute.xlu0 %609
    %v611 = vsel %vm82, %v608, %v610
    %v614 = vsel %vm82, 0.0, %v608
    %s615 = sld [smem:[#allocation2 + $0x1]]
    %v616 = vstv %s615
    %v617 = vmul.f32 %v616, %v614
    %v618 = vmul.f32 %v616, %v611
    %v619 = vadd.f32 %v558, %v617
    %v620 = vadd.f32 %v559, %v618
    %s621 = sld [smem:[#allocation2 + $0x81]]
    %v622 = vstv %s621
    %v623 = vmul.f32 %v622, %v614
    %v624 = vmul.f32 %v622, %v611
    %v625 = vadd.f32 %v564, %v623
    %v626 = vadd.f32 %v565, %v624
    %s627 = sld [smem:[#allocation2 + $0x101]]
    %v628 = vstv %s627
    %v629 = vmul.f32 %v628, %v614
    %v630 = vmul.f32 %v628, %v611
    %v631 = vadd.f32 %v570, %v629
    %v632 = vadd.f32 %v571, %v630
    %s633 = sld [smem:[#allocation2 + $0x181]]
    %v634 = vstv %s633
    %v635 = vmul.f32 %v634, %v614
    %v636 = vmul.f32 %v634, %v611
    %v637 = vadd.f32 %v576, %v635
    %v638 = vadd.f32 %v577, %v636
    %s639 = sld [smem:[#allocation2 + $0x201]]
    %v640 = vstv %s639
    %v641 = vmul.f32 %v640, %v614
    %v642 = vmul.f32 %v640, %v611
    %v643 = vadd.f32 %v582, %v641
    %v644 = vadd.f32 %v583, %v642
    %s645 = sld [smem:[#allocation2 + $0x281]]
    %v646 = vstv %s645
    %v647 = vmul.f32 %v646, %v614
    %v648 = vmul.f32 %v646, %v611
    %v649 = vadd.f32 %v588, %v647
    %v650 = vadd.f32 %v589, %v648
    %s651 = sld [smem:[#allocation2 + $0x301]]
    %v652 = vstv %s651
    %v653 = vmul.f32 %v652, %v614
    %v654 = vmul.f32 %v652, %v611
    %v655 = vadd.f32 %v594, %v653
    %v656 = vadd.f32 %v595, %v654
    %s657 = sld [smem:[#allocation2 + $0x381]]
    %v658 = vstv %s657
    %v659 = vmul.f32 %v658, %v614
    %v660 = vmul.f32 %v658, %v611
    %v661 = vadd.f32 %v600, %v659
    %v662 = vadd.f32 %v601, %v660
    %v664 = vcombine.high %v602, %v602
    %665 = vrot.lane.b32.xlu0 %v602, 16
    %v666 = vpop.permute.xlu0 %665
    %667 = vrot.lane.b32.xlu0 %v664, 16
    %v668 = vpop.permute.xlu0 %667
    %v669 = vsel %vm141, %v666, %v668
    %v672 = vsel %vm141, 0.0, %v666
    %s673 = sld [smem:[#allocation2 + $0x4]]
    %v674 = vstv %s673
    %v675 = vmul.f32 %v674, %v672
    %v676 = vmul.f32 %v674, %v669
    %v677 = vadd.f32 %v619, %v675
    %v678 = vadd.f32 %v620, %v676
    %s679 = sld [smem:[#allocation2 + $0x84]]
    %v680 = vstv %s679
    %v681 = vmul.f32 %v680, %v672
    %v682 = vmul.f32 %v680, %v669
    %v683 = vadd.f32 %v625, %v681
    %v684 = vadd.f32 %v626, %v682
    %s685 = sld [smem:[#allocation2 + $0x104]]
    %v686 = vstv %s685
    %v687 = vmul.f32 %v686, %v672
    %v688 = vmul.f32 %v686, %v669
    %v689 = vadd.f32 %v631, %v687
    %v690 = vadd.f32 %v632, %v688
    %s691 = sld [smem:[#allocation2 + $0x184]]
    %v692 = vstv %s691
    %v693 = vmul.f32 %v692, %v672
    %v694 = vmul.f32 %v692, %v669
    %v695 = vadd.f32 %v637, %v693
    %v696 = vadd.f32 %v638, %v694
    %s697 = sld [smem:[#allocation2 + $0x204]]
    %v698 = vstv %s697
    %v699 = vmul.f32 %v698, %v672
    %v700 = vmul.f32 %v698, %v669
    %v701 = vadd.f32 %v643, %v699
    %v702 = vadd.f32 %v644, %v700
    %s703 = sld [smem:[#allocation2 + $0x284]]
    %v704 = vstv %s703
    %v705 = vmul.f32 %v704, %v672
    %v706 = vmul.f32 %v704, %v669
    %v707 = vadd.f32 %v649, %v705
    %v708 = vadd.f32 %v650, %v706
    %s709 = sld [smem:[#allocation2 + $0x304]]
    %v710 = vstv %s709
    %v711 = vmul.f32 %v710, %v672
    %v712 = vmul.f32 %v710, %v669
    %v713 = vadd.f32 %v655, %v711
    %v714 = vadd.f32 %v656, %v712
    %s715 = sld [smem:[#allocation2 + $0x384]]
    %v716 = vstv %s715
    %v717 = vmul.f32 %v716, %v672
    %v718 = vmul.f32 %v716, %v669
    %v719 = vadd.f32 %v661, %v717
    %v720 = vadd.f32 %v662, %v718
    %v722 = vcombine.high %v603, %v603
    %723 = vrot.lane.b32.xlu0 %v603, 15
    %v724 = vpop.permute.xlu0 %723
    %725 = vrot.lane.b32.xlu0 %v722, 15
    %v726 = vpop.permute.xlu0 %725
    %v727 = vsel %vm200, %v724, %v726
    %v730 = vsel %vm200, 0.0, %v724
    %s731 = sld [smem:[#allocation2 + $0x7]]
    %v732 = vstv %s731
    %v733 = vmul.f32 %v732, %v730
    %v734 = vmul.f32 %v732, %v727
    %v735 = vadd.f32 %v677, %v733
    %v736 = vadd.f32 %v678, %v734
    %s737 = sld [smem:[#allocation2 + $0x87]]
    %v738 = vstv %s737
    %v739 = vmul.f32 %v738, %v730
    %v740 = vmul.f32 %v738, %v727
    %v741 = vadd.f32 %v683, %v739
    %v742 = vadd.f32 %v684, %v740
    %s743 = sld [smem:[#allocation2 + $0x107]]
    %v744 = vstv %s743
    %v745 = vmul.f32 %v744, %v730
    %v746 = vmul.f32 %v744, %v727
    %v747 = vadd.f32 %v689, %v745
    %v748 = vadd.f32 %v690, %v746
    %s749 = sld [smem:[#allocation2 + $0x187]]
    %v750 = vstv %s749
    %v751 = vmul.f32 %v750, %v730
    %v752 = vmul.f32 %v750, %v727
    %v753 = vadd.f32 %v695, %v751
    %v754 = vadd.f32 %v696, %v752
    %s755 = sld [smem:[#allocation2 + $0x207]]
    %v756 = vstv %s755
    %v757 = vmul.f32 %v756, %v730
    %v758 = vmul.f32 %v756, %v727
    %v759 = vadd.f32 %v701, %v757
    %v760 = vadd.f32 %v702, %v758
    %s761 = sld [smem:[#allocation2 + $0x287]]
    %v762 = vstv %s761
    %v763 = vmul.f32 %v762, %v730
    %v764 = vmul.f32 %v762, %v727
    %v765 = vadd.f32 %v707, %v763
    %v766 = vadd.f32 %v708, %v764
    %s767 = sld [smem:[#allocation2 + $0x307]]
    %v768 = vstv %s767
    %v769 = vmul.f32 %v768, %v730
    %v770 = vmul.f32 %v768, %v727
    %v771 = vadd.f32 %v713, %v769
    %v772 = vadd.f32 %v714, %v770
    %s773 = sld [smem:[#allocation2 + $0x387]]
    %v774 = vstv %s773
    %v775 = vmul.f32 %v774, %v730
    %v776 = vmul.f32 %v774, %v727
    %v777 = vadd.f32 %v719, %v775
    %v778 = vadd.f32 %v720, %v776
    %779 = vrot.lane.b32.xlu0 %v604, 1
    %v780 = vpop.permute.xlu0 %779
    %781 = vrot.lane.b32.xlu0 %v606, 1
    %v782 = vpop.permute.xlu0 %781
    %v783 = vsel %vm257, %v780, %v782
    %v786 = vsel %vm257, 0.0, %v780
    %s787 = sld [smem:[#allocation2 + $0xa]]
    %v788 = vstv %s787
    %v789 = vmul.f32 %v788, %v786
    %v790 = vmul.f32 %v788, %v783
    %v791 = vadd.f32 %v735, %v789
    %v792 = vadd.f32 %v736, %v790
    %s793 = sld [smem:[#allocation2 + $0x8a]]
    %v794 = vstv %s793
    %v795 = vmul.f32 %v794, %v786
    %v796 = vmul.f32 %v794, %v783
    %v797 = vadd.f32 %v741, %v795
    %v798 = vadd.f32 %v742, %v796
    %s799 = sld [smem:[#allocation2 + $0x10a]]
    %v800 = vstv %s799
    %v801 = vmul.f32 %v800, %v786
    %v802 = vmul.f32 %v800, %v783
    %v803 = vadd.f32 %v747, %v801
    %v804 = vadd.f32 %v748, %v802
    %s805 = sld [smem:[#allocation2 + $0x18a]]
    %v806 = vstv %s805
    %v807 = vmul.f32 %v806, %v786
    %v808 = vmul.f32 %v806, %v783
    %v809 = vadd.f32 %v753, %v807
    %v810 = vadd.f32 %v754, %v808
    %s811 = sld [smem:[#allocation2 + $0x20a]]
    %v812 = vstv %s811
    %v813 = vmul.f32 %v812, %v786
    %v814 = vmul.f32 %v812, %v783
    %v815 = vadd.f32 %v759, %v813
    %v816 = vadd.f32 %v760, %v814
    %s817 = sld [smem:[#allocation2 + $0x28a]]
    %v818 = vstv %s817
    %v819 = vmul.f32 %v818, %v786
    %v820 = vmul.f32 %v818, %v783
    %v821 = vadd.f32 %v765, %v819
    %v822 = vadd.f32 %v766, %v820
    %s823 = sld [smem:[#allocation2 + $0x30a]]
    %v824 = vstv %s823
    %v825 = vmul.f32 %v824, %v786
    %v826 = vmul.f32 %v824, %v783
    %v827 = vadd.f32 %v771, %v825
    %v828 = vadd.f32 %v772, %v826
    %s829 = sld [smem:[#allocation2 + $0x38a]]
    %v830 = vstv %s829
    %v831 = vmul.f32 %v830, %v786
    %v832 = vmul.f32 %v830, %v783
    %v833 = vadd.f32 %v777, %v831
    %v834 = vadd.f32 %v778, %v832
    %s835 = sld [smem:[#allocation2 + $0xd]]
    %v836 = vstv %s835
    %v837 = vmul.f32 %v836, %v602
    %v839 = vcombine.high %v837, %v837
    %v841 = vadd.f32 %v791, %v837
    %v842 = vadd.f32 %v792, %v839
    %s843 = sld [smem:[#allocation2 + $0x8d]]
    %v844 = vstv %s843
    %v845 = vmul.f32 %v844, %v602
    %v847 = vcombine.high %v845, %v845
    %v849 = vadd.f32 %v797, %v845
    %v850 = vadd.f32 %v798, %v847
    %s851 = sld [smem:[#allocation2 + $0x10d]]
    %v852 = vstv %s851
    %v853 = vmul.f32 %v852, %v602
    %v855 = vcombine.high %v853, %v853
    %v857 = vadd.f32 %v803, %v853
    %v858 = vadd.f32 %v804, %v855
    %s859 = sld [smem:[#allocation2 + $0x18d]]
    %v860 = vstv %s859
    %v861 = vmul.f32 %v860, %v602
    %v863 = vcombine.high %v861, %v861
    %v865 = vadd.f32 %v809, %v861
    %v866 = vadd.f32 %v810, %v863
    %s867 = sld [smem:[#allocation2 + $0x20d]]
    %v868 = vstv %s867
    %v869 = vmul.f32 %v868, %v602
    %v871 = vcombine.high %v869, %v869
    %v873 = vadd.f32 %v815, %v869
    %v874 = vadd.f32 %v816, %v871
    %s875 = sld [smem:[#allocation2 + $0x28d]]
    %v876 = vstv %s875
    %v877 = vmul.f32 %v876, %v602
    %v879 = vcombine.high %v877, %v877
    %v881 = vadd.f32 %v821, %v877
    %v882 = vadd.f32 %v822, %v879
    %s883 = sld [smem:[#allocation2 + $0x30d]]
    %v884 = vstv %s883
    %v885 = vmul.f32 %v884, %v602
    %v887 = vcombine.high %v885, %v885
    %v889 = vadd.f32 %v827, %v885
    %v890 = vadd.f32 %v828, %v887
    %s891 = sld [smem:[#allocation2 + $0x38d]]
    %v892 = vstv %s891
    %v893 = vmul.f32 %v892, %v602
    %v895 = vcombine.high %v893, %v893
    %v897 = vadd.f32 %v833, %v893
    %v898 = vadd.f32 %v834, %v895
    %899 = vrot.lane.b32.xlu0 %v603, 127
    %v900 = vpop.permute.xlu0 %899
    %901 = vrot.lane.b32.xlu0 %v722, 127
    %v902 = vpop.permute.xlu0 %901
    %v903 = vsel %vm378, %v900, %v902
    %v906 = vsel %vm378, %v902, 0.0
    %s907 = sld [smem:[#allocation2 + $0x10]]
    %v908 = vstv %s907
    %v909 = vmul.f32 %v908, %v903
    %v910 = vmul.f32 %v908, %v906
    %v911 = vadd.f32 %v841, %v909
    %v912 = vadd.f32 %v842, %v910
    %s913 = sld [smem:[#allocation2 + $0x90]]
    %v914 = vstv %s913
    %v915 = vmul.f32 %v914, %v903
    %v916 = vmul.f32 %v914, %v906
    %v917 = vadd.f32 %v849, %v915
    %v918 = vadd.f32 %v850, %v916
    %s919 = sld [smem:[#allocation2 + $0x110]]
    %v920 = vstv %s919
    %v921 = vmul.f32 %v920, %v903
    %v922 = vmul.f32 %v920, %v906
    %v923 = vadd.f32 %v857, %v921
    %v924 = vadd.f32 %v858, %v922
    %s925 = sld [smem:[#allocation2 + $0x190]]
    %v926 = vstv %s925
    %v927 = vmul.f32 %v926, %v903
    %v928 = vmul.f32 %v926, %v906
    %v929 = vadd.f32 %v865, %v927
    %v930 = vadd.f32 %v866, %v928
    %s931 = sld [smem:[#allocation2 + $0x210]]
    %v932 = vstv %s931
    %v933 = vmul.f32 %v932, %v903
    %v934 = vmul.f32 %v932, %v906
    %v935 = vadd.f32 %v873, %v933
    %v936 = vadd.f32 %v874, %v934
    %s937 = sld [smem:[#allocation2 + $0x290]]
    %v938 = vstv %s937
    %v939 = vmul.f32 %v938, %v903
    %v940 = vmul.f32 %v938, %v906
    %v941 = vadd.f32 %v881, %v939
    %v942 = vadd.f32 %v882, %v940
    %s943 = sld [smem:[#allocation2 + $0x310]]
    %v944 = vstv %s943
    %v945 = vmul.f32 %v944, %v903
    %v946 = vmul.f32 %v944, %v906
    %v947 = vadd.f32 %v889, %v945
    %v948 = vadd.f32 %v890, %v946
    %s949 = sld [smem:[#allocation2 + $0x390]]
    %v950 = vstv %s949
    %v951 = vmul.f32 %v950, %v903
    %v952 = vmul.f32 %v950, %v906
    %v953 = vadd.f32 %v897, %v951
    %v954 = vadd.f32 %v898, %v952
    %955 = vrot.lane.b32.xlu0 %v604, 113
    %v956 = vpop.permute.xlu0 %955
    %957 = vrot.lane.b32.xlu0 %v606, 113
    %v958 = vpop.permute.xlu0 %957
    %v959 = vsel %vm435, %v956, %v958
    %v962 = vsel %vm435, %v958, 0.0
    %s963 = sld [smem:[#allocation2 + $0x13]]
    %v964 = vstv %s963
    %v965 = vmul.f32 %v964, %v959
    %v966 = vmul.f32 %v964, %v962
    %v967 = vadd.f32 %v911, %v965
    %v968 = vadd.f32 %v912, %v966
    %s969 = sld [smem:[#allocation2 + $0x93]]
    %v970 = vstv %s969
    %v971 = vmul.f32 %v970, %v959
    %v972 = vmul.f32 %v970, %v962
    %v973 = vadd.f32 %v917, %v971
    %v974 = vadd.f32 %v918, %v972
    %s975 = sld [smem:[#allocation2 + $0x113]]
    %v976 = vstv %s975
    %v977 = vmul.f32 %v976, %v959
    %v978 = vmul.f32 %v976, %v962
    %v979 = vadd.f32 %v923, %v977
    %v980 = vadd.f32 %v924, %v978
    %s981 = sld [smem:[#allocation2 + $0x193]]
    %v982 = vstv %s981
    %v983 = vmul.f32 %v982, %v959
    %v984 = vmul.f32 %v982, %v962
    %v985 = vadd.f32 %v929, %v983
    %v986 = vadd.f32 %v930, %v984
    %s987 = sld [smem:[#allocation2 + $0x213]]
    %v988 = vstv %s987
    %v989 = vmul.f32 %v988, %v959
    %v990 = vmul.f32 %v988, %v962
    %v991 = vadd.f32 %v935, %v989
    %v992 = vadd.f32 %v936, %v990
    %s993 = sld [smem:[#allocation2 + $0x293]]
    %v994 = vstv %s993
    %v995 = vmul.f32 %v994, %v959
    %v996 = vmul.f32 %v994, %v962
    %v997 = vadd.f32 %v941, %v995
    %v998 = vadd.f32 %v942, %v996
    %s999 = sld [smem:[#allocation2 + $0x313]]
    %v1000 = vstv %s999
    %v1001 = vmul.f32 %v1000, %v959
    %v1002 = vmul.f32 %v1000, %v962
    %v1003 = vadd.f32 %v947, %v1001
    %v1004 = vadd.f32 %v948, %v1002
    %s1005 = sld [smem:[#allocation2 + $0x393]]
    %v1006 = vstv %s1005
    %v1007 = vmul.f32 %v1006, %v959
    %v1008 = vmul.f32 %v1006, %v962
    %v1009 = vadd.f32 %v953, %v1007
    %v1010 = vadd.f32 %v954, %v1008
    %1011 = vrot.lane.b32.xlu0 %v602, 112
    %v1012 = vpop.permute.xlu0 %1011
    %1013 = vrot.lane.b32.xlu0 %v664, 112
    %v1014 = vpop.permute.xlu0 %1013
    %v1015 = vsel %vm492, %v1012, %v1014
    %v1018 = vsel %vm492, %v1014, 0.0
    %s1019 = sld [smem:[#allocation2 + $0x16]]
    %v1020 = vstv %s1019
    %v1021 = vmul.f32 %v1020, %v1015
    %v1022 = vmul.f32 %v1020, %v1018
    %v1023 = vadd.f32 %v967, %v1021
    %v1024 = vadd.f32 %v968, %v1022
    %s1025 = sld [smem:[#allocation2 + $0x96]]
    %v1026 = vstv %s1025
    %v1027 = vmul.f32 %v1026, %v1015
    %v1028 = vmul.f32 %v1026, %v1018
    %v1029 = vadd.f32 %v973, %v1027
    %v1030 = vadd.f32 %v974, %v1028
    %s1031 = sld [smem:[#allocation2 + $0x116]]
    %v1032 = vstv %s1031
    %v1033 = vmul.f32 %v1032, %v1015
    %v1034 = vmul.f32 %v1032, %v1018
    %v1035 = vadd.f32 %v979, %v1033
    %v1036 = vadd.f32 %v980, %v1034
    %s1037 = sld [smem:[#allocation2 + $0x196]]
    %v1038 = vstv %s1037
    %v1039 = vmul.f32 %v1038, %v1015
    %v1040 = vmul.f32 %v1038, %v1018
    %v1041 = vadd.f32 %v985, %v1039
    %v1042 = vadd.f32 %v986, %v1040
    %s1043 = sld [smem:[#allocation2 + $0x216]]
    %v1044 = vstv %s1043
    %v1045 = vmul.f32 %v1044, %v1015
    %v1046 = vmul.f32 %v1044, %v1018
    %v1047 = vadd.f32 %v991, %v1045
    %v1048 = vadd.f32 %v992, %v1046
    %s1049 = sld [smem:[#allocation2 + $0x296]]
    %v1050 = vstv %s1049
    %v1051 = vmul.f32 %v1050, %v1015
    %v1052 = vmul.f32 %v1050, %v1018
    %v1053 = vadd.f32 %v997, %v1051
    %v1054 = vadd.f32 %v998, %v1052
    %s1055 = sld [smem:[#allocation2 + $0x316]]
    %v1056 = vstv %s1055
    %v1057 = vmul.f32 %v1056, %v1015
    %v1058 = vmul.f32 %v1056, %v1018
    %v1059 = vadd.f32 %v1003, %v1057
    %v1060 = vadd.f32 %v1004, %v1058
    %s1061 = sld [smem:[#allocation2 + $0x396]]
    %v1062 = vstv %s1061
    %v1063 = vmul.f32 %v1062, %v1015
    %v1064 = vmul.f32 %v1062, %v1018
    %v1065 = vadd.f32 %v1009, %v1063
    %v1066 = vadd.f32 %v1010, %v1064
    %1067 = vrot.lane.b32.xlu0 %v603, 111
    %v1068 = vpop.permute.xlu0 %1067
    %1069 = vrot.lane.b32.xlu0 %v722, 111
    %v1070 = vpop.permute.xlu0 %1069
    %v1071 = vsel %vm549, %v1068, %v1070
    %v1074 = vsel %vm549, %v1070, 0.0
    %s1075 = sld [smem:[#allocation2 + $0x19]]
    %v1076 = vstv %s1075
    %v1077 = vmul.f32 %v1076, %v1071
    %v1078 = vmul.f32 %v1076, %v1074
    %v1079 = vadd.f32 %v1023, %v1077
    %v1080 = vadd.f32 %v1024, %v1078
    %s1081 = sld [smem:[#allocation2 + $0x99]]
    %v1082 = vstv %s1081
    %v1083 = vmul.f32 %v1082, %v1071
    %v1084 = vmul.f32 %v1082, %v1074
    %v1085 = vadd.f32 %v1029, %v1083
    %v1086 = vadd.f32 %v1030, %v1084
    %s1087 = sld [smem:[#allocation2 + $0x119]]
    %v1088 = vstv %s1087
    %v1089 = vmul.f32 %v1088, %v1071
    %v1090 = vmul.f32 %v1088, %v1074
    %v1091 = vadd.f32 %v1035, %v1089
    %v1092 = vadd.f32 %v1036, %v1090
    %s1093 = sld [smem:[#allocation2 + $0x199]]
    %v1094 = vstv %s1093
    %v1095 = vmul.f32 %v1094, %v1071
    %v1096 = vmul.f32 %v1094, %v1074
    %v1097 = vadd.f32 %v1041, %v1095
    %v1098 = vadd.f32 %v1042, %v1096
    %s1099 = sld [smem:[#allocation2 + $0x219]]
    %v1100 = vstv %s1099
    %v1101 = vmul.f32 %v1100, %v1071
    %v1102 = vmul.f32 %v1100, %v1074
    %v1103 = vadd.f32 %v1047, %v1101
    %v1104 = vadd.f32 %v1048, %v1102
    %s1105 = sld [smem:[#allocation2 + $0x299]]
    %v1106 = vstv %s1105
    %v1107 = vmul.f32 %v1106, %v1071
    %v1108 = vmul.f32 %v1106, %v1074
    %v1109 = vadd.f32 %v1053, %v1107
    %v1110 = vadd.f32 %v1054, %v1108
    %s1111 = sld [smem:[#allocation2 + $0x319]]
    %v1112 = vstv %s1111
    %v1113 = vmul.f32 %v1112, %v1071
    %v1114 = vmul.f32 %v1112, %v1074
    %v1115 = vadd.f32 %v1059, %v1113
    %v1116 = vadd.f32 %v1060, %v1114
    %s1117 = sld [smem:[#allocation2 + $0x399]]
    %v1118 = vstv %s1117
    %v1119 = vmul.f32 %v1118, %v1071
    %v1120 = vmul.f32 %v1118, %v1074
    %v1121 = vadd.f32 %v1065, %v1119
    %v1122 = vadd.f32 %v1066, %v1120
    %v1123 = vld [vmem:[%s0 + $0x10] sm:$0xff]
    %v1124 = vmul.f32 %v1123, %v71
    %v1125 = vmul.f32 %v1123, %v72
    %v1127 = vcombine.high %v1125, %v1125
    %1128 = vrot.lane.b32.xlu0 %v1125, 17
    %v1129 = vpop.permute.xlu0 %1128
    %1130 = vrot.lane.b32.xlu0 %v1127, 17
    %v1131 = vpop.permute.xlu0 %1130
    %v1132 = vsel %vm82, %v1129, %v1131
    %v1135 = vsel %vm82, 0.0, %v1129
    %s1136 = sld [smem:[#allocation2 + $0x2]]
    %v1137 = vstv %s1136
    %v1138 = vmul.f32 %v1137, %v1135
    %v1139 = vmul.f32 %v1137, %v1132
    %v1140 = vadd.f32 %v1079, %v1138
    %v1141 = vadd.f32 %v1080, %v1139
    %s1142 = sld [smem:[#allocation2 + $0x82]]
    %v1143 = vstv %s1142
    %v1144 = vmul.f32 %v1143, %v1135
    %v1145 = vmul.f32 %v1143, %v1132
    %v1146 = vadd.f32 %v1085, %v1144
    %v1147 = vadd.f32 %v1086, %v1145
    %s1148 = sld [smem:[#allocation2 + $0x102]]
    %v1149 = vstv %s1148
    %v1150 = vmul.f32 %v1149, %v1135
    %v1151 = vmul.f32 %v1149, %v1132
    %v1152 = vadd.f32 %v1091, %v1150
    %v1153 = vadd.f32 %v1092, %v1151
    %s1154 = sld [smem:[#allocation2 + $0x182]]
    %v1155 = vstv %s1154
    %v1156 = vmul.f32 %v1155, %v1135
    %v1157 = vmul.f32 %v1155, %v1132
    %v1158 = vadd.f32 %v1097, %v1156
    %v1159 = vadd.f32 %v1098, %v1157
    %s1160 = sld [smem:[#allocation2 + $0x202]]
    %v1161 = vstv %s1160
    %v1162 = vmul.f32 %v1161, %v1135
    %v1163 = vmul.f32 %v1161, %v1132
    %v1164 = vadd.f32 %v1103, %v1162
    %v1165 = vadd.f32 %v1104, %v1163
    %s1166 = sld [smem:[#allocation2 + $0x282]]
    %v1167 = vstv %s1166
    %v1168 = vmul.f32 %v1167, %v1135
    %v1169 = vmul.f32 %v1167, %v1132
    %v1170 = vadd.f32 %v1109, %v1168
    %v1171 = vadd.f32 %v1110, %v1169
    %s1172 = sld [smem:[#allocation2 + $0x302]]
    %v1173 = vstv %s1172
    %v1174 = vmul.f32 %v1173, %v1135
    %v1175 = vmul.f32 %v1173, %v1132
    %v1176 = vadd.f32 %v1115, %v1174
    %v1177 = vadd.f32 %v1116, %v1175
    %s1178 = sld [smem:[#allocation2 + $0x382]]
    %v1179 = vstv %s1178
    %v1180 = vmul.f32 %v1179, %v1135
    %v1181 = vmul.f32 %v1179, %v1132
    %v1182 = vadd.f32 %v1121, %v1180
    %v1183 = vadd.f32 %v1122, %v1181
    %v1185 = vcombine.high %v1123, %v1123
    %1186 = vrot.lane.b32.xlu0 %v1123, 16
    %v1187 = vpop.permute.xlu0 %1186
    %1188 = vrot.lane.b32.xlu0 %v1185, 16
    %v1189 = vpop.permute.xlu0 %1188
    %v1190 = vsel %vm141, %v1187, %v1189
    %v1193 = vsel %vm141, 0.0, %v1187
    %s1194 = sld [smem:[#allocation2 + $0x5]]
    %v1195 = vstv %s1194
    %v1196 = vmul.f32 %v1195, %v1193
    %v1197 = vmul.f32 %v1195, %v1190
    %v1198 = vadd.f32 %v1140, %v1196
    %v1199 = vadd.f32 %v1141, %v1197
    %s1200 = sld [smem:[#allocation2 + $0x85]]
    %v1201 = vstv %s1200
    %v1202 = vmul.f32 %v1201, %v1193
    %v1203 = vmul.f32 %v1201, %v1190
    %v1204 = vadd.f32 %v1146, %v1202
    %v1205 = vadd.f32 %v1147, %v1203
    %s1206 = sld [smem:[#allocation2 + $0x105]]
    %v1207 = vstv %s1206
    %v1208 = vmul.f32 %v1207, %v1193
    %v1209 = vmul.f32 %v1207, %v1190
    %v1210 = vadd.f32 %v1152, %v1208
    %v1211 = vadd.f32 %v1153, %v1209
    %s1212 = sld [smem:[#allocation2 + $0x185]]
    %v1213 = vstv %s1212
    %v1214 = vmul.f32 %v1213, %v1193
    %v1215 = vmul.f32 %v1213, %v1190
    %v1216 = vadd.f32 %v1158, %v1214
    %v1217 = vadd.f32 %v1159, %v1215
    %s1218 = sld [smem:[#allocation2 + $0x205]]
    %v1219 = vstv %s1218
    %v1220 = vmul.f32 %v1219, %v1193
    %v1221 = vmul.f32 %v1219, %v1190
    %v1222 = vadd.f32 %v1164, %v1220
    %v1223 = vadd.f32 %v1165, %v1221
    %s1224 = sld [smem:[#allocation2 + $0x285]]
    %v1225 = vstv %s1224
    %v1226 = vmul.f32 %v1225, %v1193
    %v1227 = vmul.f32 %v1225, %v1190
    %v1228 = vadd.f32 %v1170, %v1226
    %v1229 = vadd.f32 %v1171, %v1227
    %s1230 = sld [smem:[#allocation2 + $0x305]]
    %v1231 = vstv %s1230
    %v1232 = vmul.f32 %v1231, %v1193
    %v1233 = vmul.f32 %v1231, %v1190
    %v1234 = vadd.f32 %v1176, %v1232
    %v1235 = vadd.f32 %v1177, %v1233
    %s1236 = sld [smem:[#allocation2 + $0x385]]
    %v1237 = vstv %s1236
    %v1238 = vmul.f32 %v1237, %v1193
    %v1239 = vmul.f32 %v1237, %v1190
    %v1240 = vadd.f32 %v1182, %v1238
    %v1241 = vadd.f32 %v1183, %v1239
    %v1243 = vcombine.high %v1124, %v1124
    %1244 = vrot.lane.b32.xlu0 %v1124, 15
    %v1245 = vpop.permute.xlu0 %1244
    %1246 = vrot.lane.b32.xlu0 %v1243, 15
    %v1247 = vpop.permute.xlu0 %1246
    %v1248 = vsel %vm200, %v1245, %v1247
    %v1251 = vsel %vm200, 0.0, %v1245
    %s1252 = sld [smem:[#allocation2 + $0x8]]
    %v1253 = vstv %s1252
    %v1254 = vmul.f32 %v1253, %v1251
    %v1255 = vmul.f32 %v1253, %v1248
    %v1256 = vadd.f32 %v1198, %v1254
    %v1257 = vadd.f32 %v1199, %v1255
    %s1258 = sld [smem:[#allocation2 + $0x88]]
    %v1259 = vstv %s1258
    %v1260 = vmul.f32 %v1259, %v1251
    %v1261 = vmul.f32 %v1259, %v1248
    %v1262 = vadd.f32 %v1204, %v1260
    %v1263 = vadd.f32 %v1205, %v1261
    %s1264 = sld [smem:[#allocation2 + $0x108]]
    %v1265 = vstv %s1264
    %v1266 = vmul.f32 %v1265, %v1251
    %v1267 = vmul.f32 %v1265, %v1248
    %v1268 = vadd.f32 %v1210, %v1266
    %v1269 = vadd.f32 %v1211, %v1267
    %s1270 = sld [smem:[#allocation2 + $0x188]]
    %v1271 = vstv %s1270
    %v1272 = vmul.f32 %v1271, %v1251
    %v1273 = vmul.f32 %v1271, %v1248
    %v1274 = vadd.f32 %v1216, %v1272
    %v1275 = vadd.f32 %v1217, %v1273
    %s1276 = sld [smem:[#allocation2 + $0x208]]
    %v1277 = vstv %s1276
    %v1278 = vmul.f32 %v1277, %v1251
    %v1279 = vmul.f32 %v1277, %v1248
    %v1280 = vadd.f32 %v1222, %v1278
    %v1281 = vadd.f32 %v1223, %v1279
    %s1282 = sld [smem:[#allocation2 + $0x288]]
    %v1283 = vstv %s1282
    %v1284 = vmul.f32 %v1283, %v1251
    %v1285 = vmul.f32 %v1283, %v1248
    %v1286 = vadd.f32 %v1228, %v1284
    %v1287 = vadd.f32 %v1229, %v1285
    %s1288 = sld [smem:[#allocation2 + $0x308]]
    %v1289 = vstv %s1288
    %v1290 = vmul.f32 %v1289, %v1251
    %v1291 = vmul.f32 %v1289, %v1248
    %v1292 = vadd.f32 %v1234, %v1290
    %v1293 = vadd.f32 %v1235, %v1291
    %s1294 = sld [smem:[#allocation2 + $0x388]]
    %v1295 = vstv %s1294
    %v1296 = vmul.f32 %v1295, %v1251
    %v1297 = vmul.f32 %v1295, %v1248
    %v1298 = vadd.f32 %v1240, %v1296
    %v1299 = vadd.f32 %v1241, %v1297
    %1300 = vrot.lane.b32.xlu0 %v1125, 1
    %v1301 = vpop.permute.xlu0 %1300
    %1302 = vrot.lane.b32.xlu0 %v1127, 1
    %v1303 = vpop.permute.xlu0 %1302
    %v1304 = vsel %vm257, %v1301, %v1303
    %v1307 = vsel %vm257, 0.0, %v1301
    %s1308 = sld [smem:[#allocation2 + $0xb]]
    %v1309 = vstv %s1308
    %v1310 = vmul.f32 %v1309, %v1307
    %v1311 = vmul.f32 %v1309, %v1304
    %v1312 = vadd.f32 %v1256, %v1310
    %v1313 = vadd.f32 %v1257, %v1311
    %s1314 = sld [smem:[#allocation2 + $0x8b]]
    %v1315 = vstv %s1314
    %v1316 = vmul.f32 %v1315, %v1307
    %v1317 = vmul.f32 %v1315, %v1304
    %v1318 = vadd.f32 %v1262, %v1316
    %v1319 = vadd.f32 %v1263, %v1317
    %s1320 = sld [smem:[#allocation2 + $0x10b]]
    %v1321 = vstv %s1320
    %v1322 = vmul.f32 %v1321, %v1307
    %v1323 = vmul.f32 %v1321, %v1304
    %v1324 = vadd.f32 %v1268, %v1322
    %v1325 = vadd.f32 %v1269, %v1323
    %s1326 = sld [smem:[#allocation2 + $0x18b]]
    %v1327 = vstv %s1326
    %v1328 = vmul.f32 %v1327, %v1307
    %v1329 = vmul.f32 %v1327, %v1304
    %v1330 = vadd.f32 %v1274, %v1328
    %v1331 = vadd.f32 %v1275, %v1329
    %s1332 = sld [smem:[#allocation2 + $0x20b]]
    %v1333 = vstv %s1332
    %v1334 = vmul.f32 %v1333, %v1307
    %v1335 = vmul.f32 %v1333, %v1304
    %v1336 = vadd.f32 %v1280, %v1334
    %v1337 = vadd.f32 %v1281, %v1335
    %s1338 = sld [smem:[#allocation2 + $0x28b]]
    %v1339 = vstv %s1338
    %v1340 = vmul.f32 %v1339, %v1307
    %v1341 = vmul.f32 %v1339, %v1304
    %v1342 = vadd.f32 %v1286, %v1340
    %v1343 = vadd.f32 %v1287, %v1341
    %s1344 = sld [smem:[#allocation2 + $0x30b]]
    %v1345 = vstv %s1344
    %v1346 = vmul.f32 %v1345, %v1307
    %v1347 = vmul.f32 %v1345, %v1304
    %v1348 = vadd.f32 %v1292, %v1346
    %v1349 = vadd.f32 %v1293, %v1347
    %s1350 = sld [smem:[#allocation2 + $0x38b]]
    %v1351 = vstv %s1350
    %v1352 = vmul.f32 %v1351, %v1307
    %v1353 = vmul.f32 %v1351, %v1304
    %v1354 = vadd.f32 %v1298, %v1352
    %v1355 = vadd.f32 %v1299, %v1353
    %s1356 = sld [smem:[#allocation2 + $0xe]]
    %v1357 = vstv %s1356
    %v1358 = vmul.f32 %v1357, %v1123
    %v1360 = vcombine.high %v1358, %v1358
    %v1362 = vadd.f32 %v1312, %v1358
    %v1363 = vadd.f32 %v1313, %v1360
    %s1364 = sld [smem:[#allocation2 + $0x8e]]
    %v1365 = vstv %s1364
    %v1366 = vmul.f32 %v1365, %v1123
    %v1368 = vcombine.high %v1366, %v1366
    %v1370 = vadd.f32 %v1318, %v1366
    %v1371 = vadd.f32 %v1319, %v1368
    %s1372 = sld [smem:[#allocation2 + $0x10e]]
    %v1373 = vstv %s1372
    %v1374 = vmul.f32 %v1373, %v1123
    %v1376 = vcombine.high %v1374, %v1374
    %v1378 = vadd.f32 %v1324, %v1374
    %v1379 = vadd.f32 %v1325, %v1376
    %s1380 = sld [smem:[#allocation2 + $0x18e]]
    %v1381 = vstv %s1380
    %v1382 = vmul.f32 %v1381, %v1123
    %v1384 = vcombine.high %v1382, %v1382
    %v1386 = vadd.f32 %v1330, %v1382
    %v1387 = vadd.f32 %v1331, %v1384
    %s1388 = sld [smem:[#allocation2 + $0x20e]]
    %v1389 = vstv %s1388
    %v1390 = vmul.f32 %v1389, %v1123
    %v1392 = vcombine.high %v1390, %v1390
    %v1394 = vadd.f32 %v1336, %v1390
    %v1395 = vadd.f32 %v1337, %v1392
    %s1396 = sld [smem:[#allocation2 + $0x28e]]
    %v1397 = vstv %s1396
    %v1398 = vmul.f32 %v1397, %v1123
    %v1400 = vcombine.high %v1398, %v1398
    %v1402 = vadd.f32 %v1342, %v1398
    %v1403 = vadd.f32 %v1343, %v1400
    %s1404 = sld [smem:[#allocation2 + $0x30e]]
    %v1405 = vstv %s1404
    %v1406 = vmul.f32 %v1405, %v1123
    %v1408 = vcombine.high %v1406, %v1406
    %v1410 = vadd.f32 %v1348, %v1406
    %v1411 = vadd.f32 %v1349, %v1408
    %s1412 = sld [smem:[#allocation2 + $0x38e]]
    %v1413 = vstv %s1412
    %v1414 = vmul.f32 %v1413, %v1123
    %v1416 = vcombine.high %v1414, %v1414
    %v1418 = vadd.f32 %v1354, %v1414
    %v1419 = vadd.f32 %v1355, %v1416
    %1420 = vrot.lane.b32.xlu0 %v1124, 127
    %v1421 = vpop.permute.xlu0 %1420
    %1422 = vrot.lane.b32.xlu0 %v1243, 127
    %v1423 = vpop.permute.xlu0 %1422
    %v1424 = vsel %vm378, %v1421, %v1423
    %v1427 = vsel %vm378, %v1423, 0.0
    %s1428 = sld [smem:[#allocation2 + $0x11]]
    %v1429 = vstv %s1428
    %v1430 = vmul.f32 %v1429, %v1424
    %v1431 = vmul.f32 %v1429, %v1427
    %v1432 = vadd.f32 %v1362, %v1430
    %v1433 = vadd.f32 %v1363, %v1431
    %s1434 = sld [smem:[#allocation2 + $0x91]]
    %v1435 = vstv %s1434
    %v1436 = vmul.f32 %v1435, %v1424
    %v1437 = vmul.f32 %v1435, %v1427
    %v1438 = vadd.f32 %v1370, %v1436
    %v1439 = vadd.f32 %v1371, %v1437
    %s1440 = sld [smem:[#allocation2 + $0x111]]
    %v1441 = vstv %s1440
    %v1442 = vmul.f32 %v1441, %v1424
    %v1443 = vmul.f32 %v1441, %v1427
    %v1444 = vadd.f32 %v1378, %v1442
    %v1445 = vadd.f32 %v1379, %v1443
    %s1446 = sld [smem:[#allocation2 + $0x191]]
    %v1447 = vstv %s1446
    %v1448 = vmul.f32 %v1447, %v1424
    %v1449 = vmul.f32 %v1447, %v1427
    %v1450 = vadd.f32 %v1386, %v1448
    %v1451 = vadd.f32 %v1387, %v1449
    %s1452 = sld [smem:[#allocation2 + $0x211]]
    %v1453 = vstv %s1452
    %v1454 = vmul.f32 %v1453, %v1424
    %v1455 = vmul.f32 %v1453, %v1427
    %v1456 = vadd.f32 %v1394, %v1454
    %v1457 = vadd.f32 %v1395, %v1455
    %s1458 = sld [smem:[#allocation2 + $0x291]]
    %v1459 = vstv %s1458
    %v1460 = vmul.f32 %v1459, %v1424
    %v1461 = vmul.f32 %v1459, %v1427
    %v1462 = vadd.f32 %v1402, %v1460
    %v1463 = vadd.f32 %v1403, %v1461
    %s1464 = sld [smem:[#allocation2 + $0x311]]
    %v1465 = vstv %s1464
    %v1466 = vmul.f32 %v1465, %v1424
    %v1467 = vmul.f32 %v1465, %v1427
    %v1468 = vadd.f32 %v1410, %v1466
    %v1469 = vadd.f32 %v1411, %v1467
    %s1470 = sld [smem:[#allocation2 + $0x391]]
    %v1471 = vstv %s1470
    %v1472 = vmul.f32 %v1471, %v1424
    %v1473 = vmul.f32 %v1471, %v1427
    %v1474 = vadd.f32 %v1418, %v1472
    %v1475 = vadd.f32 %v1419, %v1473
    %1476 = vrot.lane.b32.xlu0 %v1125, 113
    %v1477 = vpop.permute.xlu0 %1476
    %1478 = vrot.lane.b32.xlu0 %v1127, 113
    %v1479 = vpop.permute.xlu0 %1478
    %v1480 = vsel %vm435, %v1477, %v1479
    %v1483 = vsel %vm435, %v1479, 0.0
    %s1484 = sld [smem:[#allocation2 + $0x14]]
    %v1485 = vstv %s1484
    %v1486 = vmul.f32 %v1485, %v1480
    %v1487 = vmul.f32 %v1485, %v1483
    %v1488 = vadd.f32 %v1432, %v1486
    %v1489 = vadd.f32 %v1433, %v1487
    %s1490 = sld [smem:[#allocation2 + $0x94]]
    %v1491 = vstv %s1490
    %v1492 = vmul.f32 %v1491, %v1480
    %v1493 = vmul.f32 %v1491, %v1483
    %v1494 = vadd.f32 %v1438, %v1492
    %v1495 = vadd.f32 %v1439, %v1493
    %s1496 = sld [smem:[#allocation2 + $0x114]]
    %v1497 = vstv %s1496
    %v1498 = vmul.f32 %v1497, %v1480
    %v1499 = vmul.f32 %v1497, %v1483
    %v1500 = vadd.f32 %v1444, %v1498
    %v1501 = vadd.f32 %v1445, %v1499
    %s1502 = sld [smem:[#allocation2 + $0x194]]
    %v1503 = vstv %s1502
    %v1504 = vmul.f32 %v1503, %v1480
    %v1505 = vmul.f32 %v1503, %v1483
    %v1506 = vadd.f32 %v1450, %v1504
    %v1507 = vadd.f32 %v1451, %v1505
    %s1508 = sld [smem:[#allocation2 + $0x214]]
    %v1509 = vstv %s1508
    %v1510 = vmul.f32 %v1509, %v1480
    %v1511 = vmul.f32 %v1509, %v1483
    %v1512 = vadd.f32 %v1456, %v1510
    %v1513 = vadd.f32 %v1457, %v1511
    %s1514 = sld [smem:[#allocation2 + $0x294]]
    %v1515 = vstv %s1514
    %v1516 = vmul.f32 %v1515, %v1480
    %v1517 = vmul.f32 %v1515, %v1483
    %v1518 = vadd.f32 %v1462, %v1516
    %v1519 = vadd.f32 %v1463, %v1517
    %s1520 = sld [smem:[#allocation2 + $0x314]]
    %v1521 = vstv %s1520
    %v1522 = vmul.f32 %v1521, %v1480
    %v1523 = vmul.f32 %v1521, %v1483
    %v1524 = vadd.f32 %v1468, %v1522
    %v1525 = vadd.f32 %v1469, %v1523
    %s1526 = sld [smem:[#allocation2 + $0x394]]
    %v1527 = vstv %s1526
    %v1528 = vmul.f32 %v1527, %v1480
    %v1529 = vmul.f32 %v1527, %v1483
    %v1530 = vadd.f32 %v1474, %v1528
    %v1531 = vadd.f32 %v1475, %v1529
    %1532 = vrot.lane.b32.xlu0 %v1123, 112
    %v1533 = vpop.permute.xlu0 %1532
    %1534 = vrot.lane.b32.xlu0 %v1185, 112
    %v1535 = vpop.permute.xlu0 %1534
    %v1536 = vsel %vm492, %v1533, %v1535
    %v1539 = vsel %vm492, %v1535, 0.0
    %s1540 = sld [smem:[#allocation2 + $0x17]]
    %v1541 = vstv %s1540
    %v1542 = vmul.f32 %v1541, %v1536
    %v1543 = vmul.f32 %v1541, %v1539
    %v1544 = vadd.f32 %v1488, %v1542
    %v1545 = vadd.f32 %v1489, %v1543
    %s1546 = sld [smem:[#allocation2 + $0x97]]
    %v1547 = vstv %s1546
    %v1548 = vmul.f32 %v1547, %v1536
    %v1549 = vmul.f32 %v1547, %v1539
    %v1550 = vadd.f32 %v1494, %v1548
    %v1551 = vadd.f32 %v1495, %v1549
    %s1552 = sld [smem:[#allocation2 + $0x117]]
    %v1553 = vstv %s1552
    %v1554 = vmul.f32 %v1553, %v1536
    %v1555 = vmul.f32 %v1553, %v1539
    %v1556 = vadd.f32 %v1500, %v1554
    %v1557 = vadd.f32 %v1501, %v1555
    %s1558 = sld [smem:[#allocation2 + $0x197]]
    %v1559 = vstv %s1558
    %v1560 = vmul.f32 %v1559, %v1536
    %v1561 = vmul.f32 %v1559, %v1539
    %v1562 = vadd.f32 %v1506, %v1560
    %v1563 = vadd.f32 %v1507, %v1561
    %s1564 = sld [smem:[#allocation2 + $0x217]]
    %v1565 = vstv %s1564
    %v1566 = vmul.f32 %v1565, %v1536
    %v1567 = vmul.f32 %v1565, %v1539
    %v1568 = vadd.f32 %v1512, %v1566
    %v1569 = vadd.f32 %v1513, %v1567
    %s1570 = sld [smem:[#allocation2 + $0x297]]
    %v1571 = vstv %s1570
    %v1572 = vmul.f32 %v1571, %v1536
    %v1573 = vmul.f32 %v1571, %v1539
    %v1574 = vadd.f32 %v1518, %v1572
    %v1575 = vadd.f32 %v1519, %v1573
    %s1576 = sld [smem:[#allocation2 + $0x317]]
    %v1577 = vstv %s1576
    %v1578 = vmul.f32 %v1577, %v1536
    %v1579 = vmul.f32 %v1577, %v1539
    %v1580 = vadd.f32 %v1524, %v1578
    %v1581 = vadd.f32 %v1525, %v1579
    %s1582 = sld [smem:[#allocation2 + $0x397]]
    %v1583 = vstv %s1582
    %v1584 = vmul.f32 %v1583, %v1536
    %v1585 = vmul.f32 %v1583, %v1539
    %v1586 = vadd.f32 %v1530, %v1584
    %v1587 = vadd.f32 %v1531, %v1585
    %1588 = vrot.lane.b32.xlu0 %v1124, 111
    %v1589 = vpop.permute.xlu0 %1588
    %1590 = vrot.lane.b32.xlu0 %v1243, 111
    %v1591 = vpop.permute.xlu0 %1590
    %v1592 = vsel %vm549, %v1589, %v1591
    %v1595 = vsel %vm549, %v1591, 0.0
    %s1596 = sld [smem:[#allocation2 + $0x1a]]
    %v1597 = vstv %s1596
    %v1598 = vmul.f32 %v1597, %v1592
    %v1599 = vmul.f32 %v1597, %v1595
    %v1600 = vadd.f32 %v1544, %v1598
    %v1601 = vadd.f32 %v1545, %v1599
    %s1602 = sld [smem:[#allocation2 + $0x9a]]
    %v1603 = vstv %s1602
    %v1604 = vmul.f32 %v1603, %v1592
    %v1605 = vmul.f32 %v1603, %v1595
    %v1606 = vadd.f32 %v1550, %v1604
    %v1607 = vadd.f32 %v1551, %v1605
    %s1608 = sld [smem:[#allocation2 + $0x11a]]
    %v1609 = vstv %s1608
    %v1610 = vmul.f32 %v1609, %v1592
    %v1611 = vmul.f32 %v1609, %v1595
    %v1612 = vadd.f32 %v1556, %v1610
    %v1613 = vadd.f32 %v1557, %v1611
    %s1614 = sld [smem:[#allocation2 + $0x19a]]
    %v1615 = vstv %s1614
    %v1616 = vmul.f32 %v1615, %v1592
    %v1617 = vmul.f32 %v1615, %v1595
    %v1618 = vadd.f32 %v1562, %v1616
    %v1619 = vadd.f32 %v1563, %v1617
    %s1620 = sld [smem:[#allocation2 + $0x21a]]
    %v1621 = vstv %s1620
    %v1622 = vmul.f32 %v1621, %v1592
    %v1623 = vmul.f32 %v1621, %v1595
    %v1624 = vadd.f32 %v1568, %v1622
    %v1625 = vadd.f32 %v1569, %v1623
    %s1626 = sld [smem:[#allocation2 + $0x29a]]
    %v1627 = vstv %s1626
    %v1628 = vmul.f32 %v1627, %v1592
    %v1629 = vmul.f32 %v1627, %v1595
    %v1630 = vadd.f32 %v1574, %v1628
    %v1631 = vadd.f32 %v1575, %v1629
    %s1632 = sld [smem:[#allocation2 + $0x31a]]
    %v1633 = vstv %s1632
    %v1634 = vmul.f32 %v1633, %v1592
    %v1635 = vmul.f32 %v1633, %v1595
    %v1636 = vadd.f32 %v1580, %v1634
    %v1637 = vadd.f32 %v1581, %v1635
    %s1638 = sld [smem:[#allocation2 + $0x39a]]
    %v1639 = vstv %s1638
    %v1640 = vmul.f32 %v1639, %v1592
    %v1641 = vmul.f32 %v1639, %v1595
    %v1642 = vadd.f32 %v1586, %v1640
    %v1643 = vadd.f32 %v1587, %v1641
    %v1646 = vcombine.low %v1600, %v1601
    %1648 = vst [vmem:[%s5] sm:$0xff] %v1646
    %v1651 = vcombine.low %v1606, %v1607
    %1653 = vst [vmem:[%s5 + $0x8] sm:$0xff] %v1651
    %v1656 = vcombine.low %v1612, %v1613
    %1658 = vst [vmem:[%s5 + $0x10] sm:$0xff] %v1656
    %v1661 = vcombine.low %v1618, %v1619
    %1663 = vst [vmem:[%s5 + $0x18] sm:$0xff] %v1661
    %v1666 = vcombine.low %v1624, %v1625
    %1668 = vst [vmem:[%s5 + $0x20] sm:$0xff] %v1666
    %v1671 = vcombine.low %v1630, %v1631
    %1673 = vst [vmem:[%s5 + $0x28] sm:$0xff] %v1671
    %v1676 = vcombine.low %v1636, %v1637
    %1678 = vst [vmem:[%s5 + $0x30] sm:$0xff] %v1676
    %v1681 = vcombine.low %v1642, %v1643
    %1683 = vst [vmem:[%s5 + $0x38] sm:$0xff] %v1681
    %v1684 = vmax.f32 %v1600, %v1606
    %v1685 = vmax.f32 %v1601, %v1607
    %v1686 = vmax.f32 %v1684, %v1612
    %v1687 = vmax.f32 %v1685, %v1613
    %v1688 = vmax.f32 %v1686, %v1618
    %v1689 = vmax.f32 %v1687, %v1619
    %v1690 = vmax.f32 %v1688, %v1624
    %v1691 = vmax.f32 %v1689, %v1625
    %v1692 = vmax.f32 %v1690, %v1630
    %v1693 = vmax.f32 %v1691, %v1631
    %v1694 = vmax.f32 %v1692, %v1636
    %v1695 = vmax.f32 %v1693, %v1637
    %v1696 = vmax.f32 %v1694, %v1642
    %v1697 = vmax.f32 %v1695, %v1643
    %v1698 = vsub.f32 %v1600, %v1696
    %v1699 = vsub.f32 %v1601, %v1697
    %v1700 = vmul.f32 %v1698, 1.442695
    %v1701 = vpow.pop %v1700
    %v1702 = vmul.f32 %v1699, 1.442695
    %v1703 = vpow.pop %v1702
    %v1704 = vsub.f32 %v1606, %v1696
    %v1705 = vsub.f32 %v1607, %v1697
    %v1706 = vmul.f32 %v1704, 1.442695
    %v1707 = vpow.pop %v1706
    %v1708 = vmul.f32 %v1705, 1.442695
    %v1709 = vpow.pop %v1708
    %v1710 = vsub.f32 %v1612, %v1696
    %v1711 = vsub.f32 %v1613, %v1697
    %v1712 = vmul.f32 %v1710, 1.442695
    %v1713 = vpow.pop %v1712
    %v1714 = vmul.f32 %v1711, 1.442695
    %v1715 = vpow.pop %v1714
    %v1716 = vsub.f32 %v1618, %v1696
    %v1717 = vsub.f32 %v1619, %v1697
    %v1718 = vmul.f32 %v1716, 1.442695
    %v1719 = vpow.pop %v1718
    %v1720 = vmul.f32 %v1717, 1.442695
    %v1721 = vpow.pop %v1720
    %v1722 = vsub.f32 %v1624, %v1696
    %v1723 = vsub.f32 %v1625, %v1697
    %v1724 = vmul.f32 %v1722, 1.442695
    %v1725 = vpow.pop %v1724
    %v1726 = vmul.f32 %v1723, 1.442695
    %v1727 = vpow.pop %v1726
    %v1728 = vsub.f32 %v1630, %v1696
    %v1729 = vsub.f32 %v1631, %v1697
    %v1730 = vmul.f32 %v1728, 1.442695
    %v1731 = vpow.pop %v1730
    %v1732 = vmul.f32 %v1729, 1.442695
    %v1733 = vpow.pop %v1732
    %v1734 = vsub.f32 %v1636, %v1696
    %v1735 = vsub.f32 %v1637, %v1697
    %v1736 = vmul.f32 %v1734, 1.442695
    %v1737 = vpow.pop %v1736
    %v1738 = vmul.f32 %v1735, 1.442695
    %v1739 = vpow.pop %v1738
    %v1740 = vsub.f32 %v1642, %v1696
    %v1741 = vsub.f32 %v1643, %v1697
    %v1742 = vmul.f32 %v1740, 1.442695
    %v1743 = vpow.pop %v1742
    %v1744 = vmul.f32 %v1741, 1.442695
    %v1745 = vpow.pop %v1744
    %v1746 = vadd.f32 %v1701, %v1707
    %v1747 = vadd.f32 %v1703, %v1709
    %v1748 = vadd.f32 %v1746, %v1713
    %v1749 = vadd.f32 %v1747, %v1715
    %v1750 = vadd.f32 %v1748, %v1719
    %v1751 = vadd.f32 %v1749, %v1721
    %v1752 = vadd.f32 %v1750, %v1725
    %v1753 = vadd.f32 %v1751, %v1727
    %v1754 = vadd.f32 %v1752, %v1731
    %v1755 = vadd.f32 %v1753, %v1733
    %v1756 = vadd.f32 %v1754, %v1737
    %v1757 = vadd.f32 %v1755, %v1739
    %v1758 = vadd.f32 %v1756, %v1743
    %v1759 = vadd.f32 %v1757, %v1745
    %v1760 = vrcp.pop %v1758
    %v1761 = vrcp.pop %v1759
    %v1762 = vmul.f32 %v1758, %v1760
    %v1763 = vmul.f32 %v1759, %v1761
    %v1764 = vsub.f32 2.0, %v1762
    %v1765 = vsub.f32 2.0, %v1763
    %v1766 = vmul.f32 %v1760, %v1764
    %v1767 = vmul.f32 %v1761, %v1765
    %v1768 = vmul.f32 %v1701, %v1766
    %v1769 = vmul.f32 %v1703, %v1767
    %v1772 = vcombine.low %v1768, %v1769
    %1774 = vst [vmem:[%s6] sm:$0xff] %v1772
    %v1775 = vmul.f32 %v1707, %v1766
    %v1776 = vmul.f32 %v1709, %v1767
    %v1779 = vcombine.low %v1775, %v1776
    %1781 = vst [vmem:[%s6 + $0x8] sm:$0xff] %v1779
    %v1782 = vmul.f32 %v1713, %v1766
    %v1783 = vmul.f32 %v1715, %v1767
    %v1786 = vcombine.low %v1782, %v1783
    %1788 = vst [vmem:[%s6 + $0x10] sm:$0xff] %v1786
    %v1789 = vmul.f32 %v1719, %v1766
    %v1790 = vmul.f32 %v1721, %v1767
    %v1793 = vcombine.low %v1789, %v1790
    %1795 = vst [vmem:[%s6 + $0x18] sm:$0xff] %v1793
    %v1796 = vmul.f32 %v1725, %v1766
    %v1797 = vmul.f32 %v1727, %v1767
    %v1800 = vcombine.low %v1796, %v1797
    %1802 = vst [vmem:[%s6 + $0x20] sm:$0xff] %v1800
    %v1803 = vmul.f32 %v1731, %v1766
    %v1804 = vmul.f32 %v1733, %v1767
    %v1807 = vcombine.low %v1803, %v1804
    %1809 = vst [vmem:[%s6 + $0x28] sm:$0xff] %v1807
    %v1810 = vmul.f32 %v1737, %v1766
    %v1811 = vmul.f32 %v1739, %v1767
    %v1814 = vcombine.low %v1810, %v1811
    %1816 = vst [vmem:[%s6 + $0x30] sm:$0xff] %v1814
    %v1817 = vmul.f32 %v1743, %v1766
    %v1818 = vmul.f32 %v1745, %v1767
    %v1821 = vcombine.low %v1817, %v1818
    %1823 = vst [vmem:[%s6 + $0x38] sm:$0xff] %v1821
    // Predicated region
    $region30: #{img_segmentor_forward.1} parent=1 // pred_check
      _
    $region31: #{img_segmentor_forward.1} parent=1 // pred_check_branch
      %1825 = sbr.rel (0) target = $region33
    $region32: #{img_segmentor_forward.1} parent=1 // pred_region
      _
    $region33: #{img_segmentor_forward.1} parent=1 // pred_fallthru
      _
    // Predicated region
    $region34: #{img_segmentor_forward.1} parent=1 // pred_check
      _
    $region35: #{img_segmentor_forward.1} parent=1 // pred_check_branch
      %1827 = sbr.rel (0) target = $region37
    $region36: #{img_segmentor_forward.1} parent=1 // pred_region
      _
    $region37: #{img_segmentor_forward.1} parent=1 // pred_fallthru
      _
    // Predicated region
    $region38: #{img_segmentor_forward.1} parent=1 // pred_check
      _
    $region39: #{img_segmentor_forward.1} parent=1 // pred_check_branch
      %1829 = sbr.rel (0) target = $region41
    $region40: #{img_segmentor_forward.1} parent=1 // pred_region
      _
    $region41: #{img_segmentor_forward.1} parent=1 // pred_fallthru
      _
    // Predicated region
    $region42: #{img_segmentor_forward.1} parent=1 // pred_check
      _
    $region43: #{img_segmentor_forward.1} parent=1 // pred_check_branch
      %1831 = sbr.rel (0) target = $region45
    $region44: #{img_segmentor_forward.1} parent=1 // pred_region
      _
    $region45: #{img_segmentor_forward.1} parent=1 // pred_fallthru
      _
    %1832 = vsyncpa [#allocation3], 1
    %1833 = vsyncpa [#allocation5], 1

</llo_original>
